<compile_context>
chip_gen: v7x
topology: tpu7x:2x2x1
jax: 0.10.0
libtpu: 0.0.40
codegen_flags: <defaults>
</compile_context>

<pallas_src>
import functools
import math

import numpy as np
import jax
import jax.numpy as jnp
from jax.experimental import pallas as pl
from jax.experimental.pallas import tpu as pltpu


# --------------------------- plain-JAX glue (parameter setup) ---------------------------

def transpose_filter(conv_filter):
    # (Cout, Cin, k, k) -> swap channel axes and flip both spatial axes
    return jnp.flip(jnp.transpose(conv_filter, (1, 0, 2, 3)), axis=(2, 3))


def l2_normalize(t, eps=1e-12):
    norm = jnp.sqrt(jnp.sum(t * t))
    return t / jnp.maximum(norm, eps)


def fantastic_four(cf, key, num_iters=50):
    """Power iteration producing the 8 singular vectors used for the sigma bound."""
    out_ch, in_ch, h, w = cf.shape
    ks = jax.random.split(key, 8)
    u1 = l2_normalize(jax.random.normal(ks[0], (1, in_ch, 1, w), jnp.float32))
    u2 = l2_normalize(jax.random.normal(ks[1], (1, in_ch, h, 1), jnp.float32))
    u3 = l2_normalize(jax.random.normal(ks[2], (1, in_ch, h, w), jnp.float32))
    u4 = l2_normalize(jax.random.normal(ks[3], (out_ch, 1, h, w), jnp.float32))
    v1 = l2_normalize(jax.random.normal(ks[4], (out_ch, 1, h, 1), jnp.float32))
    v2 = l2_normalize(jax.random.normal(ks[5], (out_ch, 1, 1, w), jnp.float32))
    v3 = l2_normalize(jax.random.normal(ks[6], (out_ch, 1, 1, 1), jnp.float32))
    v4 = l2_normalize(jax.random.normal(ks[7], (1, in_ch, 1, 1), jnp.float32))
    for _ in range(num_iters):
        v1 = l2_normalize(jnp.sum(cf * u1, axis=(1, 3), keepdims=True))
        u1 = l2_normalize(jnp.sum(cf * v1, axis=(0, 2), keepdims=True))
        v2 = l2_normalize(jnp.sum(cf * u2, axis=(1, 2), keepdims=True))
        u2 = l2_normalize(jnp.sum(cf * v2, axis=(0, 3), keepdims=True))
        v3 = l2_normalize(jnp.sum(cf * u3, axis=(1, 2, 3), keepdims=True))
        u3 = l2_normalize(jnp.sum(cf * v3, axis=0, keepdims=True))
        v4 = l2_normalize(jnp.sum(cf * u4, axis=(0, 2, 3), keepdims=True))
        u4 = l2_normalize(jnp.sum(cf * v4, axis=1, keepdims=True))
    return u1, v1, u2, v2, u3, v3, u4, v4


def compute_sigma(cf, vectors):
    u1, v1, u2, v2, u3, v3, u4, v4 = vectors
    s1 = jnp.sum(cf * u1 * v1)
    s2 = jnp.sum(cf * u2 * v2)
    s3 = jnp.sum(cf * u3 * v3)
    s4 = jnp.sum(cf * u4 * v4)
    return jnp.minimum(jnp.minimum(jnp.minimum(s1, s2), s3), s4)


def _rearrange_stride(x_nchw, stride):
    # rearrange 'b c (w k1) (h k2) -> b (c k1 k2) w h'
    b, c, Wf, Hf = x_nchw.shape
    w_, h_ = Wf // stride, Hf // stride
    x = x_nchw.reshape(b, c, w_, stride, h_, stride)
    x = jnp.transpose(x, (0, 1, 3, 5, 2, 4))
    return x.reshape(b, c * stride * stride, w_, h_)


# --------------------------------- Pallas kernel (hot path) ---------------------------------

def _skew_exp_taylor_kernel(x_ref, w_ref, m_ref, b_ref, o_ref, stack_ref, *,
                            num_terms, ksize, W):
    """z = sum_{i=0..num_terms} conv^i(x)/i! + bias, for one block of NB images.

    Layout (no wrapper transposes): channels on sublanes, per-image H*W on lanes.
      x_ref    : (NB, Cp, HWp)             f32 activations, lane-dense per image
      w_ref    : (num_terms, Cp, k*k*Cp)   fused per-term weights, pre-scaled by 1/i
      m_ref    : (k*k, HWp)                {0,1} spatial-edge validity mask per tap
      b_ref    : (Cp, 1)                   bias (zero rows beyond out_channels)
      o_ref    : (NB, Cp, HWp)
      stack_ref: (k*k*Cp, HWp)             im2col-over-taps scratch (MXU operand dtype)

    Each Taylor term is a single MXU matmul with contraction K = k*k*Cp; the tap stack
    is built with pltpu.roll (XLU) + the precomputed edge mask (VPU); 1/i is already
    folded into w_ref so there is no per-term scale pass.
    """
    NB, Cp, HWp = x_ref.shape
    p = ksize // 2
    mxu_dtype = stack_ref.dtype
    offs = [(dy - p, dx - p) for dy in range(ksize) for dx in range(ksize)]

    for n in range(NB):                           # images are independent; static unroll
        x = x_ref[n].astype(jnp.float32)          # (Cp, HWp)

        def term_body(i, carry):
            curr, z = carry
            # build the im2col-over-taps stack: stack[t*Cp + cin, :] = tap t of curr
            for t, (dyo, dxo) in enumerate(offs):
                off = dyo * W + dxo               # want shifted[j] = curr[j + off]
                if off == 0:
                    shifted = curr                # center tap: no shift, no edge mask
                else:
                    shift = (-off) % HWp          # roll: out[j] = in[(j - shift) % HWp]
                    shifted = pltpu.roll(curr, shift, 1) * m_ref[pl.ds(t, 1), :]
                stack_ref[pl.ds(t * Cp, Cp), :] = shifted.astype(mxu_dtype)
            # ONE fused matmul per term (K = k*k*Cp); 1/i is folded into the weights.
            curr = jnp.dot(w_ref[i - 1], stack_ref[...],
                           preferred_element_type=jnp.float32)
            return curr, z + curr

        _, z = jax.lax.fori_loop(1, num_terms + 1, term_body, (x, x), unroll=True)
        o_ref[n] = (z + b_ref[...]).astype(o_ref.dtype)


# ------------------------------ generation-aware block chooser ------------------------------

def _tpu_generation_budget():
    """v5e/v6e: 1 TensorCore, 128 MiB VMEM -> big blocks, min_blocks=1.
       v7x-class: 2 TensorCores, 64 MiB VMEM/TC -> >=2 blocks, tighter footprint cap."""
    try:
        vmem = int(pltpu.get_tpu_info().vmem_capacity_bytes)
    except Exception:
        vmem = 64 * 1024 * 1024                      # conservative fallback (v7x-sized)
    if vmem <= 96 * 1024 * 1024:
        return dict(min_blocks=2, target_bytes=24 << 20, vmem_limit=48 << 20)
    return dict(min_blocks=1, target_bytes=48 << 20, vmem_limit=100 << 20)


def _choose_batch_block(N, HWp, Cp, kk, num_terms, mxu_bytes, target_bytes, min_blocks):
    """Largest per-step image count NB dividing N whose honest per-block footprint
    (in/out double buffers + im2col stack + loop carries + masks + weights) fits the
    budget; if possible leave >= min_blocks grid steps (v7x two-core parallelism)."""
    lane = lambda n: ((n + 127) // 128) * 128
    sub = lambda n: ((n + 7) // 8) * 8
    fixed = (kk * Cp * HWp * mxu_bytes                         # im2col tap stack scratch
             + 4 * Cp * HWp * 4                                # curr / z / dot-result live values
             + sub(kk) * HWp * 4                               # edge-mask tile
             + num_terms * Cp * lane(kk * Cp) * mxu_bytes)     # fused per-term weights
    per_img = 4 * Cp * HWp * 4                                 # (input + output) x double buffer
    divisors = [nb for nb in range(1, N + 1) if N % nb == 0]
    fitting = [nb for nb in divisors if fixed + nb * per_img <= target_bytes] or [1]
    multi = [nb for nb in fitting if N // nb >= min_blocks]
    return max(multi) if multi else max(fitting)


# ------------------------------------- forward wrapper -------------------------------------

def skew_conv_forward(x_nchw, random_conv_filter, bias, vectors, correction,
                      num_terms, kernel_size, stride, out_channels,
                      mxu_dtype=jnp.float32):
    # mxu_dtype=jnp.bfloat16 (operands only; accumulation stays f32) is worthwhile once
    # Cp >= ~32-64 on v6e/v7x where the MXU becomes the binding unit; at small Cp the
    # VALU/XLU slots bind instead, so the exact-f32 default is kept here.

    # skew-symmetric filter + sigma normalization (eval mode: no power-iter update)
    cf_T = transpose_filter(random_conv_filter)
    cf_skew = 0.5 * (random_conv_filter - cf_T)
    sigma = compute_sigma(cf_skew, vectors)
    cf_n = correction * cf_skew / sigma                      # (Cmax, Cmax, k, k), OIHW

    if stride > 1:
        x_nchw = _rearrange_stride(x_nchw, stride)

    N, Cin, H, W = x_nchw.shape
    Cmax = cf_n.shape[0]
    k = kernel_size
    p = k // 2
    kk = k * k
    HW = H * W
    HWp = ((HW + 127) // 128) * 128          # lane-dense per-image length (unmasked vst)

    # Channel padding to full sublane groups; padded rows/cols are zero in both data and
    # weights, hence inert and sliced off at the end.
    Cp = max(8, ((Cmax + 7) // 8) * 8)

    # Lane-dense activations WITHOUT any HBM transpose: NCHW -> (N, Cp, HWp) is a free
    # reshape plus a zero pad (channels / trailing lanes).
    x_flat = x_nchw.reshape(N, Cin, HW).astype(jnp.float32)
    if Cp > Cin or HWp > HW:
        x_flat = jnp.pad(x_flat, ((0, 0), (0, Cp - Cin), (0, HWp - HW)))

    # Fused, 1/i-pre-scaled weights: w_scaled[i-1, cout, t*Cp + cin] = cf[cout, cin, dy, dx]/i
    cf_p = cf_n
    if Cp > Cmax:
        cf_p = jnp.pad(cf_n, ((0, Cp - Cmax), (0, Cp - Cmax), (0, 0), (0, 0)))
    w_taps = jnp.transpose(cf_p, (2, 3, 0, 1)).reshape(kk, Cp, Cp)      # (t, cout, cin)
    w_fused = jnp.transpose(w_taps, (1, 0, 2)).reshape(Cp, kk * Cp)      # (cout, t*Cp+cin)
    inv_i = (1.0 / jnp.arange(1, num_terms + 1, dtype=jnp.float32))[:, None, None]
    w_scaled = (w_fused[None] * inv_i).astype(mxu_dtype)                 # (terms, Cp, kk*Cp)

    # Bias column (zero beyond out_channels).
    b_full = jnp.zeros((Cp, 1), jnp.float32).at[:out_channels, 0].set(
        bias.astype(jnp.float32))

    # Static spatial-shift edge masks per tap, built host-side over the padded lane axis.
    yy, xx = np.meshgrid(np.arange(H), np.arange(W), indexing="ij")
    tap_mask = np.zeros((kk, HWp), np.float32)
    t = 0
    for dy in range(k):
        for dx in range(k):
            dyo, dxo = dy - p, dx - p
            valid = ((yy + dyo >= 0) & (yy + dyo < H) &
                     (xx + dxo >= 0) & (xx + dxo < W))
            tap_mask[t, :HW] = valid.astype(np.float32).reshape(HW)
            t += 1
    tap_mask = jnp.asarray(tap_mask)

    budget = _tpu_generation_budget()
    mxu_bytes = np.dtype(mxu_dtype).itemsize
    NB = _choose_batch_block(N, HWp, Cp, kk, num_terms, mxu_bytes,
                             budget["target_bytes"], budget["min_blocks"])
    num_blocks = N // NB

    kern = functools.partial(_skew_exp_taylor_kernel,
                             num_terms=num_terms, ksize=k, W=W)

    # TODO(synk): for very large H*W on v7x (64 MiB VMEM/TC), add an H-tiled grid axis with
    # a 2*(k//2)-row halo and per-tile edge masks instead of whole-image lane blocks.
    z_flat = pl.pallas_call(
        kern,
        out_shape=jax.ShapeDtypeStruct((N, Cp, HWp), jnp.float32),
        grid=(num_blocks,),
        in_specs=[
            pl.BlockSpec((NB, Cp, HWp), lambda b: (b, 0, 0)),               # activations
            pl.BlockSpec((num_terms, Cp, kk * Cp), lambda b: (0, 0, 0)),    # fused weights
            pl.BlockSpec((kk, HWp), lambda b: (0, 0)),                      # edge masks
            pl.BlockSpec((Cp, 1), lambda b: (0, 0)),                        # bias
        ],
        out_specs=pl.BlockSpec((NB, Cp, HWp), lambda b: (b, 0, 0)),
        scratch_shapes=[pltpu.VMEM((kk * Cp, HWp), mxu_dtype)],             # im2col stack
        compiler_params=pltpu.CompilerParams(
            dimension_semantics=("parallel",),
            vmem_limit_bytes=budget["vmem_limit"]),
    )(x_flat, w_scaled, tap_mask, b_full)

    # Free reshape back to NCHW; slice off padded channels / lanes.
    z = z_flat[:, :out_channels, :HW].reshape(N, out_channels, H, W)
    return z


# ------------------------------ pure-JAX reference (for checking) ---------------------------

def reference_forward(x_nchw, random_conv_filter, bias, vectors, correction,
                      num_terms, kernel_size, stride, out_channels):
    cf_T = transpose_filter(random_conv_filter)
    cf_skew = 0.5 * (random_conv_filter - cf_T)
    sigma = compute_sigma(cf_skew, vectors)
    cf_n = correction * cf_skew / sigma
    pad = kernel_size // 2

    if stride > 1:
        x_nchw = _rearrange_stride(x_nchw, stride)
    N, Cin, H, W = x_nchw.shape
    Cmax = cf_n.shape[0]
    if Cmax > Cin:
        x_nchw = jnp.pad(x_nchw, ((0, 0), (0, Cmax - Cin), (0, 0), (0, 0)))

    curr = x_nchw
    z = x_nchw
    for i in range(1, num_terms + 1):
        curr = jax.lax.conv_general_dilated(
            curr, cf_n, window_strides=(1, 1),
            padding=((pad, pad), (pad, pad)),
            dimension_numbers=('NCHW', 'OIHW', 'NCHW')) / float(i)
        z = z + curr
    z = z[:, :out_channels]
    return z + bias[None, :, None, None]


# --------------------------------------------- main ---------------------------------------------

if __name__ == "__main__":
    key = jax.random.PRNGKey(0)
    in_channels, out_channels, ksize, stride = 4, 4, 3, 1
    eval_terms, init_iters = 10, 50
    N, H, W = 2, 16, 16

    in_eff = in_channels * stride * stride
    max_ch = max(out_channels, in_eff)
    correction = 1.0 if ksize == 1 else 0.7

    k_w, k_b, k_x, k_ff = jax.random.split(key, 4)

    # deterministic parameter init (mirrors reset_parameters)
    w_std = 1.0 / math.sqrt(max_ch)
    random_conv_filter = w_std * jax.random.normal(
        k_w, (max_ch, max_ch, ksize, ksize), jnp.float32)
    b_std = 1.0 / math.sqrt(out_channels)
    bias = jax.random.uniform(k_b, (out_channels,), jnp.float32, -b_std, b_std)

    # init-time power iteration on the skew-symmetric filter (fantastic_four)
    cf_skew0 = 0.5 * (random_conv_filter - transpose_filter(random_conv_filter))
    vectors = fantastic_four(cf_skew0, k_ff, num_iters=init_iters)

    # input, PyTorch NCHW convention
    x = jax.random.normal(k_x, (N, in_channels, H, W), jnp.float32)

    out = skew_conv_forward(x, random_conv_filter, bias, vectors, correction,
                            num_terms=eval_terms, kernel_size=ksize,
                            stride=stride, out_channels=out_channels)
    out = jax.block_until_ready(out)

    ref = reference_forward(x, random_conv_filter, bias, vectors, correction,
                            num_terms=eval_terms, kernel_size=ksize,
                            stride=stride, out_channels=out_channels)
    ref = jax.block_until_ready(ref)

    assert out.shape == (N, out_channels, H, W)
    assert jnp.allclose(out, ref, atol=1e-3, rtol=1e-3), "mismatch vs pure-JAX reference"

    print("KERNEL_OK")
</pallas_src>

<mosaic_0001>
module attributes {stable_mosaic.version = 11 : i64} {
  func.func @_skew_exp_taylor_kernel(%arg0: i32, %arg1: memref<1x8x256xf32, #tpu.memory_space<vmem>>, %arg2: memref<10x8x72xf32, #tpu.memory_space<vmem>>, %arg3: memref<9x256xf32, #tpu.memory_space<vmem>>, %arg4: memref<8x1xf32, #tpu.memory_space<vmem>>, %arg5: memref<1x8x256xf32, #tpu.memory_space<vmem>>, %arg6: memref<72x256xf32, #tpu.memory_space<vmem>>) attributes {dimension_semantics = [#tpu.dimension_semantics<parallel>], iteration_bounds = array<i64: 2>, scalar_prefetch = 0 : i64, scratch_operands = 1 : i64, tpu.core_type = #tpu.core_type<tc>, window_params = [{transform_indices = @transform_0, window_bounds = array<i64: 1, 8, 256>}, {pipeline_mode = #tpu.pipeline_mode<synchronous>, transform_indices = @transform_1, window_bounds = array<i64: 10, 8, 72>}, {pipeline_mode = #tpu.pipeline_mode<synchronous>, transform_indices = @transform_2, window_bounds = array<i64: 9, 256>}, {pipeline_mode = #tpu.pipeline_mode<synchronous>, transform_indices = @transform_3, window_bounds = array<i64: 8, 1>}, {transform_indices = @transform_4, window_bounds = array<i64: 1, 8, 256>}]} {
    %c0 = arith.constant 0 : index
    %c0_0 = arith.constant 0 : index
    %c0_1 = arith.constant 0 : index
    %0 = vector.load %arg1[%c0, %c0_0, %c0_1] : memref<1x8x256xf32, #tpu.memory_space<vmem>>, vector<1x8x256xf32>
    %1 = vector.shape_cast %0 : vector<1x8x256xf32> to vector<8x256xf32>
    %c1_i32 = arith.constant 1 : i32
    %c17_i32 = arith.constant 17 : i32
    %2 = tpu.dynamic_rotate %1 by %c17_i32 dim 1 : vector<8x256xf32>, i32 -> vector<8x256xf32>
    %c0_2 = arith.constant 0 : index
    %c0_3 = arith.constant 0 : index
    %3 = vector.load %arg3[%c0_2, %c0_3] : memref<9x256xf32, #tpu.memory_space<vmem>>, vector<1x256xf32>
    %4 = vector.broadcast %3 : vector<1x256xf32> to vector<8x256xf32>
    %5 = arith.mulf %2, %4 : vector<8x256xf32>
    %c0_4 = arith.constant 0 : index
    %c0_5 = arith.constant 0 : index
    %6 = vector.load %arg6[%c0_4, %c0_5] : memref<72x256xf32, #tpu.memory_space<vmem>>, vector<8x256xf32>
    tpu.vector_store %arg6[%c0_4, %c0_5], %5 {strides = array<i32>} : memref<72x256xf32, #tpu.memory_space<vmem>>, vector<8x256xf32>,
    %c16_i32 = arith.constant 16 : i32
    %7 = tpu.dynamic_rotate %1 by %c16_i32 dim 1 : vector<8x256xf32>, i32 -> vector<8x256xf32>
    %c1 = arith.constant 1 : index
    %c0_6 = arith.constant 0 : index
    %8 = vector.load %arg3[%c1, %c0_6] : memref<9x256xf32, #tpu.memory_space<vmem>>, vector<1x256xf32>
    %9 = vector.broadcast %8 : vector<1x256xf32> to vector<8x256xf32>
    %10 = arith.mulf %7, %9 : vector<8x256xf32>
    %c8 = arith.constant 8 : index
    %c0_7 = arith.constant 0 : index
    %11 = vector.load %arg6[%c8, %c0_7] : memref<72x256xf32, #tpu.memory_space<vmem>>, vector<8x256xf32>
    tpu.vector_store %arg6[%c8, %c0_7], %10 {strides = array<i32>} : memref<72x256xf32, #tpu.memory_space<vmem>>, vector<8x256xf32>,
    %c15_i32 = arith.constant 15 : i32
    %12 = tpu.dynamic_rotate %1 by %c15_i32 dim 1 : vector<8x256xf32>, i32 -> vector<8x256xf32>
    %c2 = arith.constant 2 : index
    %c0_8 = arith.constant 0 : index
    %13 = vector.load %arg3[%c2, %c0_8] : memref<9x256xf32, #tpu.memory_space<vmem>>, vector<1x256xf32>
    %14 = vector.broadcast %13 : vector<1x256xf32> to vector<8x256xf32>
    %15 = arith.mulf %12, %14 : vector<8x256xf32>
    %c16 = arith.constant 16 : index
    %c0_9 = arith.constant 0 : index
    %16 = vector.load %arg6[%c16, %c0_9] : memref<72x256xf32, #tpu.memory_space<vmem>>, vector<8x256xf32>
    tpu.vector_store %arg6[%c16, %c0_9], %15 {strides = array<i32>} : memref<72x256xf32, #tpu.memory_space<vmem>>, vector<8x256xf32>,
    %c1_i32_10 = arith.constant 1 : i32
    %17 = tpu.dynamic_rotate %1 by %c1_i32_10 dim 1 : vector<8x256xf32>, i32 -> vector<8x256xf32>
    %c3 = arith.constant 3 : index
    %c0_11 = arith.constant 0 : index
    %18 = vector.load %arg3[%c3, %c0_11] : memref<9x256xf32, #tpu.memory_space<vmem>>, vector<1x256xf32>
    %19 = vector.broadcast %18 : vector<1x256xf32> to vector<8x256xf32>
    %20 = arith.mulf %17, %19 : vector<8x256xf32>
    %c24 = arith.constant 24 : index
    %c0_12 = arith.constant 0 : index
    %21 = vector.load %arg6[%c24, %c0_12] : memref<72x256xf32, #tpu.memory_space<vmem>>, vector<8x256xf32>
    tpu.vector_store %arg6[%c24, %c0_12], %20 {strides = array<i32>} : memref<72x256xf32, #tpu.memory_space<vmem>>, vector<8x256xf32>,
    %c32 = arith.constant 32 : index
    %c0_13 = arith.constant 0 : index
    %22 = vector.load %arg6[%c32, %c0_13] : memref<72x256xf32, #tpu.memory_space<vmem>>, vector<8x256xf32>
    tpu.vector_store %arg6[%c32, %c0_13], %1 {strides = array<i32>} : memref<72x256xf32, #tpu.memory_space<vmem>>, vector<8x256xf32>,
    %c255_i32 = arith.constant 255 : i32
    %23 = tpu.dynamic_rotate %1 by %c255_i32 dim 1 : vector<8x256xf32>, i32 -> vector<8x256xf32>
    %c5 = arith.constant 5 : index
    %c0_14 = arith.constant 0 : index
    %24 = vector.load %arg3[%c5, %c0_14] : memref<9x256xf32, #tpu.memory_space<vmem>>, vector<1x256xf32>
    %25 = vector.broadcast %24 : vector<1x256xf32> to vector<8x256xf32>
    %26 = arith.mulf %23, %25 : vector<8x256xf32>
    %c40 = arith.constant 40 : index
    %c0_15 = arith.constant 0 : index
    %27 = vector.load %arg6[%c40, %c0_15] : memref<72x256xf32, #tpu.memory_space<vmem>>, vector<8x256xf32>
    tpu.vector_store %arg6[%c40, %c0_15], %26 {strides = array<i32>} : memref<72x256xf32, #tpu.memory_space<vmem>>, vector<8x256xf32>,
    %c241_i32 = arith.constant 241 : i32
    %28 = tpu.dynamic_rotate %1 by %c241_i32 dim 1 : vector<8x256xf32>, i32 -> vector<8x256xf32>
    %c6 = arith.constant 6 : index
    %c0_16 = arith.constant 0 : index
    %29 = vector.load %arg3[%c6, %c0_16] : memref<9x256xf32, #tpu.memory_space<vmem>>, vector<1x256xf32>
    %30 = vector.broadcast %29 : vector<1x256xf32> to vector<8x256xf32>
    %31 = arith.mulf %28, %30 : vector<8x256xf32>
    %c48 = arith.constant 48 : index
    %c0_17 = arith.constant 0 : index
    %32 = vector.load %arg6[%c48, %c0_17] : memref<72x256xf32, #tpu.memory_space<vmem>>, vector<8x256xf32>
    tpu.vector_store %arg6[%c48, %c0_17], %31 {strides = array<i32>} : memref<72x256xf32, #tpu.memory_space<vmem>>, vector<8x256xf32>,
    %c240_i32 = arith.constant 240 : i32
    %33 = tpu.dynamic_rotate %1 by %c240_i32 dim 1 : vector<8x256xf32>, i32 -> vector<8x256xf32>
    %c7 = arith.constant 7 : index
    %c0_18 = arith.constant 0 : index
    %34 = vector.load %arg3[%c7, %c0_18] : memref<9x256xf32, #tpu.memory_space<vmem>>, vector<1x256xf32>
    %35 = vector.broadcast %34 : vector<1x256xf32> to vector<8x256xf32>
    %36 = arith.mulf %33, %35 : vector<8x256xf32>
    %c56 = arith.constant 56 : index
    %c0_19 = arith.constant 0 : index
    %37 = vector.load %arg6[%c56, %c0_19] : memref<72x256xf32, #tpu.memory_space<vmem>>, vector<8x256xf32>
    tpu.vector_store %arg6[%c56, %c0_19], %36 {strides = array<i32>} : memref<72x256xf32, #tpu.memory_space<vmem>>, vector<8x256xf32>,
    %c239_i32 = arith.constant 239 : i32
    %38 = tpu.dynamic_rotate %1 by %c239_i32 dim 1 : vector<8x256xf32>, i32 -> vector<8x256xf32>
    %c8_20 = arith.constant 8 : index
    %c0_21 = arith.constant 0 : index
    %39 = vector.load %arg3[%c8_20, %c0_21] : memref<9x256xf32, #tpu.memory_space<vmem>>, vector<1x256xf32>
    %40 = vector.broadcast %39 : vector<1x256xf32> to vector<8x256xf32>
    %41 = arith.mulf %38, %40 : vector<8x256xf32>
    %c64 = arith.constant 64 : index
    %c0_22 = arith.constant 0 : index
    %42 = vector.load %arg6[%c64, %c0_22] : memref<72x256xf32, #tpu.memory_space<vmem>>, vector<8x256xf32>
    tpu.vector_store %arg6[%c64, %c0_22], %41 {strides = array<i32>} : memref<72x256xf32, #tpu.memory_space<vmem>>, vector<8x256xf32>,
    %c1_i32_23 = arith.constant 1 : i32
    %43 = arith.subi %c1_i32, %c1_i32_23 : i32
    %44 = arith.index_cast %43 : i32 to index
    %c0_24 = arith.constant 0 : index
    %c0_25 = arith.constant 0 : index
    %45 = vector.load %arg2[%44, %c0_24, %c0_25] : memref<10x8x72xf32, #tpu.memory_space<vmem>>, vector<1x8x72xf32>
    %46 = vector.shape_cast %45 : vector<1x8x72xf32> to vector<8x72xf32>
    %c0_26 = arith.constant 0 : index
    %c0_27 = arith.constant 0 : index
    %47 = vector.load %arg6[%c0_26, %c0_27] : memref<72x256xf32, #tpu.memory_space<vmem>>, vector<72x256xf32>
    %cst = arith.constant dense<0.000000e+00> : vector<8x256xf32>
    %48 = tpu.matmul %46, %47, %cst {dimension_numbers = #tpu.dot_dimension_numbers<[1], [0], [0], [1], [0, 0, 1, 1], [], []>} : vector<8x72xf32>, vector<72x256xf32>, vector<8x256xf32> -> vector<8x256xf32>
    %49 = arith.addf %1, %48 : vector<8x256xf32>
    %c2_i32 = arith.constant 2 : i32
    %c17_i32_28 = arith.constant 17 : i32
    %50 = tpu.dynamic_rotate %48 by %c17_i32_28 dim 1 : vector<8x256xf32>, i32 -> vector<8x256xf32>
    %c0_29 = arith.constant 0 : index
    %c0_30 = arith.constant 0 : index
    %51 = vector.load %arg3[%c0_29, %c0_30] : memref<9x256xf32, #tpu.memory_space<vmem>>, vector<1x256xf32>
    %52 = vector.broadcast %51 : vector<1x256xf32> to vector<8x256xf32>
    %53 = arith.mulf %50, %52 : vector<8x256xf32>
    %c0_31 = arith.constant 0 : index
    %c0_32 = arith.constant 0 : index
    %54 = vector.load %arg6[%c0_31, %c0_32] : memref<72x256xf32, #tpu.memory_space<vmem>>, vector<8x256xf32>
    tpu.vector_store %arg6[%c0_31, %c0_32], %53 {strides = array<i32>} : memref<72x256xf32, #tpu.memory_space<vmem>>, vector<8x256xf32>,
    %c16_i32_33 = arith.constant 16 : i32
    %55 = tpu.dynamic_rotate %48 by %c16_i32_33 dim 1 : vector<8x256xf32>, i32 -> vector<8x256xf32>
    %c1_34 = arith.constant 1 : index
    %c0_35 = arith.constant 0 : index
    %56 = vector.load %arg3[%c1_34, %c0_35] : memref<9x256xf32, #tpu.memory_space<vmem>>, vector<1x256xf32>
    %57 = vector.broadcast %56 : vector<1x256xf32> to vector<8x256xf32>
    %58 = arith.mulf %55, %57 : vector<8x256xf32>
    %c8_36 = arith.constant 8 : index
    %c0_37 = arith.constant 0 : index
    %59 = vector.load %arg6[%c8_36, %c0_37] : memref<72x256xf32, #tpu.memory_space<vmem>>, vector<8x256xf32>
    tpu.vector_store %arg6[%c8_36, %c0_37], %58 {strides = array<i32>} : memref<72x256xf32, #tpu.memory_space<vmem>>, vector<8x256xf32>,
    %c15_i32_38 = arith.constant 15 : i32
    %60 = tpu.dynamic_rotate %48 by %c15_i32_38 dim 1 : vector<8x256xf32>, i32 -> vector<8x256xf32>
    %c2_39 = arith.constant 2 : index
    %c0_40 = arith.constant 0 : index
    %61 = vector.load %arg3[%c2_39, %c0_40] : memref<9x256xf32, #tpu.memory_space<vmem>>, vector<1x256xf32>
    %62 = vector.broadcast %61 : vector<1x256xf32> to vector<8x256xf32>
    %63 = arith.mulf %60, %62 : vector<8x256xf32>
    %c16_41 = arith.constant 16 : index
    %c0_42 = arith.constant 0 : index
    %64 = vector.load %arg6[%c16_41, %c0_42] : memref<72x256xf32, #tpu.memory_space<vmem>>, vector<8x256xf32>
    tpu.vector_store %arg6[%c16_41, %c0_42], %63 {strides = array<i32>} : memref<72x256xf32, #tpu.memory_space<vmem>>, vector<8x256xf32>,
    %c1_i32_43 = arith.constant 1 : i32
    %65 = tpu.dynamic_rotate %48 by %c1_i32_43 dim 1 : vector<8x256xf32>, i32 -> vector<8x256xf32>
    %c3_44 = arith.constant 3 : index
    %c0_45 = arith.constant 0 : index
    %66 = vector.load %arg3[%c3_44, %c0_45] : memref<9x256xf32, #tpu.memory_space<vmem>>, vector<1x256xf32>
    %67 = vector.broadcast %66 : vector<1x256xf32> to vector<8x256xf32>
    %68 = arith.mulf %65, %67 : vector<8x256xf32>
    %c24_46 = arith.constant 24 : index
    %c0_47 = arith.constant 0 : index
    %69 = vector.load %arg6[%c24_46, %c0_47] : memref<72x256xf32, #tpu.memory_space<vmem>>, vector<8x256xf32>
    tpu.vector_store %arg6[%c24_46, %c0_47], %68 {strides = array<i32>} : memref<72x256xf32, #tpu.memory_space<vmem>>, vector<8x256xf32>,
    %c32_48 = arith.constant 32 : index
    %c0_49 = arith.constant 0 : index
    %70 = vector.load %arg6[%c32_48, %c0_49] : memref<72x256xf32, #tpu.memory_space<vmem>>, vector<8x256xf32>
    tpu.vector_store %arg6[%c32_48, %c0_49], %48 {strides = array<i32>} : memref<72x256xf32, #tpu.memory_space<vmem>>, vector<8x256xf32>,
    %c255_i32_50 = arith.constant 255 : i32
    %71 = tpu.dynamic_rotate %48 by %c255_i32_50 dim 1 : vector<8x256xf32>, i32 -> vector<8x256xf32>
    %c5_51 = arith.constant 5 : index
    %c0_52 = arith.constant 0 : index
    %72 = vector.load %arg3[%c5_51, %c0_52] : memref<9x256xf32, #tpu.memory_space<vmem>>, vector<1x256xf32>
    %73 = vector.broadcast %72 : vector<1x256xf32> to vector<8x256xf32>
    %74 = arith.mulf %71, %73 : vector<8x256xf32>
    %c40_53 = arith.constant 40 : index
    %c0_54 = arith.constant 0 : index
    %75 = vector.load %arg6[%c40_53, %c0_54] : memref<72x256xf32, #tpu.memory_space<vmem>>, vector<8x256xf32>
    tpu.vector_store %arg6[%c40_53, %c0_54], %74 {strides = array<i32>} : memref<72x256xf32, #tpu.memory_space<vmem>>, vector<8x256xf32>,
    %c241_i32_55 = arith.constant 241 : i32
    %76 = tpu.dynamic_rotate %48 by %c241_i32_55 dim 1 : vector<8x256xf32>, i32 -> vector<8x256xf32>
    %c6_56 = arith.constant 6 : index
    %c0_57 = arith.constant 0 : index
    %77 = vector.load %arg3[%c6_56, %c0_57] : memref<9x256xf32, #tpu.memory_space<vmem>>, vector<1x256xf32>
    %78 = vector.broadcast %77 : vector<1x256xf32> to vector<8x256xf32>
    %79 = arith.mulf %76, %78 : vector<8x256xf32>
    %c48_58 = arith.constant 48 : index
    %c0_59 = arith.constant 0 : index
    %80 = vector.load %arg6[%c48_58, %c0_59] : memref<72x256xf32, #tpu.memory_space<vmem>>, vector<8x256xf32>
    tpu.vector_store %arg6[%c48_58, %c0_59], %79 {strides = array<i32>} : memref<72x256xf32, #tpu.memory_space<vmem>>, vector<8x256xf32>,
    %c240_i32_60 = arith.constant 240 : i32
    %81 = tpu.dynamic_rotate %48 by %c240_i32_60 dim 1 : vector<8x256xf32>, i32 -> vector<8x256xf32>
    %c7_61 = arith.constant 7 : index
    %c0_62 = arith.constant 0 : index
    %82 = vector.load %arg3[%c7_61, %c0_62] : memref<9x256xf32, #tpu.memory_space<vmem>>, vector<1x256xf32>
    %83 = vector.broadcast %82 : vector<1x256xf32> to vector<8x256xf32>
    %84 = arith.mulf %81, %83 : vector<8x256xf32>
    %c56_63 = arith.constant 56 : index
    %c0_64 = arith.constant 0 : index
    %85 = vector.load %arg6[%c56_63, %c0_64] : memref<72x256xf32, #tpu.memory_space<vmem>>, vector<8x256xf32>
    tpu.vector_store %arg6[%c56_63, %c0_64], %84 {strides = array<i32>} : memref<72x256xf32, #tpu.memory_space<vmem>>, vector<8x256xf32>,
    %c239_i32_65 = arith.constant 239 : i32
    %86 = tpu.dynamic_rotate %48 by %c239_i32_65 dim 1 : vector<8x256xf32>, i32 -> vector<8x256xf32>
    %c8_66 = arith.constant 8 : index
    %c0_67 = arith.constant 0 : index
    %87 = vector.load %arg3[%c8_66, %c0_67] : memref<9x256xf32, #tpu.memory_space<vmem>>, vector<1x256xf32>
    %88 = vector.broadcast %87 : vector<1x256xf32> to vector<8x256xf32>
    %89 = arith.mulf %86, %88 : vector<8x256xf32>
    %c64_68 = arith.constant 64 : index
    %c0_69 = arith.constant 0 : index
    %90 = vector.load %arg6[%c64_68, %c0_69] : memref<72x256xf32, #tpu.memory_space<vmem>>, vector<8x256xf32>
    tpu.vector_store %arg6[%c64_68, %c0_69], %89 {strides = array<i32>} : memref<72x256xf32, #tpu.memory_space<vmem>>, vector<8x256xf32>,
    %c1_i32_70 = arith.constant 1 : i32
    %91 = arith.subi %c2_i32, %c1_i32_70 : i32
    %92 = arith.index_cast %91 : i32 to index
    %c0_71 = arith.constant 0 : index
    %c0_72 = arith.constant 0 : index
    %93 = vector.load %arg2[%92, %c0_71, %c0_72] : memref<10x8x72xf32, #tpu.memory_space<vmem>>, vector<1x8x72xf32>
    %94 = vector.shape_cast %93 : vector<1x8x72xf32> to vector<8x72xf32>
    %c0_73 = arith.constant 0 : index
    %c0_74 = arith.constant 0 : index
    %95 = vector.load %arg6[%c0_73, %c0_74] : memref<72x256xf32, #tpu.memory_space<vmem>>, vector<72x256xf32>
    %cst_75 = arith.constant dense<0.000000e+00> : vector<8x256xf32>
    %96 = tpu.matmul %94, %95, %cst_75 {dimension_numbers = #tpu.dot_dimension_numbers<[1], [0], [0], [1], [0, 0, 1, 1], [], []>} : vector<8x72xf32>, vector<72x256xf32>, vector<8x256xf32> -> vector<8x256xf32>
    %97 = arith.addf %49, %96 : vector<8x256xf32>
    %c3_i32 = arith.constant 3 : i32
    %c17_i32_76 = arith.constant 17 : i32
    %98 = tpu.dynamic_rotate %96 by %c17_i32_76 dim 1 : vector<8x256xf32>, i32 -> vector<8x256xf32>
    %c0_77 = arith.constant 0 : index
    %c0_78 = arith.constant 0 : index
    %99 = vector.load %arg3[%c0_77, %c0_78] : memref<9x256xf32, #tpu.memory_space<vmem>>, vector<1x256xf32>
    %100 = vector.broadcast %99 : vector<1x256xf32> to vector<8x256xf32>
    %101 = arith.mulf %98, %100 : vector<8x256xf32>
    %c0_79 = arith.constant 0 : index
    %c0_80 = arith.constant 0 : index
    %102 = vector.load %arg6[%c0_79, %c0_80] : memref<72x256xf32, #tpu.memory_space<vmem>>, vector<8x256xf32>
    tpu.vector_store %arg6[%c0_79, %c0_80], %101 {strides = array<i32>} : memref<72x256xf32, #tpu.memory_space<vmem>>, vector<8x256xf32>,
    %c16_i32_81 = arith.constant 16 : i32
    %103 = tpu.dynamic_rotate %96 by %c16_i32_81 dim 1 : vector<8x256xf32>, i32 -> vector<8x256xf32>
    %c1_82 = arith.constant 1 : index
    %c0_83 = arith.constant 0 : index
    %104 = vector.load %arg3[%c1_82, %c0_83] : memref<9x256xf32, #tpu.memory_space<vmem>>, vector<1x256xf32>
    %105 = vector.broadcast %104 : vector<1x256xf32> to vector<8x256xf32>
    %106 = arith.mulf %103, %105 : vector<8x256xf32>
    %c8_84 = arith.constant 8 : index
    %c0_85 = arith.constant 0 : index
    %107 = vector.load %arg6[%c8_84, %c0_85] : memref<72x256xf32, #tpu.memory_space<vmem>>, vector<8x256xf32>
    tpu.vector_store %arg6[%c8_84, %c0_85], %106 {strides = array<i32>} : memref<72x256xf32, #tpu.memory_space<vmem>>, vector<8x256xf32>,
    %c15_i32_86 = arith.constant 15 : i32
    %108 = tpu.dynamic_rotate %96 by %c15_i32_86 dim 1 : vector<8x256xf32>, i32 -> vector<8x256xf32>
    %c2_87 = arith.constant 2 : index
    %c0_88 = arith.constant 0 : index
    %109 = vector.load %arg3[%c2_87, %c0_88] : memref<9x256xf32, #tpu.memory_space<vmem>>, vector<1x256xf32>
    %110 = vector.broadcast %109 : vector<1x256xf32> to vector<8x256xf32>
    %111 = arith.mulf %108, %110 : vector<8x256xf32>
    %c16_89 = arith.constant 16 : index
    %c0_90 = arith.constant 0 : index
    %112 = vector.load %arg6[%c16_89, %c0_90] : memref<72x256xf32, #tpu.memory_space<vmem>>, vector<8x256xf32>
    tpu.vector_store %arg6[%c16_89, %c0_90], %111 {strides = array<i32>} : memref<72x256xf32, #tpu.memory_space<vmem>>, vector<8x256xf32>,
    %c1_i32_91 = arith.constant 1 : i32
    %113 = tpu.dynamic_rotate %96 by %c1_i32_91 dim 1 : vector<8x256xf32>, i32 -> vector<8x256xf32>
    %c3_92 = arith.constant 3 : index
    %c0_93 = arith.constant 0 : index
    %114 = vector.load %arg3[%c3_92, %c0_93] : memref<9x256xf32, #tpu.memory_space<vmem>>, vector<1x256xf32>
    %115 = vector.broadcast %114 : vector<1x256xf32> to vector<8x256xf32>
    %116 = arith.mulf %113, %115 : vector<8x256xf32>
    %c24_94 = arith.constant 24 : index
    %c0_95 = arith.constant 0 : index
    %117 = vector.load %arg6[%c24_94, %c0_95] : memref<72x256xf32, #tpu.memory_space<vmem>>, vector<8x256xf32>
    tpu.vector_store %arg6[%c24_94, %c0_95], %116 {strides = array<i32>} : memref<72x256xf32, #tpu.memory_space<vmem>>, vector<8x256xf32>,
    %c32_96 = arith.constant 32 : index
    %c0_97 = arith.constant 0 : index
    %118 = vector.load %arg6[%c32_96, %c0_97] : memref<72x256xf32, #tpu.memory_space<vmem>>, vector<8x256xf32>
    tpu.vector_store %arg6[%c32_96, %c0_97], %96 {strides = array<i32>} : memref<72x256xf32, #tpu.memory_space<vmem>>, vector<8x256xf32>,
    %c255_i32_98 = arith.constant 255 : i32
    %119 = tpu.dynamic_rotate %96 by %c255_i32_98 dim 1 : vector<8x256xf32>, i32 -> vector<8x256xf32>
    %c5_99 = arith.constant 5 : index
    %c0_100 = arith.constant 0 : index
    %120 = vector.load %arg3[%c5_99, %c0_100] : memref<9x256xf32, #tpu.memory_space<vmem>>, vector<1x256xf32>
    %121 = vector.broadcast %120 : vector<1x256xf32> to vector<8x256xf32>
    %122 = arith.mulf %119, %121 : vector<8x256xf32>
    %c40_101 = arith.constant 40 : index
    %c0_102 = arith.constant 0 : index
    %123 = vector.load %arg6[%c40_101, %c0_102] : memref<72x256xf32, #tpu.memory_space<vmem>>, vector<8x256xf32>
    tpu.vector_store %arg6[%c40_101, %c0_102], %122 {strides = array<i32>} : memref<72x256xf32, #tpu.memory_space<vmem>>, vector<8x256xf32>,
    %c241_i32_103 = arith.constant 241 : i32
    %124 = tpu.dynamic_rotate %96 by %c241_i32_103 dim 1 : vector<8x256xf32>, i32 -> vector<8x256xf32>
    %c6_104 = arith.constant 6 : index
    %c0_105 = arith.constant 0 : index
    %125 = vector.load %arg3[%c6_104, %c0_105] : memref<9x256xf32, #tpu.memory_space<vmem>>, vector<1x256xf32>
    %126 = vector.broadcast %125 : vector<1x256xf32> to vector<8x256xf32>
    %127 = arith.mulf %124, %126 : vector<8x256xf32>
    %c48_106 = arith.constant 48 : index
    %c0_107 = arith.constant 0 : index
    %128 = vector.load %arg6[%c48_106, %c0_107] : memref<72x256xf32, #tpu.memory_space<vmem>>, vector<8x256xf32>
    tpu.vector_store %arg6[%c48_106, %c0_107], %127 {strides = array<i32>} : memref<72x256xf32, #tpu.memory_space<vmem>>, vector<8x256xf32>,
    %c240_i32_108 = arith.constant 240 : i32
    %129 = tpu.dynamic_rotate %96 by %c240_i32_108 dim 1 : vector<8x256xf32>, i32 -> vector<8x256xf32>
    %c7_109 = arith.constant 7 : index
    %c0_110 = arith.constant 0 : index
    %130 = vector.load %arg3[%c7_109, %c0_110] : memref<9x256xf32, #tpu.memory_space<vmem>>, vector<1x256xf32>
    %131 = vector.broadcast %130 : vector<1x256xf32> to vector<8x256xf32>
    %132 = arith.mulf %129, %131 : vector<8x256xf32>
    %c56_111 = arith.constant 56 : index
    %c0_112 = arith.constant 0 : index
    %133 = vector.load %arg6[%c56_111, %c0_112] : memref<72x256xf32, #tpu.memory_space<vmem>>, vector<8x256xf32>
    tpu.vector_store %arg6[%c56_111, %c0_112], %132 {strides = array<i32>} : memref<72x256xf32, #tpu.memory_space<vmem>>, vector<8x256xf32>,
    %c239_i32_113 = arith.constant 239 : i32
    %134 = tpu.dynamic_rotate %96 by %c239_i32_113 dim 1 : vector<8x256xf32>, i32 -> vector<8x256xf32>
    %c8_114 = arith.constant 8 : index
    %c0_115 = arith.constant 0 : index
    %135 = vector.load %arg3[%c8_114, %c0_115] : memref<9x256xf32, #tpu.memory_space<vmem>>, vector<1x256xf32>
    %136 = vector.broadcast %135 : vector<1x256xf32> to vector<8x256xf32>
    %137 = arith.mulf %134, %136 : vector<8x256xf32>
    %c64_116 = arith.constant 64 : index
    %c0_117 = arith.constant 0 : index
    %138 = vector.load %arg6[%c64_116, %c0_117] : memref<72x256xf32, #tpu.memory_space<vmem>>, vector<8x256xf32>
    tpu.vector_store %arg6[%c64_116, %c0_117], %137 {strides = array<i32>} : memref<72x256xf32, #tpu.memory_space<vmem>>, vector<8x256xf32>,
    %c1_i32_118 = arith.constant 1 : i32
    %139 = arith.subi %c3_i32, %c1_i32_118 : i32
    %140 = arith.index_cast %139 : i32 to index
    %c0_119 = arith.constant 0 : index
    %c0_120 = arith.constant 0 : index
    %141 = vector.load %arg2[%140, %c0_119, %c0_120] : memref<10x8x72xf32, #tpu.memory_space<vmem>>, vector<1x8x72xf32>
    %142 = vector.shape_cast %141 : vector<1x8x72xf32> to vector<8x72xf32>
    %c0_121 = arith.constant 0 : index
    %c0_122 = arith.constant 0 : index
    %143 = vector.load %arg6[%c0_121, %c0_122] : memref<72x256xf32, #tpu.memory_space<vmem>>, vector<72x256xf32>
    %cst_123 = arith.constant dense<0.000000e+00> : vector<8x256xf32>
    %144 = tpu.matmul %142, %143, %cst_123 {dimension_numbers = #tpu.dot_dimension_numbers<[1], [0], [0], [1], [0, 0, 1, 1], [], []>} : vector<8x72xf32>, vector<72x256xf32>, vector<8x256xf32> -> vector<8x256xf32>
    %145 = arith.addf %97, %144 : vector<8x256xf32>
    %c4_i32 = arith.constant 4 : i32
    %c17_i32_124 = arith.constant 17 : i32
    %146 = tpu.dynamic_rotate %144 by %c17_i32_124 dim 1 : vector<8x256xf32>, i32 -> vector<8x256xf32>
    %c0_125 = arith.constant 0 : index
    %c0_126 = arith.constant 0 : index
    %147 = vector.load %arg3[%c0_125, %c0_126] : memref<9x256xf32, #tpu.memory_space<vmem>>, vector<1x256xf32>
    %148 = vector.broadcast %147 : vector<1x256xf32> to vector<8x256xf32>
    %149 = arith.mulf %146, %148 : vector<8x256xf32>
    %c0_127 = arith.constant 0 : index
    %c0_128 = arith.constant 0 : index
    %150 = vector.load %arg6[%c0_127, %c0_128] : memref<72x256xf32, #tpu.memory_space<vmem>>, vector<8x256xf32>
    tpu.vector_store %arg6[%c0_127, %c0_128], %149 {strides = array<i32>} : memref<72x256xf32, #tpu.memory_space<vmem>>, vector<8x256xf32>,
    %c16_i32_129 = arith.constant 16 : i32
    %151 = tpu.dynamic_rotate %144 by %c16_i32_129 dim 1 : vector<8x256xf32>, i32 -> vector<8x256xf32>
    %c1_130 = arith.constant 1 : index
    %c0_131 = arith.constant 0 : index
    %152 = vector.load %arg3[%c1_130, %c0_131] : memref<9x256xf32, #tpu.memory_space<vmem>>, vector<1x256xf32>
    %153 = vector.broadcast %152 : vector<1x256xf32> to vector<8x256xf32>
    %154 = arith.mulf %151, %153 : vector<8x256xf32>
    %c8_132 = arith.constant 8 : index
    %c0_133 = arith.constant 0 : index
    %155 = vector.load %arg6[%c8_132, %c0_133] : memref<72x256xf32, #tpu.memory_space<vmem>>, vector<8x256xf32>
    tpu.vector_store %arg6[%c8_132, %c0_133], %154 {strides = array<i32>} : memref<72x256xf32, #tpu.memory_space<vmem>>, vector<8x256xf32>,
    %c15_i32_134 = arith.constant 15 : i32
    %156 = tpu.dynamic_rotate %144 by %c15_i32_134 dim 1 : vector<8x256xf32>, i32 -> vector<8x256xf32>
    %c2_135 = arith.constant 2 : index
    %c0_136 = arith.constant 0 : index
    %157 = vector.load %arg3[%c2_135, %c0_136] : memref<9x256xf32, #tpu.memory_space<vmem>>, vector<1x256xf32>
    %158 = vector.broadcast %157 : vector<1x256xf32> to vector<8x256xf32>
    %159 = arith.mulf %156, %158 : vector<8x256xf32>
    %c16_137 = arith.constant 16 : index
    %c0_138 = arith.constant 0 : index
    %160 = vector.load %arg6[%c16_137, %c0_138] : memref<72x256xf32, #tpu.memory_space<vmem>>, vector<8x256xf32>
    tpu.vector_store %arg6[%c16_137, %c0_138], %159 {strides = array<i32>} : memref<72x256xf32, #tpu.memory_space<vmem>>, vector<8x256xf32>,
    %c1_i32_139 = arith.constant 1 : i32
    %161 = tpu.dynamic_rotate %144 by %c1_i32_139 dim 1 : vector<8x256xf32>, i32 -> vector<8x256xf32>
    %c3_140 = arith.constant 3 : index
    %c0_141 = arith.constant 0 : index
    %162 = vector.load %arg3[%c3_140, %c0_141] : memref<9x256xf32, #tpu.memory_space<vmem>>, vector<1x256xf32>
    %163 = vector.broadcast %162 : vector<1x256xf32> to vector<8x256xf32>
    %164 = arith.mulf %161, %163 : vector<8x256xf32>
    %c24_142 = arith.constant 24 : index
    %c0_143 = arith.constant 0 : index
    %165 = vector.load %arg6[%c24_142, %c0_143] : memref<72x256xf32, #tpu.memory_space<vmem>>, vector<8x256xf32>
    tpu.vector_store %arg6[%c24_142, %c0_143], %164 {strides = array<i32>} : memref<72x256xf32, #tpu.memory_space<vmem>>, vector<8x256xf32>,
    %c32_144 = arith.constant 32 : index
    %c0_145 = arith.constant 0 : index
    %166 = vector.load %arg6[%c32_144, %c0_145] : memref<72x256xf32, #tpu.memory_space<vmem>>, vector<8x256xf32>
    tpu.vector_store %arg6[%c32_144, %c0_145], %144 {strides = array<i32>} : memref<72x256xf32, #tpu.memory_space<vmem>>, vector<8x256xf32>,
    %c255_i32_146 = arith.constant 255 : i32
    %167 = tpu.dynamic_rotate %144 by %c255_i32_146 dim 1 : vector<8x256xf32>, i32 -> vector<8x256xf32>
    %c5_147 = arith.constant 5 : index
    %c0_148 = arith.constant 0 : index
    %168 = vector.load %arg3[%c5_147, %c0_148] : memref<9x256xf32, #tpu.memory_space<vmem>>, vector<1x256xf32>
    %169 = vector.broadcast %168 : vector<1x256xf32> to vector<8x256xf32>
    %170 = arith.mulf %167, %169 : vector<8x256xf32>
    %c40_149 = arith.constant 40 : index
    %c0_150 = arith.constant 0 : index
    %171 = vector.load %arg6[%c40_149, %c0_150] : memref<72x256xf32, #tpu.memory_space<vmem>>, vector<8x256xf32>
    tpu.vector_store %arg6[%c40_149, %c0_150], %170 {strides = array<i32>} : memref<72x256xf32, #tpu.memory_space<vmem>>, vector<8x256xf32>,
    %c241_i32_151 = arith.constant 241 : i32
    %172 = tpu.dynamic_rotate %144 by %c241_i32_151 dim 1 : vector<8x256xf32>, i32 -> vector<8x256xf32>
    %c6_152 = arith.constant 6 : index
    %c0_153 = arith.constant 0 : index
    %173 = vector.load %arg3[%c6_152, %c0_153] : memref<9x256xf32, #tpu.memory_space<vmem>>, vector<1x256xf32>
    %174 = vector.broadcast %173 : vector<1x256xf32> to vector<8x256xf32>
    %175 = arith.mulf %172, %174 : vector<8x256xf32>
    %c48_154 = arith.constant 48 : index
    %c0_155 = arith.constant 0 : index
    %176 = vector.load %arg6[%c48_154, %c0_155] : memref<72x256xf32, #tpu.memory_space<vmem>>, vector<8x256xf32>
    tpu.vector_store %arg6[%c48_154, %c0_155], %175 {strides = array<i32>} : memref<72x256xf32, #tpu.memory_space<vmem>>, vector<8x256xf32>,
    %c240_i32_156 = arith.constant 240 : i32
    %177 = tpu.dynamic_rotate %144 by %c240_i32_156 dim 1 : vector<8x256xf32>, i32 -> vector<8x256xf32>
    %c7_157 = arith.constant 7 : index
    %c0_158 = arith.constant 0 : index
    %178 = vector.load %arg3[%c7_157, %c0_158] : memref<9x256xf32, #tpu.memory_space<vmem>>, vector<1x256xf32>
    %179 = vector.broadcast %178 : vector<1x256xf32> to vector<8x256xf32>
    %180 = arith.mulf %177, %179 : vector<8x256xf32>
    %c56_159 = arith.constant 56 : index
    %c0_160 = arith.constant 0 : index
    %181 = vector.load %arg6[%c56_159, %c0_160] : memref<72x256xf32, #tpu.memory_space<vmem>>, vector<8x256xf32>
    tpu.vector_store %arg6[%c56_159, %c0_160], %180 {strides = array<i32>} : memref<72x256xf32, #tpu.memory_space<vmem>>, vector<8x256xf32>,
    %c239_i32_161 = arith.constant 239 : i32
    %182 = tpu.dynamic_rotate %144 by %c239_i32_161 dim 1 : vector<8x256xf32>, i32 -> vector<8x256xf32>
    %c8_162 = arith.constant 8 : index
    %c0_163 = arith.constant 0 : index
    %183 = vector.load %arg3[%c8_162, %c0_163] : memref<9x256xf32, #tpu.memory_space<vmem>>, vector<1x256xf32>
    %184 = vector.broadcast %183 : vector<1x256xf32> to vector<8x256xf32>
    %185 = arith.mulf %182, %184 : vector<8x256xf32>
    %c64_164 = arith.constant 64 : index
    %c0_165 = arith.constant 0 : index
    %186 = vector.load %arg6[%c64_164, %c0_165] : memref<72x256xf32, #tpu.memory_space<vmem>>, vector<8x256xf32>
    tpu.vector_store %arg6[%c64_164, %c0_165], %185 {strides = array<i32>} : memref<72x256xf32, #tpu.memory_space<vmem>>, vector<8x256xf32>,
    %c1_i32_166 = arith.constant 1 : i32
    %187 = arith.subi %c4_i32, %c1_i32_166 : i32
    %188 = arith.index_cast %187 : i32 to index
    %c0_167 = arith.constant 0 : index
    %c0_168 = arith.constant 0 : index
    %189 = vector.load %arg2[%188, %c0_167, %c0_168] : memref<10x8x72xf32, #tpu.memory_space<vmem>>, vector<1x8x72xf32>
    %190 = vector.shape_cast %189 : vector<1x8x72xf32> to vector<8x72xf32>
    %c0_169 = arith.constant 0 : index
    %c0_170 = arith.constant 0 : index
    %191 = vector.load %arg6[%c0_169, %c0_170] : memref<72x256xf32, #tpu.memory_space<vmem>>, vector<72x256xf32>
    %cst_171 = arith.constant dense<0.000000e+00> : vector<8x256xf32>
    %192 = tpu.matmul %190, %191, %cst_171 {dimension_numbers = #tpu.dot_dimension_numbers<[1], [0], [0], [1], [0, 0, 1, 1], [], []>} : vector<8x72xf32>, vector<72x256xf32>, vector<8x256xf32> -> vector<8x256xf32>
    %193 = arith.addf %145, %192 : vector<8x256xf32>
    %c5_i32 = arith.constant 5 : i32
    %c17_i32_172 = arith.constant 17 : i32
    %194 = tpu.dynamic_rotate %192 by %c17_i32_172 dim 1 : vector<8x256xf32>, i32 -> vector<8x256xf32>
    %c0_173 = arith.constant 0 : index
    %c0_174 = arith.constant 0 : index
    %195 = vector.load %arg3[%c0_173, %c0_174] : memref<9x256xf32, #tpu.memory_space<vmem>>, vector<1x256xf32>
    %196 = vector.broadcast %195 : vector<1x256xf32> to vector<8x256xf32>
    %197 = arith.mulf %194, %196 : vector<8x256xf32>
    %c0_175 = arith.constant 0 : index
    %c0_176 = arith.constant 0 : index
    %198 = vector.load %arg6[%c0_175, %c0_176] : memref<72x256xf32, #tpu.memory_space<vmem>>, vector<8x256xf32>
    tpu.vector_store %arg6[%c0_175, %c0_176], %197 {strides = array<i32>} : memref<72x256xf32, #tpu.memory_space<vmem>>, vector<8x256xf32>,
    %c16_i32_177 = arith.constant 16 : i32
    %199 = tpu.dynamic_rotate %192 by %c16_i32_177 dim 1 : vector<8x256xf32>, i32 -> vector<8x256xf32>
    %c1_178 = arith.constant 1 : index
    %c0_179 = arith.constant 0 : index
    %200 = vector.load %arg3[%c1_178, %c0_179] : memref<9x256xf32, #tpu.memory_space<vmem>>, vector<1x256xf32>
    %201 = vector.broadcast %200 : vector<1x256xf32> to vector<8x256xf32>
    %202 = arith.mulf %199, %201 : vector<8x256xf32>
    %c8_180 = arith.constant 8 : index
    %c0_181 = arith.constant 0 : index
    %203 = vector.load %arg6[%c8_180, %c0_181] : memref<72x256xf32, #tpu.memory_space<vmem>>, vector<8x256xf32>
    tpu.vector_store %arg6[%c8_180, %c0_181], %202 {strides = array<i32>} : memref<72x256xf32, #tpu.memory_space<vmem>>, vector<8x256xf32>,
    %c15_i32_182 = arith.constant 15 : i32
    %204 = tpu.dynamic_rotate %192 by %c15_i32_182 dim 1 : vector<8x256xf32>, i32 -> vector<8x256xf32>
    %c2_183 = arith.constant 2 : index
    %c0_184 = arith.constant 0 : index
    %205 = vector.load %arg3[%c2_183, %c0_184] : memref<9x256xf32, #tpu.memory_space<vmem>>, vector<1x256xf32>
    %206 = vector.broadcast %205 : vector<1x256xf32> to vector<8x256xf32>
    %207 = arith.mulf %204, %206 : vector<8x256xf32>
    %c16_185 = arith.constant 16 : index
    %c0_186 = arith.constant 0 : index
    %208 = vector.load %arg6[%c16_185, %c0_186] : memref<72x256xf32, #tpu.memory_space<vmem>>, vector<8x256xf32>
    tpu.vector_store %arg6[%c16_185, %c0_186], %207 {strides = array<i32>} : memref<72x256xf32, #tpu.memory_space<vmem>>, vector<8x256xf32>,
    %c1_i32_187 = arith.constant 1 : i32
    %209 = tpu.dynamic_rotate %192 by %c1_i32_187 dim 1 : vector<8x256xf32>, i32 -> vector<8x256xf32>
    %c3_188 = arith.constant 3 : index
    %c0_189 = arith.constant 0 : index
    %210 = vector.load %arg3[%c3_188, %c0_189] : memref<9x256xf32, #tpu.memory_space<vmem>>, vector<1x256xf32>
    %211 = vector.broadcast %210 : vector<1x256xf32> to vector<8x256xf32>
    %212 = arith.mulf %209, %211 : vector<8x256xf32>
    %c24_190 = arith.constant 24 : index
    %c0_191 = arith.constant 0 : index
    %213 = vector.load %arg6[%c24_190, %c0_191] : memref<72x256xf32, #tpu.memory_space<vmem>>, vector<8x256xf32>
    tpu.vector_store %arg6[%c24_190, %c0_191], %212 {strides = array<i32>} : memref<72x256xf32, #tpu.memory_space<vmem>>, vector<8x256xf32>,
    %c32_192 = arith.constant 32 : index
    %c0_193 = arith.constant 0 : index
    %214 = vector.load %arg6[%c32_192, %c0_193] : memref<72x256xf32, #tpu.memory_space<vmem>>, vector<8x256xf32>
    tpu.vector_store %arg6[%c32_192, %c0_193], %192 {strides = array<i32>} : memref<72x256xf32, #tpu.memory_space<vmem>>, vector<8x256xf32>,
    %c255_i32_194 = arith.constant 255 : i32
    %215 = tpu.dynamic_rotate %192 by %c255_i32_194 dim 1 : vector<8x256xf32>, i32 -> vector<8x256xf32>
    %c5_195 = arith.constant 5 : index
    %c0_196 = arith.constant 0 : index
    %216 = vector.load %arg3[%c5_195, %c0_196] : memref<9x256xf32, #tpu.memory_space<vmem>>, vector<1x256xf32>
    %217 = vector.broadcast %216 : vector<1x256xf32> to vector<8x256xf32>
    %218 = arith.mulf %215, %217 : vector<8x256xf32>
    %c40_197 = arith.constant 40 : index
    %c0_198 = arith.constant 0 : index
    %219 = vector.load %arg6[%c40_197, %c0_198] : memref<72x256xf32, #tpu.memory_space<vmem>>, vector<8x256xf32>
    tpu.vector_store %arg6[%c40_197, %c0_198], %218 {strides = array<i32>} : memref<72x256xf32, #tpu.memory_space<vmem>>, vector<8x256xf32>,
    %c241_i32_199 = arith.constant 241 : i32
    %220 = tpu.dynamic_rotate %192 by %c241_i32_199 dim 1 : vector<8x256xf32>, i32 -> vector<8x256xf32>
    %c6_200 = arith.constant 6 : index
    %c0_201 = arith.constant 0 : index
    %221 = vector.load %arg3[%c6_200, %c0_201] : memref<9x256xf32, #tpu.memory_space<vmem>>, vector<1x256xf32>
    %222 = vector.broadcast %221 : vector<1x256xf32> to vector<8x256xf32>
    %223 = arith.mulf %220, %222 : vector<8x256xf32>
    %c48_202 = arith.constant 48 : index
    %c0_203 = arith.constant 0 : index
    %224 = vector.load %arg6[%c48_202, %c0_203] : memref<72x256xf32, #tpu.memory_space<vmem>>, vector<8x256xf32>
    tpu.vector_store %arg6[%c48_202, %c0_203], %223 {strides = array<i32>} : memref<72x256xf32, #tpu.memory_space<vmem>>, vector<8x256xf32>,
    %c240_i32_204 = arith.constant 240 : i32
    %225 = tpu.dynamic_rotate %192 by %c240_i32_204 dim 1 : vector<8x256xf32>, i32 -> vector<8x256xf32>
    %c7_205 = arith.constant 7 : index
    %c0_206 = arith.constant 0 : index
    %226 = vector.load %arg3[%c7_205, %c0_206] : memref<9x256xf32, #tpu.memory_space<vmem>>, vector<1x256xf32>
    %227 = vector.broadcast %226 : vector<1x256xf32> to vector<8x256xf32>
    %228 = arith.mulf %225, %227 : vector<8x256xf32>
    %c56_207 = arith.constant 56 : index
    %c0_208 = arith.constant 0 : index
    %229 = vector.load %arg6[%c56_207, %c0_208] : memref<72x256xf32, #tpu.memory_space<vmem>>, vector<8x256xf32>
    tpu.vector_store %arg6[%c56_207, %c0_208], %228 {strides = array<i32>} : memref<72x256xf32, #tpu.memory_space<vmem>>, vector<8x256xf32>,
    %c239_i32_209 = arith.constant 239 : i32
    %230 = tpu.dynamic_rotate %192 by %c239_i32_209 dim 1 : vector<8x256xf32>, i32 -> vector<8x256xf32>
    %c8_210 = arith.constant 8 : index
    %c0_211 = arith.constant 0 : index
    %231 = vector.load %arg3[%c8_210, %c0_211] : memref<9x256xf32, #tpu.memory_space<vmem>>, vector<1x256xf32>
    %232 = vector.broadcast %231 : vector<1x256xf32> to vector<8x256xf32>
    %233 = arith.mulf %230, %232 : vector<8x256xf32>
    %c64_212 = arith.constant 64 : index
    %c0_213 = arith.constant 0 : index
    %234 = vector.load %arg6[%c64_212, %c0_213] : memref<72x256xf32, #tpu.memory_space<vmem>>, vector<8x256xf32>
    tpu.vector_store %arg6[%c64_212, %c0_213], %233 {strides = array<i32>} : memref<72x256xf32, #tpu.memory_space<vmem>>, vector<8x256xf32>,
    %c1_i32_214 = arith.constant 1 : i32
    %235 = arith.subi %c5_i32, %c1_i32_214 : i32
    %236 = arith.index_cast %235 : i32 to index
    %c0_215 = arith.constant 0 : index
    %c0_216 = arith.constant 0 : index
    %237 = vector.load %arg2[%236, %c0_215, %c0_216] : memref<10x8x72xf32, #tpu.memory_space<vmem>>, vector<1x8x72xf32>
    %238 = vector.shape_cast %237 : vector<1x8x72xf32> to vector<8x72xf32>
    %c0_217 = arith.constant 0 : index
    %c0_218 = arith.constant 0 : index
    %239 = vector.load %arg6[%c0_217, %c0_218] : memref<72x256xf32, #tpu.memory_space<vmem>>, vector<72x256xf32>
    %cst_219 = arith.constant dense<0.000000e+00> : vector<8x256xf32>
    %240 = tpu.matmul %238, %239, %cst_219 {dimension_numbers = #tpu.dot_dimension_numbers<[1], [0], [0], [1], [0, 0, 1, 1], [], []>} : vector<8x72xf32>, vector<72x256xf32>, vector<8x256xf32> -> vector<8x256xf32>
    %241 = arith.addf %193, %240 : vector<8x256xf32>
    %c6_i32 = arith.constant 6 : i32
    %c17_i32_220 = arith.constant 17 : i32
    %242 = tpu.dynamic_rotate %240 by %c17_i32_220 dim 1 : vector<8x256xf32>, i32 -> vector<8x256xf32>
    %c0_221 = arith.constant 0 : index
    %c0_222 = arith.constant 0 : index
    %243 = vector.load %arg3[%c0_221, %c0_222] : memref<9x256xf32, #tpu.memory_space<vmem>>, vector<1x256xf32>
    %244 = vector.broadcast %243 : vector<1x256xf32> to vector<8x256xf32>
    %245 = arith.mulf %242, %244 : vector<8x256xf32>
    %c0_223 = arith.constant 0 : index
    %c0_224 = arith.constant 0 : index
    %246 = vector.load %arg6[%c0_223, %c0_224] : memref<72x256xf32, #tpu.memory_space<vmem>>, vector<8x256xf32>
    tpu.vector_store %arg6[%c0_223, %c0_224], %245 {strides = array<i32>} : memref<72x256xf32, #tpu.memory_space<vmem>>, vector<8x256xf32>,
    %c16_i32_225 = arith.constant 16 : i32
    %247 = tpu.dynamic_rotate %240 by %c16_i32_225 dim 1 : vector<8x256xf32>, i32 -> vector<8x256xf32>
    %c1_226 = arith.constant 1 : index
    %c0_227 = arith.constant 0 : index
    %248 = vector.load %arg3[%c1_226, %c0_227] : memref<9x256xf32, #tpu.memory_space<vmem>>, vector<1x256xf32>
    %249 = vector.broadcast %248 : vector<1x256xf32> to vector<8x256xf32>
    %250 = arith.mulf %247, %249 : vector<8x256xf32>
    %c8_228 = arith.constant 8 : index
    %c0_229 = arith.constant 0 : index
    %251 = vector.load %arg6[%c8_228, %c0_229] : memref<72x256xf32, #tpu.memory_space<vmem>>, vector<8x256xf32>
    tpu.vector_store %arg6[%c8_228, %c0_229], %250 {strides = array<i32>} : memref<72x256xf32, #tpu.memory_space<vmem>>, vector<8x256xf32>,
    %c15_i32_230 = arith.constant 15 : i32
    %252 = tpu.dynamic_rotate %240 by %c15_i32_230 dim 1 : vector<8x256xf32>, i32 -> vector<8x256xf32>
    %c2_231 = arith.constant 2 : index
    %c0_232 = arith.constant 0 : index
    %253 = vector.load %arg3[%c2_231, %c0_232] : memref<9x256xf32, #tpu.memory_space<vmem>>, vector<1x256xf32>
    %254 = vector.broadcast %253 : vector<1x256xf32> to vector<8x256xf32>
    %255 = arith.mulf %252, %254 : vector<8x256xf32>
    %c16_233 = arith.constant 16 : index
    %c0_234 = arith.constant 0 : index
    %256 = vector.load %arg6[%c16_233, %c0_234] : memref<72x256xf32, #tpu.memory_space<vmem>>, vector<8x256xf32>
    tpu.vector_store %arg6[%c16_233, %c0_234], %255 {strides = array<i32>} : memref<72x256xf32, #tpu.memory_space<vmem>>, vector<8x256xf32>,
    %c1_i32_235 = arith.constant 1 : i32
    %257 = tpu.dynamic_rotate %240 by %c1_i32_235 dim 1 : vector<8x256xf32>, i32 -> vector<8x256xf32>
    %c3_236 = arith.constant 3 : index
    %c0_237 = arith.constant 0 : index
    %258 = vector.load %arg3[%c3_236, %c0_237] : memref<9x256xf32, #tpu.memory_space<vmem>>, vector<1x256xf32>
    %259 = vector.broadcast %258 : vector<1x256xf32> to vector<8x256xf32>
    %260 = arith.mulf %257, %259 : vector<8x256xf32>
    %c24_238 = arith.constant 24 : index
    %c0_239 = arith.constant 0 : index
    %261 = vector.load %arg6[%c24_238, %c0_239] : memref<72x256xf32, #tpu.memory_space<vmem>>, vector<8x256xf32>
    tpu.vector_store %arg6[%c24_238, %c0_239], %260 {strides = array<i32>} : memref<72x256xf32, #tpu.memory_space<vmem>>, vector<8x256xf32>,
    %c32_240 = arith.constant 32 : index
    %c0_241 = arith.constant 0 : index
    %262 = vector.load %arg6[%c32_240, %c0_241] : memref<72x256xf32, #tpu.memory_space<vmem>>, vector<8x256xf32>
    tpu.vector_store %arg6[%c32_240, %c0_241], %240 {strides = array<i32>} : memref<72x256xf32, #tpu.memory_space<vmem>>, vector<8x256xf32>,
    %c255_i32_242 = arith.constant 255 : i32
    %263 = tpu.dynamic_rotate %240 by %c255_i32_242 dim 1 : vector<8x256xf32>, i32 -> vector<8x256xf32>
    %c5_243 = arith.constant 5 : index
    %c0_244 = arith.constant 0 : index
    %264 = vector.load %arg3[%c5_243, %c0_244] : memref<9x256xf32, #tpu.memory_space<vmem>>, vector<1x256xf32>
    %265 = vector.broadcast %264 : vector<1x256xf32> to vector<8x256xf32>
    %266 = arith.mulf %263, %265 : vector<8x256xf32>
    %c40_245 = arith.constant 40 : index
    %c0_246 = arith.constant 0 : index
    %267 = vector.load %arg6[%c40_245, %c0_246] : memref<72x256xf32, #tpu.memory_space<vmem>>, vector<8x256xf32>
    tpu.vector_store %arg6[%c40_245, %c0_246], %266 {strides = array<i32>} : memref<72x256xf32, #tpu.memory_space<vmem>>, vector<8x256xf32>,
    %c241_i32_247 = arith.constant 241 : i32
    %268 = tpu.dynamic_rotate %240 by %c241_i32_247 dim 1 : vector<8x256xf32>, i32 -> vector<8x256xf32>
    %c6_248 = arith.constant 6 : index
    %c0_249 = arith.constant 0 : index
    %269 = vector.load %arg3[%c6_248, %c0_249] : memref<9x256xf32, #tpu.memory_space<vmem>>, vector<1x256xf32>
    %270 = vector.broadcast %269 : vector<1x256xf32> to vector<8x256xf32>
    %271 = arith.mulf %268, %270 : vector<8x256xf32>
    %c48_250 = arith.constant 48 : index
    %c0_251 = arith.constant 0 : index
    %272 = vector.load %arg6[%c48_250, %c0_251] : memref<72x256xf32, #tpu.memory_space<vmem>>, vector<8x256xf32>
    tpu.vector_store %arg6[%c48_250, %c0_251], %271 {strides = array<i32>} : memref<72x256xf32, #tpu.memory_space<vmem>>, vector<8x256xf32>,
    %c240_i32_252 = arith.constant 240 : i32
    %273 = tpu.dynamic_rotate %240 by %c240_i32_252 dim 1 : vector<8x256xf32>, i32 -> vector<8x256xf32>
    %c7_253 = arith.constant 7 : index
    %c0_254 = arith.constant 0 : index
    %274 = vector.load %arg3[%c7_253, %c0_254] : memref<9x256xf32, #tpu.memory_space<vmem>>, vector<1x256xf32>
    %275 = vector.broadcast %274 : vector<1x256xf32> to vector<8x256xf32>
    %276 = arith.mulf %273, %275 : vector<8x256xf32>
    %c56_255 = arith.constant 56 : index
    %c0_256 = arith.constant 0 : index
    %277 = vector.load %arg6[%c56_255, %c0_256] : memref<72x256xf32, #tpu.memory_space<vmem>>, vector<8x256xf32>
    tpu.vector_store %arg6[%c56_255, %c0_256], %276 {strides = array<i32>} : memref<72x256xf32, #tpu.memory_space<vmem>>, vector<8x256xf32>,
    %c239_i32_257 = arith.constant 239 : i32
    %278 = tpu.dynamic_rotate %240 by %c239_i32_257 dim 1 : vector<8x256xf32>, i32 -> vector<8x256xf32>
    %c8_258 = arith.constant 8 : index
    %c0_259 = arith.constant 0 : index
    %279 = vector.load %arg3[%c8_258, %c0_259] : memref<9x256xf32, #tpu.memory_space<vmem>>, vector<1x256xf32>
    %280 = vector.broadcast %279 : vector<1x256xf32> to vector<8x256xf32>
    %281 = arith.mulf %278, %280 : vector<8x256xf32>
    %c64_260 = arith.constant 64 : index
    %c0_261 = arith.constant 0 : index
    %282 = vector.load %arg6[%c64_260, %c0_261] : memref<72x256xf32, #tpu.memory_space<vmem>>, vector<8x256xf32>
    tpu.vector_store %arg6[%c64_260, %c0_261], %281 {strides = array<i32>} : memref<72x256xf32, #tpu.memory_space<vmem>>, vector<8x256xf32>,
    %c1_i32_262 = arith.constant 1 : i32
    %283 = arith.subi %c6_i32, %c1_i32_262 : i32
    %284 = arith.index_cast %283 : i32 to index
    %c0_263 = arith.constant 0 : index
    %c0_264 = arith.constant 0 : index
    %285 = vector.load %arg2[%284, %c0_263, %c0_264] : memref<10x8x72xf32, #tpu.memory_space<vmem>>, vector<1x8x72xf32>
    %286 = vector.shape_cast %285 : vector<1x8x72xf32> to vector<8x72xf32>
    %c0_265 = arith.constant 0 : index
    %c0_266 = arith.constant 0 : index
    %287 = vector.load %arg6[%c0_265, %c0_266] : memref<72x256xf32, #tpu.memory_space<vmem>>, vector<72x256xf32>
    %cst_267 = arith.constant dense<0.000000e+00> : vector<8x256xf32>
    %288 = tpu.matmul %286, %287, %cst_267 {dimension_numbers = #tpu.dot_dimension_numbers<[1], [0], [0], [1], [0, 0, 1, 1], [], []>} : vector<8x72xf32>, vector<72x256xf32>, vector<8x256xf32> -> vector<8x256xf32>
    %289 = arith.addf %241, %288 : vector<8x256xf32>
    %c7_i32 = arith.constant 7 : i32
    %c17_i32_268 = arith.constant 17 : i32
    %290 = tpu.dynamic_rotate %288 by %c17_i32_268 dim 1 : vector<8x256xf32>, i32 -> vector<8x256xf32>
    %c0_269 = arith.constant 0 : index
    %c0_270 = arith.constant 0 : index
    %291 = vector.load %arg3[%c0_269, %c0_270] : memref<9x256xf32, #tpu.memory_space<vmem>>, vector<1x256xf32>
    %292 = vector.broadcast %291 : vector<1x256xf32> to vector<8x256xf32>
    %293 = arith.mulf %290, %292 : vector<8x256xf32>
    %c0_271 = arith.constant 0 : index
    %c0_272 = arith.constant 0 : index
    %294 = vector.load %arg6[%c0_271, %c0_272] : memref<72x256xf32, #tpu.memory_space<vmem>>, vector<8x256xf32>
    tpu.vector_store %arg6[%c0_271, %c0_272], %293 {strides = array<i32>} : memref<72x256xf32, #tpu.memory_space<vmem>>, vector<8x256xf32>,
    %c16_i32_273 = arith.constant 16 : i32
    %295 = tpu.dynamic_rotate %288 by %c16_i32_273 dim 1 : vector<8x256xf32>, i32 -> vector<8x256xf32>
    %c1_274 = arith.constant 1 : index
    %c0_275 = arith.constant 0 : index
    %296 = vector.load %arg3[%c1_274, %c0_275] : memref<9x256xf32, #tpu.memory_space<vmem>>, vector<1x256xf32>
    %297 = vector.broadcast %296 : vector<1x256xf32> to vector<8x256xf32>
    %298 = arith.mulf %295, %297 : vector<8x256xf32>
    %c8_276 = arith.constant 8 : index
    %c0_277 = arith.constant 0 : index
    %299 = vector.load %arg6[%c8_276, %c0_277] : memref<72x256xf32, #tpu.memory_space<vmem>>, vector<8x256xf32>
    tpu.vector_store %arg6[%c8_276, %c0_277], %298 {strides = array<i32>} : memref<72x256xf32, #tpu.memory_space<vmem>>, vector<8x256xf32>,
    %c15_i32_278 = arith.constant 15 : i32
    %300 = tpu.dynamic_rotate %288 by %c15_i32_278 dim 1 : vector<8x256xf32>, i32 -> vector<8x256xf32>
    %c2_279 = arith.constant 2 : index
    %c0_280 = arith.constant 0 : index
    %301 = vector.load %arg3[%c2_279, %c0_280] : memref<9x256xf32, #tpu.memory_space<vmem>>, vector<1x256xf32>
    %302 = vector.broadcast %301 : vector<1x256xf32> to vector<8x256xf32>
    %303 = arith.mulf %300, %302 : vector<8x256xf32>
    %c16_281 = arith.constant 16 : index
    %c0_282 = arith.constant 0 : index
    %304 = vector.load %arg6[%c16_281, %c0_282] : memref<72x256xf32, #tpu.memory_space<vmem>>, vector<8x256xf32>
    tpu.vector_store %arg6[%c16_281, %c0_282], %303 {strides = array<i32>} : memref<72x256xf32, #tpu.memory_space<vmem>>, vector<8x256xf32>,
    %c1_i32_283 = arith.constant 1 : i32
    %305 = tpu.dynamic_rotate %288 by %c1_i32_283 dim 1 : vector<8x256xf32>, i32 -> vector<8x256xf32>
    %c3_284 = arith.constant 3 : index
    %c0_285 = arith.constant 0 : index
    %306 = vector.load %arg3[%c3_284, %c0_285] : memref<9x256xf32, #tpu.memory_space<vmem>>, vector<1x256xf32>
    %307 = vector.broadcast %306 : vector<1x256xf32> to vector<8x256xf32>
    %308 = arith.mulf %305, %307 : vector<8x256xf32>
    %c24_286 = arith.constant 24 : index
    %c0_287 = arith.constant 0 : index
    %309 = vector.load %arg6[%c24_286, %c0_287] : memref<72x256xf32, #tpu.memory_space<vmem>>, vector<8x256xf32>
    tpu.vector_store %arg6[%c24_286, %c0_287], %308 {strides = array<i32>} : memref<72x256xf32, #tpu.memory_space<vmem>>, vector<8x256xf32>,
    %c32_288 = arith.constant 32 : index
    %c0_289 = arith.constant 0 : index
    %310 = vector.load %arg6[%c32_288, %c0_289] : memref<72x256xf32, #tpu.memory_space<vmem>>, vector<8x256xf32>
    tpu.vector_store %arg6[%c32_288, %c0_289], %288 {strides = array<i32>} : memref<72x256xf32, #tpu.memory_space<vmem>>, vector<8x256xf32>,
    %c255_i32_290 = arith.constant 255 : i32
    %311 = tpu.dynamic_rotate %288 by %c255_i32_290 dim 1 : vector<8x256xf32>, i32 -> vector<8x256xf32>
    %c5_291 = arith.constant 5 : index
    %c0_292 = arith.constant 0 : index
    %312 = vector.load %arg3[%c5_291, %c0_292] : memref<9x256xf32, #tpu.memory_space<vmem>>, vector<1x256xf32>
    %313 = vector.broadcast %312 : vector<1x256xf32> to vector<8x256xf32>
    %314 = arith.mulf %311, %313 : vector<8x256xf32>
    %c40_293 = arith.constant 40 : index
    %c0_294 = arith.constant 0 : index
    %315 = vector.load %arg6[%c40_293, %c0_294] : memref<72x256xf32, #tpu.memory_space<vmem>>, vector<8x256xf32>
    tpu.vector_store %arg6[%c40_293, %c0_294], %314 {strides = array<i32>} : memref<72x256xf32, #tpu.memory_space<vmem>>, vector<8x256xf32>,
    %c241_i32_295 = arith.constant 241 : i32
    %316 = tpu.dynamic_rotate %288 by %c241_i32_295 dim 1 : vector<8x256xf32>, i32 -> vector<8x256xf32>
    %c6_296 = arith.constant 6 : index
    %c0_297 = arith.constant 0 : index
    %317 = vector.load %arg3[%c6_296, %c0_297] : memref<9x256xf32, #tpu.memory_space<vmem>>, vector<1x256xf32>
    %318 = vector.broadcast %317 : vector<1x256xf32> to vector<8x256xf32>
    %319 = arith.mulf %316, %318 : vector<8x256xf32>
    %c48_298 = arith.constant 48 : index
    %c0_299 = arith.constant 0 : index
    %320 = vector.load %arg6[%c48_298, %c0_299] : memref<72x256xf32, #tpu.memory_space<vmem>>, vector<8x256xf32>
    tpu.vector_store %arg6[%c48_298, %c0_299], %319 {strides = array<i32>} : memref<72x256xf32, #tpu.memory_space<vmem>>, vector<8x256xf32>,
    %c240_i32_300 = arith.constant 240 : i32
    %321 = tpu.dynamic_rotate %288 by %c240_i32_300 dim 1 : vector<8x256xf32>, i32 -> vector<8x256xf32>
    %c7_301 = arith.constant 7 : index
    %c0_302 = arith.constant 0 : index
    %322 = vector.load %arg3[%c7_301, %c0_302] : memref<9x256xf32, #tpu.memory_space<vmem>>, vector<1x256xf32>
    %323 = vector.broadcast %322 : vector<1x256xf32> to vector<8x256xf32>
    %324 = arith.mulf %321, %323 : vector<8x256xf32>
    %c56_303 = arith.constant 56 : index
    %c0_304 = arith.constant 0 : index
    %325 = vector.load %arg6[%c56_303, %c0_304] : memref<72x256xf32, #tpu.memory_space<vmem>>, vector<8x256xf32>
    tpu.vector_store %arg6[%c56_303, %c0_304], %324 {strides = array<i32>} : memref<72x256xf32, #tpu.memory_space<vmem>>, vector<8x256xf32>,
    %c239_i32_305 = arith.constant 239 : i32
    %326 = tpu.dynamic_rotate %288 by %c239_i32_305 dim 1 : vector<8x256xf32>, i32 -> vector<8x256xf32>
    %c8_306 = arith.constant 8 : index
    %c0_307 = arith.constant 0 : index
    %327 = vector.load %arg3[%c8_306, %c0_307] : memref<9x256xf32, #tpu.memory_space<vmem>>, vector<1x256xf32>
    %328 = vector.broadcast %327 : vector<1x256xf32> to vector<8x256xf32>
    %329 = arith.mulf %326, %328 : vector<8x256xf32>
    %c64_308 = arith.constant 64 : index
    %c0_309 = arith.constant 0 : index
    %330 = vector.load %arg6[%c64_308, %c0_309] : memref<72x256xf32, #tpu.memory_space<vmem>>, vector<8x256xf32>
    tpu.vector_store %arg6[%c64_308, %c0_309], %329 {strides = array<i32>} : memref<72x256xf32, #tpu.memory_space<vmem>>, vector<8x256xf32>,
    %c1_i32_310 = arith.constant 1 : i32
    %331 = arith.subi %c7_i32, %c1_i32_310 : i32
    %332 = arith.index_cast %331 : i32 to index
    %c0_311 = arith.constant 0 : index
    %c0_312 = arith.constant 0 : index
    %333 = vector.load %arg2[%332, %c0_311, %c0_312] : memref<10x8x72xf32, #tpu.memory_space<vmem>>, vector<1x8x72xf32>
    %334 = vector.shape_cast %333 : vector<1x8x72xf32> to vector<8x72xf32>
    %c0_313 = arith.constant 0 : index
    %c0_314 = arith.constant 0 : index
    %335 = vector.load %arg6[%c0_313, %c0_314] : memref<72x256xf32, #tpu.memory_space<vmem>>, vector<72x256xf32>
    %cst_315 = arith.constant dense<0.000000e+00> : vector<8x256xf32>
    %336 = tpu.matmul %334, %335, %cst_315 {dimension_numbers = #tpu.dot_dimension_numbers<[1], [0], [0], [1], [0, 0, 1, 1], [], []>} : vector<8x72xf32>, vector<72x256xf32>, vector<8x256xf32> -> vector<8x256xf32>
    %337 = arith.addf %289, %336 : vector<8x256xf32>
    %c8_i32 = arith.constant 8 : i32
    %c17_i32_316 = arith.constant 17 : i32
    %338 = tpu.dynamic_rotate %336 by %c17_i32_316 dim 1 : vector<8x256xf32>, i32 -> vector<8x256xf32>
    %c0_317 = arith.constant 0 : index
    %c0_318 = arith.constant 0 : index
    %339 = vector.load %arg3[%c0_317, %c0_318] : memref<9x256xf32, #tpu.memory_space<vmem>>, vector<1x256xf32>
    %340 = vector.broadcast %339 : vector<1x256xf32> to vector<8x256xf32>
    %341 = arith.mulf %338, %340 : vector<8x256xf32>
    %c0_319 = arith.constant 0 : index
    %c0_320 = arith.constant 0 : index
    %342 = vector.load %arg6[%c0_319, %c0_320] : memref<72x256xf32, #tpu.memory_space<vmem>>, vector<8x256xf32>
    tpu.vector_store %arg6[%c0_319, %c0_320], %341 {strides = array<i32>} : memref<72x256xf32, #tpu.memory_space<vmem>>, vector<8x256xf32>,
    %c16_i32_321 = arith.constant 16 : i32
    %343 = tpu.dynamic_rotate %336 by %c16_i32_321 dim 1 : vector<8x256xf32>, i32 -> vector<8x256xf32>
    %c1_322 = arith.constant 1 : index
    %c0_323 = arith.constant 0 : index
    %344 = vector.load %arg3[%c1_322, %c0_323] : memref<9x256xf32, #tpu.memory_space<vmem>>, vector<1x256xf32>
    %345 = vector.broadcast %344 : vector<1x256xf32> to vector<8x256xf32>
    %346 = arith.mulf %343, %345 : vector<8x256xf32>
    %c8_324 = arith.constant 8 : index
    %c0_325 = arith.constant 0 : index
    %347 = vector.load %arg6[%c8_324, %c0_325] : memref<72x256xf32, #tpu.memory_space<vmem>>, vector<8x256xf32>
    tpu.vector_store %arg6[%c8_324, %c0_325], %346 {strides = array<i32>} : memref<72x256xf32, #tpu.memory_space<vmem>>, vector<8x256xf32>,
    %c15_i32_326 = arith.constant 15 : i32
    %348 = tpu.dynamic_rotate %336 by %c15_i32_326 dim 1 : vector<8x256xf32>, i32 -> vector<8x256xf32>
    %c2_327 = arith.constant 2 : index
    %c0_328 = arith.constant 0 : index
    %349 = vector.load %arg3[%c2_327, %c0_328] : memref<9x256xf32, #tpu.memory_space<vmem>>, vector<1x256xf32>
    %350 = vector.broadcast %349 : vector<1x256xf32> to vector<8x256xf32>
    %351 = arith.mulf %348, %350 : vector<8x256xf32>
    %c16_329 = arith.constant 16 : index
    %c0_330 = arith.constant 0 : index
    %352 = vector.load %arg6[%c16_329, %c0_330] : memref<72x256xf32, #tpu.memory_space<vmem>>, vector<8x256xf32>
    tpu.vector_store %arg6[%c16_329, %c0_330], %351 {strides = array<i32>} : memref<72x256xf32, #tpu.memory_space<vmem>>, vector<8x256xf32>,
    %c1_i32_331 = arith.constant 1 : i32
    %353 = tpu.dynamic_rotate %336 by %c1_i32_331 dim 1 : vector<8x256xf32>, i32 -> vector<8x256xf32>
    %c3_332 = arith.constant 3 : index
    %c0_333 = arith.constant 0 : index
    %354 = vector.load %arg3[%c3_332, %c0_333] : memref<9x256xf32, #tpu.memory_space<vmem>>, vector<1x256xf32>
    %355 = vector.broadcast %354 : vector<1x256xf32> to vector<8x256xf32>
    %356 = arith.mulf %353, %355 : vector<8x256xf32>
    %c24_334 = arith.constant 24 : index
    %c0_335 = arith.constant 0 : index
    %357 = vector.load %arg6[%c24_334, %c0_335] : memref<72x256xf32, #tpu.memory_space<vmem>>, vector<8x256xf32>
    tpu.vector_store %arg6[%c24_334, %c0_335], %356 {strides = array<i32>} : memref<72x256xf32, #tpu.memory_space<vmem>>, vector<8x256xf32>,
    %c32_336 = arith.constant 32 : index
    %c0_337 = arith.constant 0 : index
    %358 = vector.load %arg6[%c32_336, %c0_337] : memref<72x256xf32, #tpu.memory_space<vmem>>, vector<8x256xf32>
    tpu.vector_store %arg6[%c32_336, %c0_337], %336 {strides = array<i32>} : memref<72x256xf32, #tpu.memory_space<vmem>>, vector<8x256xf32>,
    %c255_i32_338 = arith.constant 255 : i32
    %359 = tpu.dynamic_rotate %336 by %c255_i32_338 dim 1 : vector<8x256xf32>, i32 -> vector<8x256xf32>
    %c5_339 = arith.constant 5 : index
    %c0_340 = arith.constant 0 : index
    %360 = vector.load %arg3[%c5_339, %c0_340] : memref<9x256xf32, #tpu.memory_space<vmem>>, vector<1x256xf32>
    %361 = vector.broadcast %360 : vector<1x256xf32> to vector<8x256xf32>
    %362 = arith.mulf %359, %361 : vector<8x256xf32>
    %c40_341 = arith.constant 40 : index
    %c0_342 = arith.constant 0 : index
    %363 = vector.load %arg6[%c40_341, %c0_342] : memref<72x256xf32, #tpu.memory_space<vmem>>, vector<8x256xf32>
    tpu.vector_store %arg6[%c40_341, %c0_342], %362 {strides = array<i32>} : memref<72x256xf32, #tpu.memory_space<vmem>>, vector<8x256xf32>,
    %c241_i32_343 = arith.constant 241 : i32
    %364 = tpu.dynamic_rotate %336 by %c241_i32_343 dim 1 : vector<8x256xf32>, i32 -> vector<8x256xf32>
    %c6_344 = arith.constant 6 : index
    %c0_345 = arith.constant 0 : index
    %365 = vector.load %arg3[%c6_344, %c0_345] : memref<9x256xf32, #tpu.memory_space<vmem>>, vector<1x256xf32>
    %366 = vector.broadcast %365 : vector<1x256xf32> to vector<8x256xf32>
    %367 = arith.mulf %364, %366 : vector<8x256xf32>
    %c48_346 = arith.constant 48 : index
    %c0_347 = arith.constant 0 : index
    %368 = vector.load %arg6[%c48_346, %c0_347] : memref<72x256xf32, #tpu.memory_space<vmem>>, vector<8x256xf32>
    tpu.vector_store %arg6[%c48_346, %c0_347], %367 {strides = array<i32>} : memref<72x256xf32, #tpu.memory_space<vmem>>, vector<8x256xf32>,
    %c240_i32_348 = arith.constant 240 : i32
    %369 = tpu.dynamic_rotate %336 by %c240_i32_348 dim 1 : vector<8x256xf32>, i32 -> vector<8x256xf32>
    %c7_349 = arith.constant 7 : index
    %c0_350 = arith.constant 0 : index
    %370 = vector.load %arg3[%c7_349, %c0_350] : memref<9x256xf32, #tpu.memory_space<vmem>>, vector<1x256xf32>
    %371 = vector.broadcast %370 : vector<1x256xf32> to vector<8x256xf32>
    %372 = arith.mulf %369, %371 : vector<8x256xf32>
    %c56_351 = arith.constant 56 : index
    %c0_352 = arith.constant 0 : index
    %373 = vector.load %arg6[%c56_351, %c0_352] : memref<72x256xf32, #tpu.memory_space<vmem>>, vector<8x256xf32>
    tpu.vector_store %arg6[%c56_351, %c0_352], %372 {strides = array<i32>} : memref<72x256xf32, #tpu.memory_space<vmem>>, vector<8x256xf32>,
    %c239_i32_353 = arith.constant 239 : i32
    %374 = tpu.dynamic_rotate %336 by %c239_i32_353 dim 1 : vector<8x256xf32>, i32 -> vector<8x256xf32>
    %c8_354 = arith.constant 8 : index
    %c0_355 = arith.constant 0 : index
    %375 = vector.load %arg3[%c8_354, %c0_355] : memref<9x256xf32, #tpu.memory_space<vmem>>, vector<1x256xf32>
    %376 = vector.broadcast %375 : vector<1x256xf32> to vector<8x256xf32>
    %377 = arith.mulf %374, %376 : vector<8x256xf32>
    %c64_356 = arith.constant 64 : index
    %c0_357 = arith.constant 0 : index
    %378 = vector.load %arg6[%c64_356, %c0_357] : memref<72x256xf32, #tpu.memory_space<vmem>>, vector<8x256xf32>
    tpu.vector_store %arg6[%c64_356, %c0_357], %377 {strides = array<i32>} : memref<72x256xf32, #tpu.memory_space<vmem>>, vector<8x256xf32>,
    %c1_i32_358 = arith.constant 1 : i32
    %379 = arith.subi %c8_i32, %c1_i32_358 : i32
    %380 = arith.index_cast %379 : i32 to index
    %c0_359 = arith.constant 0 : index
    %c0_360 = arith.constant 0 : index
    %381 = vector.load %arg2[%380, %c0_359, %c0_360] : memref<10x8x72xf32, #tpu.memory_space<vmem>>, vector<1x8x72xf32>
    %382 = vector.shape_cast %381 : vector<1x8x72xf32> to vector<8x72xf32>
    %c0_361 = arith.constant 0 : index
    %c0_362 = arith.constant 0 : index
    %383 = vector.load %arg6[%c0_361, %c0_362] : memref<72x256xf32, #tpu.memory_space<vmem>>, vector<72x256xf32>
    %cst_363 = arith.constant dense<0.000000e+00> : vector<8x256xf32>
    %384 = tpu.matmul %382, %383, %cst_363 {dimension_numbers = #tpu.dot_dimension_numbers<[1], [0], [0], [1], [0, 0, 1, 1], [], []>} : vector<8x72xf32>, vector<72x256xf32>, vector<8x256xf32> -> vector<8x256xf32>
    %385 = arith.addf %337, %384 : vector<8x256xf32>
    %c9_i32 = arith.constant 9 : i32
    %c17_i32_364 = arith.constant 17 : i32
    %386 = tpu.dynamic_rotate %384 by %c17_i32_364 dim 1 : vector<8x256xf32>, i32 -> vector<8x256xf32>
    %c0_365 = arith.constant 0 : index
    %c0_366 = arith.constant 0 : index
    %387 = vector.load %arg3[%c0_365, %c0_366] : memref<9x256xf32, #tpu.memory_space<vmem>>, vector<1x256xf32>
    %388 = vector.broadcast %387 : vector<1x256xf32> to vector<8x256xf32>
    %389 = arith.mulf %386, %388 : vector<8x256xf32>
    %c0_367 = arith.constant 0 : index
    %c0_368 = arith.constant 0 : index
    %390 = vector.load %arg6[%c0_367, %c0_368] : memref<72x256xf32, #tpu.memory_space<vmem>>, vector<8x256xf32>
    tpu.vector_store %arg6[%c0_367, %c0_368], %389 {strides = array<i32>} : memref<72x256xf32, #tpu.memory_space<vmem>>, vector<8x256xf32>,
    %c16_i32_369 = arith.constant 16 : i32
    %391 = tpu.dynamic_rotate %384 by %c16_i32_369 dim 1 : vector<8x256xf32>, i32 -> vector<8x256xf32>
    %c1_370 = arith.constant 1 : index
    %c0_371 = arith.constant 0 : index
    %392 = vector.load %arg3[%c1_370, %c0_371] : memref<9x256xf32, #tpu.memory_space<vmem>>, vector<1x256xf32>
    %393 = vector.broadcast %392 : vector<1x256xf32> to vector<8x256xf32>
    %394 = arith.mulf %391, %393 : vector<8x256xf32>
    %c8_372 = arith.constant 8 : index
    %c0_373 = arith.constant 0 : index
    %395 = vector.load %arg6[%c8_372, %c0_373] : memref<72x256xf32, #tpu.memory_space<vmem>>, vector<8x256xf32>
    tpu.vector_store %arg6[%c8_372, %c0_373], %394 {strides = array<i32>} : memref<72x256xf32, #tpu.memory_space<vmem>>, vector<8x256xf32>,
    %c15_i32_374 = arith.constant 15 : i32
    %396 = tpu.dynamic_rotate %384 by %c15_i32_374 dim 1 : vector<8x256xf32>, i32 -> vector<8x256xf32>
    %c2_375 = arith.constant 2 : index
    %c0_376 = arith.constant 0 : index
    %397 = vector.load %arg3[%c2_375, %c0_376] : memref<9x256xf32, #tpu.memory_space<vmem>>, vector<1x256xf32>
    %398 = vector.broadcast %397 : vector<1x256xf32> to vector<8x256xf32>
    %399 = arith.mulf %396, %398 : vector<8x256xf32>
    %c16_377 = arith.constant 16 : index
    %c0_378 = arith.constant 0 : index
    %400 = vector.load %arg6[%c16_377, %c0_378] : memref<72x256xf32, #tpu.memory_space<vmem>>, vector<8x256xf32>
    tpu.vector_store %arg6[%c16_377, %c0_378], %399 {strides = array<i32>} : memref<72x256xf32, #tpu.memory_space<vmem>>, vector<8x256xf32>,
    %c1_i32_379 = arith.constant 1 : i32
    %401 = tpu.dynamic_rotate %384 by %c1_i32_379 dim 1 : vector<8x256xf32>, i32 -> vector<8x256xf32>
    %c3_380 = arith.constant 3 : index
    %c0_381 = arith.constant 0 : index
    %402 = vector.load %arg3[%c3_380, %c0_381] : memref<9x256xf32, #tpu.memory_space<vmem>>, vector<1x256xf32>
    %403 = vector.broadcast %402 : vector<1x256xf32> to vector<8x256xf32>
    %404 = arith.mulf %401, %403 : vector<8x256xf32>
    %c24_382 = arith.constant 24 : index
    %c0_383 = arith.constant 0 : index
    %405 = vector.load %arg6[%c24_382, %c0_383] : memref<72x256xf32, #tpu.memory_space<vmem>>, vector<8x256xf32>
    tpu.vector_store %arg6[%c24_382, %c0_383], %404 {strides = array<i32>} : memref<72x256xf32, #tpu.memory_space<vmem>>, vector<8x256xf32>,
    %c32_384 = arith.constant 32 : index
    %c0_385 = arith.constant 0 : index
    %406 = vector.load %arg6[%c32_384, %c0_385] : memref<72x256xf32, #tpu.memory_space<vmem>>, vector<8x256xf32>
    tpu.vector_store %arg6[%c32_384, %c0_385], %384 {strides = array<i32>} : memref<72x256xf32, #tpu.memory_space<vmem>>, vector<8x256xf32>,
    %c255_i32_386 = arith.constant 255 : i32
    %407 = tpu.dynamic_rotate %384 by %c255_i32_386 dim 1 : vector<8x256xf32>, i32 -> vector<8x256xf32>
    %c5_387 = arith.constant 5 : index
    %c0_388 = arith.constant 0 : index
    %408 = vector.load %arg3[%c5_387, %c0_388] : memref<9x256xf32, #tpu.memory_space<vmem>>, vector<1x256xf32>
    %409 = vector.broadcast %408 : vector<1x256xf32> to vector<8x256xf32>
    %410 = arith.mulf %407, %409 : vector<8x256xf32>
    %c40_389 = arith.constant 40 : index
    %c0_390 = arith.constant 0 : index
    %411 = vector.load %arg6[%c40_389, %c0_390] : memref<72x256xf32, #tpu.memory_space<vmem>>, vector<8x256xf32>
    tpu.vector_store %arg6[%c40_389, %c0_390], %410 {strides = array<i32>} : memref<72x256xf32, #tpu.memory_space<vmem>>, vector<8x256xf32>,
    %c241_i32_391 = arith.constant 241 : i32
    %412 = tpu.dynamic_rotate %384 by %c241_i32_391 dim 1 : vector<8x256xf32>, i32 -> vector<8x256xf32>
    %c6_392 = arith.constant 6 : index
    %c0_393 = arith.constant 0 : index
    %413 = vector.load %arg3[%c6_392, %c0_393] : memref<9x256xf32, #tpu.memory_space<vmem>>, vector<1x256xf32>
    %414 = vector.broadcast %413 : vector<1x256xf32> to vector<8x256xf32>
    %415 = arith.mulf %412, %414 : vector<8x256xf32>
    %c48_394 = arith.constant 48 : index
    %c0_395 = arith.constant 0 : index
    %416 = vector.load %arg6[%c48_394, %c0_395] : memref<72x256xf32, #tpu.memory_space<vmem>>, vector<8x256xf32>
    tpu.vector_store %arg6[%c48_394, %c0_395], %415 {strides = array<i32>} : memref<72x256xf32, #tpu.memory_space<vmem>>, vector<8x256xf32>,
    %c240_i32_396 = arith.constant 240 : i32
    %417 = tpu.dynamic_rotate %384 by %c240_i32_396 dim 1 : vector<8x256xf32>, i32 -> vector<8x256xf32>
    %c7_397 = arith.constant 7 : index
    %c0_398 = arith.constant 0 : index
    %418 = vector.load %arg3[%c7_397, %c0_398] : memref<9x256xf32, #tpu.memory_space<vmem>>, vector<1x256xf32>
    %419 = vector.broadcast %418 : vector<1x256xf32> to vector<8x256xf32>
    %420 = arith.mulf %417, %419 : vector<8x256xf32>
    %c56_399 = arith.constant 56 : index
    %c0_400 = arith.constant 0 : index
    %421 = vector.load %arg6[%c56_399, %c0_400] : memref<72x256xf32, #tpu.memory_space<vmem>>, vector<8x256xf32>
    tpu.vector_store %arg6[%c56_399, %c0_400], %420 {strides = array<i32>} : memref<72x256xf32, #tpu.memory_space<vmem>>, vector<8x256xf32>,
    %c239_i32_401 = arith.constant 239 : i32
    %422 = tpu.dynamic_rotate %384 by %c239_i32_401 dim 1 : vector<8x256xf32>, i32 -> vector<8x256xf32>
    %c8_402 = arith.constant 8 : index
    %c0_403 = arith.constant 0 : index
    %423 = vector.load %arg3[%c8_402, %c0_403] : memref<9x256xf32, #tpu.memory_space<vmem>>, vector<1x256xf32>
    %424 = vector.broadcast %423 : vector<1x256xf32> to vector<8x256xf32>
    %425 = arith.mulf %422, %424 : vector<8x256xf32>
    %c64_404 = arith.constant 64 : index
    %c0_405 = arith.constant 0 : index
    %426 = vector.load %arg6[%c64_404, %c0_405] : memref<72x256xf32, #tpu.memory_space<vmem>>, vector<8x256xf32>
    tpu.vector_store %arg6[%c64_404, %c0_405], %425 {strides = array<i32>} : memref<72x256xf32, #tpu.memory_space<vmem>>, vector<8x256xf32>,
    %c1_i32_406 = arith.constant 1 : i32
    %427 = arith.subi %c9_i32, %c1_i32_406 : i32
    %428 = arith.index_cast %427 : i32 to index
    %c0_407 = arith.constant 0 : index
    %c0_408 = arith.constant 0 : index
    %429 = vector.load %arg2[%428, %c0_407, %c0_408] : memref<10x8x72xf32, #tpu.memory_space<vmem>>, vector<1x8x72xf32>
    %430 = vector.shape_cast %429 : vector<1x8x72xf32> to vector<8x72xf32>
    %c0_409 = arith.constant 0 : index
    %c0_410 = arith.constant 0 : index
    %431 = vector.load %arg6[%c0_409, %c0_410] : memref<72x256xf32, #tpu.memory_space<vmem>>, vector<72x256xf32>
    %cst_411 = arith.constant dense<0.000000e+00> : vector<8x256xf32>
    %432 = tpu.matmul %430, %431, %cst_411 {dimension_numbers = #tpu.dot_dimension_numbers<[1], [0], [0], [1], [0, 0, 1, 1], [], []>} : vector<8x72xf32>, vector<72x256xf32>, vector<8x256xf32> -> vector<8x256xf32>
    %433 = arith.addf %385, %432 : vector<8x256xf32>
    %c10_i32 = arith.constant 10 : i32
    %c17_i32_412 = arith.constant 17 : i32
    %434 = tpu.dynamic_rotate %432 by %c17_i32_412 dim 1 : vector<8x256xf32>, i32 -> vector<8x256xf32>
    %c0_413 = arith.constant 0 : index
    %c0_414 = arith.constant 0 : index
    %435 = vector.load %arg3[%c0_413, %c0_414] : memref<9x256xf32, #tpu.memory_space<vmem>>, vector<1x256xf32>
    %436 = vector.broadcast %435 : vector<1x256xf32> to vector<8x256xf32>
    %437 = arith.mulf %434, %436 : vector<8x256xf32>
    %c0_415 = arith.constant 0 : index
    %c0_416 = arith.constant 0 : index
    %438 = vector.load %arg6[%c0_415, %c0_416] : memref<72x256xf32, #tpu.memory_space<vmem>>, vector<8x256xf32>
    tpu.vector_store %arg6[%c0_415, %c0_416], %437 {strides = array<i32>} : memref<72x256xf32, #tpu.memory_space<vmem>>, vector<8x256xf32>,
    %c16_i32_417 = arith.constant 16 : i32
    %439 = tpu.dynamic_rotate %432 by %c16_i32_417 dim 1 : vector<8x256xf32>, i32 -> vector<8x256xf32>
    %c1_418 = arith.constant 1 : index
    %c0_419 = arith.constant 0 : index
    %440 = vector.load %arg3[%c1_418, %c0_419] : memref<9x256xf32, #tpu.memory_space<vmem>>, vector<1x256xf32>
    %441 = vector.broadcast %440 : vector<1x256xf32> to vector<8x256xf32>
    %442 = arith.mulf %439, %441 : vector<8x256xf32>
    %c8_420 = arith.constant 8 : index
    %c0_421 = arith.constant 0 : index
    %443 = vector.load %arg6[%c8_420, %c0_421] : memref<72x256xf32, #tpu.memory_space<vmem>>, vector<8x256xf32>
    tpu.vector_store %arg6[%c8_420, %c0_421], %442 {strides = array<i32>} : memref<72x256xf32, #tpu.memory_space<vmem>>, vector<8x256xf32>,
    %c15_i32_422 = arith.constant 15 : i32
    %444 = tpu.dynamic_rotate %432 by %c15_i32_422 dim 1 : vector<8x256xf32>, i32 -> vector<8x256xf32>
    %c2_423 = arith.constant 2 : index
    %c0_424 = arith.constant 0 : index
    %445 = vector.load %arg3[%c2_423, %c0_424] : memref<9x256xf32, #tpu.memory_space<vmem>>, vector<1x256xf32>
    %446 = vector.broadcast %445 : vector<1x256xf32> to vector<8x256xf32>
    %447 = arith.mulf %444, %446 : vector<8x256xf32>
    %c16_425 = arith.constant 16 : index
    %c0_426 = arith.constant 0 : index
    %448 = vector.load %arg6[%c16_425, %c0_426] : memref<72x256xf32, #tpu.memory_space<vmem>>, vector<8x256xf32>
    tpu.vector_store %arg6[%c16_425, %c0_426], %447 {strides = array<i32>} : memref<72x256xf32, #tpu.memory_space<vmem>>, vector<8x256xf32>,
    %c1_i32_427 = arith.constant 1 : i32
    %449 = tpu.dynamic_rotate %432 by %c1_i32_427 dim 1 : vector<8x256xf32>, i32 -> vector<8x256xf32>
    %c3_428 = arith.constant 3 : index
    %c0_429 = arith.constant 0 : index
    %450 = vector.load %arg3[%c3_428, %c0_429] : memref<9x256xf32, #tpu.memory_space<vmem>>, vector<1x256xf32>
    %451 = vector.broadcast %450 : vector<1x256xf32> to vector<8x256xf32>
    %452 = arith.mulf %449, %451 : vector<8x256xf32>
    %c24_430 = arith.constant 24 : index
    %c0_431 = arith.constant 0 : index
    %453 = vector.load %arg6[%c24_430, %c0_431] : memref<72x256xf32, #tpu.memory_space<vmem>>, vector<8x256xf32>
    tpu.vector_store %arg6[%c24_430, %c0_431], %452 {strides = array<i32>} : memref<72x256xf32, #tpu.memory_space<vmem>>, vector<8x256xf32>,
    %c32_432 = arith.constant 32 : index
    %c0_433 = arith.constant 0 : index
    %454 = vector.load %arg6[%c32_432, %c0_433] : memref<72x256xf32, #tpu.memory_space<vmem>>, vector<8x256xf32>
    tpu.vector_store %arg6[%c32_432, %c0_433], %432 {strides = array<i32>} : memref<72x256xf32, #tpu.memory_space<vmem>>, vector<8x256xf32>,
    %c255_i32_434 = arith.constant 255 : i32
    %455 = tpu.dynamic_rotate %432 by %c255_i32_434 dim 1 : vector<8x256xf32>, i32 -> vector<8x256xf32>
    %c5_435 = arith.constant 5 : index
    %c0_436 = arith.constant 0 : index
    %456 = vector.load %arg3[%c5_435, %c0_436] : memref<9x256xf32, #tpu.memory_space<vmem>>, vector<1x256xf32>
    %457 = vector.broadcast %456 : vector<1x256xf32> to vector<8x256xf32>
    %458 = arith.mulf %455, %457 : vector<8x256xf32>
    %c40_437 = arith.constant 40 : index
    %c0_438 = arith.constant 0 : index
    %459 = vector.load %arg6[%c40_437, %c0_438] : memref<72x256xf32, #tpu.memory_space<vmem>>, vector<8x256xf32>
    tpu.vector_store %arg6[%c40_437, %c0_438], %458 {strides = array<i32>} : memref<72x256xf32, #tpu.memory_space<vmem>>, vector<8x256xf32>,
    %c241_i32_439 = arith.constant 241 : i32
    %460 = tpu.dynamic_rotate %432 by %c241_i32_439 dim 1 : vector<8x256xf32>, i32 -> vector<8x256xf32>
    %c6_440 = arith.constant 6 : index
    %c0_441 = arith.constant 0 : index
    %461 = vector.load %arg3[%c6_440, %c0_441] : memref<9x256xf32, #tpu.memory_space<vmem>>, vector<1x256xf32>
    %462 = vector.broadcast %461 : vector<1x256xf32> to vector<8x256xf32>
    %463 = arith.mulf %460, %462 : vector<8x256xf32>
    %c48_442 = arith.constant 48 : index
    %c0_443 = arith.constant 0 : index
    %464 = vector.load %arg6[%c48_442, %c0_443] : memref<72x256xf32, #tpu.memory_space<vmem>>, vector<8x256xf32>
    tpu.vector_store %arg6[%c48_442, %c0_443], %463 {strides = array<i32>} : memref<72x256xf32, #tpu.memory_space<vmem>>, vector<8x256xf32>,
    %c240_i32_444 = arith.constant 240 : i32
    %465 = tpu.dynamic_rotate %432 by %c240_i32_444 dim 1 : vector<8x256xf32>, i32 -> vector<8x256xf32>
    %c7_445 = arith.constant 7 : index
    %c0_446 = arith.constant 0 : index
    %466 = vector.load %arg3[%c7_445, %c0_446] : memref<9x256xf32, #tpu.memory_space<vmem>>, vector<1x256xf32>
    %467 = vector.broadcast %466 : vector<1x256xf32> to vector<8x256xf32>
    %468 = arith.mulf %465, %467 : vector<8x256xf32>
    %c56_447 = arith.constant 56 : index
    %c0_448 = arith.constant 0 : index
    %469 = vector.load %arg6[%c56_447, %c0_448] : memref<72x256xf32, #tpu.memory_space<vmem>>, vector<8x256xf32>
    tpu.vector_store %arg6[%c56_447, %c0_448], %468 {strides = array<i32>} : memref<72x256xf32, #tpu.memory_space<vmem>>, vector<8x256xf32>,
    %c239_i32_449 = arith.constant 239 : i32
    %470 = tpu.dynamic_rotate %432 by %c239_i32_449 dim 1 : vector<8x256xf32>, i32 -> vector<8x256xf32>
    %c8_450 = arith.constant 8 : index
    %c0_451 = arith.constant 0 : index
    %471 = vector.load %arg3[%c8_450, %c0_451] : memref<9x256xf32, #tpu.memory_space<vmem>>, vector<1x256xf32>
    %472 = vector.broadcast %471 : vector<1x256xf32> to vector<8x256xf32>
    %473 = arith.mulf %470, %472 : vector<8x256xf32>
    %c64_452 = arith.constant 64 : index
    %c0_453 = arith.constant 0 : index
    %474 = vector.load %arg6[%c64_452, %c0_453] : memref<72x256xf32, #tpu.memory_space<vmem>>, vector<8x256xf32>
    tpu.vector_store %arg6[%c64_452, %c0_453], %473 {strides = array<i32>} : memref<72x256xf32, #tpu.memory_space<vmem>>, vector<8x256xf32>,
    %c1_i32_454 = arith.constant 1 : i32
    %475 = arith.subi %c10_i32, %c1_i32_454 : i32
    %476 = arith.index_cast %475 : i32 to index
    %c0_455 = arith.constant 0 : index
    %c0_456 = arith.constant 0 : index
    %477 = vector.load %arg2[%476, %c0_455, %c0_456] : memref<10x8x72xf32, #tpu.memory_space<vmem>>, vector<1x8x72xf32>
    %478 = vector.shape_cast %477 : vector<1x8x72xf32> to vector<8x72xf32>
    %c0_457 = arith.constant 0 : index
    %c0_458 = arith.constant 0 : index
    %479 = vector.load %arg6[%c0_457, %c0_458] : memref<72x256xf32, #tpu.memory_space<vmem>>, vector<72x256xf32>
    %cst_459 = arith.constant dense<0.000000e+00> : vector<8x256xf32>
    %480 = tpu.matmul %478, %479, %cst_459 {dimension_numbers = #tpu.dot_dimension_numbers<[1], [0], [0], [1], [0, 0, 1, 1], [], []>} : vector<8x72xf32>, vector<72x256xf32>, vector<8x256xf32> -> vector<8x256xf32>
    %481 = arith.addf %433, %480 : vector<8x256xf32>
    %c10_i32_460 = arith.constant 10 : i32
    %c0_461 = arith.constant 0 : index
    %c0_462 = arith.constant 0 : index
    %482 = vector.load %arg4[%c0_461, %c0_462] : memref<8x1xf32, #tpu.memory_space<vmem>>, vector<8x1xf32>
    %483 = vector.broadcast %482 : vector<8x1xf32> to vector<8x256xf32>
    %484 = arith.addf %481, %483 : vector<8x256xf32>
    %c0_463 = arith.constant 0 : index
    %c0_464 = arith.constant 0 : index
    %c0_465 = arith.constant 0 : index
    %485 = vector.load %arg5[%c0_463, %c0_464, %c0_465] : memref<1x8x256xf32, #tpu.memory_space<vmem>>, vector<1x8x256xf32>
    %486 = vector.shape_cast %485 : vector<1x8x256xf32> to vector<8x256xf32>
    %487 = vector.shape_cast %484 : vector<8x256xf32> to vector<1x8x256xf32>
    tpu.vector_store %arg5[%c0_463, %c0_464, %c0_465], %487 {strides = array<i32>} : memref<1x8x256xf32, #tpu.memory_space<vmem>>, vector<1x8x256xf32>,
    return
  }
  func.func @transform_0(%arg0: i32) -> (i32, i32, i32) {
    %c0_i32 = arith.constant 0 : i32
    %c0_i32_0 = arith.constant 0 : i32
    %c0_i32_1 = arith.constant 0 : i32
    return %arg0, %c0_i32, %c0_i32_0 : i32, i32, i32
  }
  func.func @transform_1(%arg0: i32) -> (i32, i32, i32) {
    %c0_i32 = arith.constant 0 : i32
    %c0_i32_0 = arith.constant 0 : i32
    %c0_i32_1 = arith.constant 0 : i32
    %c0_i32_2 = arith.constant 0 : i32
    return %c0_i32, %c0_i32_0, %c0_i32_1 : i32, i32, i32
  }
  func.func @transform_2(%arg0: i32) -> (i32, i32) {
    %c0_i32 = arith.constant 0 : i32
    %c0_i32_0 = arith.constant 0 : i32
    %c0_i32_1 = arith.constant 0 : i32
    return %c0_i32, %c0_i32_0 : i32, i32
  }
  func.func @transform_3(%arg0: i32) -> (i32, i32) {
    %c0_i32 = arith.constant 0 : i32
    %c0_i32_0 = arith.constant 0 : i32
    %c0_i32_1 = arith.constant 0 : i32
    return %c0_i32, %c0_i32_0 : i32, i32
  }
  func.func @transform_4(%arg0: i32) -> (i32, i32, i32) {
    %c0_i32 = arith.constant 0 : i32
    %c0_i32_0 = arith.constant 0 : i32
    %c0_i32_1 = arith.constant 0 : i32
    return %arg0, %c0_i32, %c0_i32_0 : i32, i32, i32
  }
}

</mosaic_0001>

<llo_original>
// kernel: tpu_custom_call.1
$region0: #{tpu_custom_call.1}
  #allocation0 [shape = 'u32[]', space=smem, size = 0x4, offset = 0x4, fixed_abs, tag = 'smem constant byte address 0x4 - core index']
  #allocation1 [shape = 'u32[144,128]{1,0:T(1,128)}', space=vmem, size = 0x12000, scoped, tag = 'internal scratch']
  #allocation2 [shape = 'f32[72,256]{1,0:T(8,128)}', space=vmem, size = 0x12000, scoped, tag = 'scratch operand']
  %s0 = inlined_call_operand.hbm [shape: f32[2,8,256], index: 0, kind: input, shape index: {}]
  %s1 = inlined_call_operand.hbm [shape: f32[10,8,72], index: 1, kind: input, shape index: {}]
  %s2 = inlined_call_operand.hbm [shape: f32[9,256], index: 2, kind: input, shape index: {}]
  %s3 = inlined_call_operand.vmem [shape: f32[8,1], index: 3, kind: input, shape index: {}]
  %s4 = inlined_call_operand.hbm [shape: f32[2,8,256], index: 4, kind: output, shape index: {}]
  %s5 = sld [smem:[#allocation0]]
  $region61: #{tpu_custom_call.1} parent=0
    _
  %s7 = ssub.s32 1, %s5
  %s8 = scalar_select 0, %s7, %s5
  $region1: #{tpu_custom_call.1} parent=0
    #allocation3 [shape = 'u8[16384]{0}', space=vmem, size = 0x4000, scoped, tag = 'input window, operand 0']
    #allocation4 [shape = 's32[2]{0}', space=sflag, size = 0x8, scoped, tag = 'scoped memory for tpu_custom_call.1']
    #allocation5 [shape = 's32[2]{0}', space=sflag, size = 0x8, scoped, tag = 'scoped memory for tpu_custom_call.1']
    #allocation6 [shape = 'u8[40960]{0}', space=vmem, size = 0xa000, scoped, tag = 'input window, operand 1, single buffered']
    #allocation7 [shape = 's32[1]{0}', space=sflag, size = 0x4, scoped, tag = 'scoped memory for tpu_custom_call.1']
    #allocation8 [shape = 'u8[16384]{0}', space=vmem, size = 0x4000, scoped, tag = 'input window, operand 2, single buffered']
    #allocation9 [shape = 'u8[16384]{0}', space=vmem, size = 0x4000, scoped, tag = 'output window, operand 0']
    %9 = vsyncpa [#allocation4], 0
    %s10 = scalar_lea.sflag [#allocation4], 1
    %11 = vsyncpa %s10, 0
    %12 = vsyncpa [#allocation7], 0
    %13 = vsyncpa [#allocation5], 0
    %s14 = scalar_lea.sflag [#allocation5], 1
    %15 = vsyncpa %s14, 0
    loop: start=0, step=1, limit=4
    $region2: #{tpu_custom_call.1} parent=1 // loop_pre_header
      _
    $region3: #{tpu_custom_call.1} parent=1 // loop_header
      %s17 = sphi 0, %s21
      %p18 = scmp.ge.s32.totalorder %s17, 4
      %s27 = sphi 0, %s29
      %s30 = sphi 0, %s27
      %s31 = sphi 0, %s30
      %s47 = sphi 0, %s31
      %s51 = sphi 0, %s51
      %s53 = sphi 0, %s51
      %s54 = sphi 0, %s53
      %s68 = sphi 0, %s54
      %s72 = sphi 0, %s72
      %s74 = sphi 0, %s72
      %s75 = sphi 0, %s74
      %s89 = sphi 0, %s75
      %s93 = sphi 0, %s93
      %s95 = sphi 0, %s93
      %s96 = sphi 0, %s95
      %s110 = sphi 0, %s96
      %s116 = sphi 0, %s118
      %s119 = sphi 0, %s116
      %s120 = sphi 0, %s119
      %s136 = sphi 0, %s120
    $region4: #{tpu_custom_call.1} parent=1 // loop_header_branch
      %20 = sbr.rel (%p18) target = $region8
    $region5: #{tpu_custom_call.1} parent=1 // loop_body
      %s22 = ssub.s32 %s17, 1
      %s23 = ssub.s32 %s17, 2
      %s24 = sadd.s32 %s17, 1
      %s25 = ssub.s32 %s17, %s24
      %p26 = scmp.eq.s32.totalorder %s25, 0
      %s28 = sadd.s32 %s27, 1
      %s29 = scalar_select %p26, %s27, %s28
      %p32 = pneg %p26
      %p33 = scmp.eq.s32.totalorder %s17, 1
      %p34 = por %p32, %p33
      %p35 = scmp.ne.s32.totalorder %s27, %s30
      %p36 = scmp.eq.s32.totalorder %s17, 0
      %p37 = por %p35, %p36
      %p38 = scmp.ne.s32.totalorder %s27, %s30
      %p39 = scmp.eq.s32.totalorder %s22, 1
      %p40 = por %p38, %p39
      %p41 = scmp.ne.s32.totalorder %s30, %s31
      %p42 = scmp.eq.s32.totalorder %s22, 0
      %p43 = por %p41, %p42
      %p44 = scmp.ne.s32.totalorder %s30, %s31
      %p45 = scmp.eq.s32.totalorder %s23, 1
      %p46 = por %p44, %p45
      %p48 = scmp.ne.s32.totalorder %s31, %s47
      %p49 = scmp.eq.s32.totalorder %s23, 0
      %p50 = por %p48, %p49
      %s52 = sadd.s32 %s51, 1
      %p55 = scmp.eq.s32.totalorder %s17, 1
      %p56 = scmp.ne.s32.totalorder %s51, %s53
      %p57 = scmp.eq.s32.totalorder %s17, 0
      %p58 = por %p56, %p57
      %p59 = scmp.ne.s32.totalorder %s51, %s53
      %p60 = scmp.eq.s32.totalorder %s22, 1
      %p61 = por %p59, %p60
      %p62 = scmp.ne.s32.totalorder %s53, %s54
      %p63 = scmp.eq.s32.totalorder %s22, 0
      %p64 = por %p62, %p63
      %p65 = scmp.ne.s32.totalorder %s53, %s54
      %p66 = scmp.eq.s32.totalorder %s23, 1
      %p67 = por %p65, %p66
      %p69 = scmp.ne.s32.totalorder %s54, %s68
      %p70 = scmp.eq.s32.totalorder %s23, 0
      %p71 = por %p69, %p70
      %s73 = sadd.s32 %s72, 1
      %p76 = scmp.eq.s32.totalorder %s17, 1
      %p77 = scmp.ne.s32.totalorder %s72, %s74
      %p78 = scmp.eq.s32.totalorder %s17, 0
      %p79 = por %p77, %p78
      %p80 = scmp.ne.s32.totalorder %s72, %s74
      %p81 = scmp.eq.s32.totalorder %s22, 1
      %p82 = por %p80, %p81
      %p83 = scmp.ne.s32.totalorder %s74, %s75
      %p84 = scmp.eq.s32.totalorder %s22, 0
      %p85 = por %p83, %p84
      %p86 = scmp.ne.s32.totalorder %s74, %s75
      %p87 = scmp.eq.s32.totalorder %s23, 1
      %p88 = por %p86, %p87
      %p90 = scmp.ne.s32.totalorder %s75, %s89
      %p91 = scmp.eq.s32.totalorder %s23, 0
      %p92 = por %p90, %p91
      %s94 = sadd.s32 %s93, 1
      %p97 = scmp.eq.s32.totalorder %s17, 1
      %p98 = scmp.ne.s32.totalorder %s93, %s95
      %p99 = scmp.eq.s32.totalorder %s17, 0
      %p100 = por %p98, %p99
      %p101 = scmp.ne.s32.totalorder %s93, %s95
      %p102 = scmp.eq.s32.totalorder %s22, 1
      %p103 = por %p101, %p102
      %p104 = scmp.ne.s32.totalorder %s95, %s96
      %p105 = scmp.eq.s32.totalorder %s22, 0
      %p106 = por %p104, %p105
      %p107 = scmp.ne.s32.totalorder %s95, %s96
      %p108 = scmp.eq.s32.totalorder %s23, 1
      %p109 = por %p107, %p108
      %p111 = scmp.ne.s32.totalorder %s96, %s110
      %p112 = scmp.eq.s32.totalorder %s23, 0
      %p113 = por %p111, %p112
      %s114 = ssub.s32 %s17, %s24
      %p115 = scmp.eq.s32.totalorder %s114, 0
      %s117 = sadd.s32 %s116, 1
      %s118 = scalar_select %p115, %s116, %s117
      %p121 = pneg %p115
      %p122 = scmp.eq.s32.totalorder %s17, 1
      %p123 = por %p121, %p122
      %p124 = scmp.ne.s32.totalorder %s116, %s119
      %p125 = scmp.eq.s32.totalorder %s17, 0
      %p126 = por %p124, %p125
      %p127 = scmp.ne.s32.totalorder %s116, %s119
      %p128 = scmp.eq.s32.totalorder %s22, 1
      %p129 = por %p127, %p128
      %p130 = scmp.ne.s32.totalorder %s119, %s120
      %p131 = scmp.eq.s32.totalorder %s22, 0
      %p132 = por %p130, %p131
      %p133 = scmp.ne.s32.totalorder %s119, %s120
      %p134 = scmp.eq.s32.totalorder %s23, 1
      %p135 = por %p133, %p134
      %p137 = scmp.ne.s32.totalorder %s120, %s136
      %p138 = scmp.eq.s32.totalorder %s23, 0
      %p139 = por %p137, %p138
      %p140 = scmp.le.s32.totalorder 1, %s17
      %p141 = scmp.lt.s32.totalorder %s17, 3
      %p142 = pnand %p140, %p141
      %p143 = pneg %p142
      // Predicated region
      $region9: #{tpu_custom_call.1} parent=5 // pred_check
        _
      $region10: #{tpu_custom_call.1} parent=5 // pred_check_branch
        %145 = sbr.rel (%p142) target = $region12
      $region11: #{tpu_custom_call.1} parent=5 // pred_region
        %s146 = ssub.s32 %s17, 1
        // Predicated region
        $region13: #{tpu_custom_call.1} parent=11 // pred_check
          %p147 = pneg %p64
        $region14: #{tpu_custom_call.1} parent=11 // pred_check_branch
          %149 = sbr.rel (%p147) target = $region16
        $region15: #{tpu_custom_call.1} parent=11 // pred_region
          %s151 = ssub.s32 1280, 1280
          %152 = vsyncadd [#allocation7], %s151
          %s153 = sshll.u32 [#allocation6], 4
          %s154 = int_to_ptr.vmem [resolvable:$true] %s153
          %159 = dma.hbm_to_vmem [thread:$0]  %s1, 1280, %s154, [#allocation7], 128, 128, 8
        $region16: #{tpu_custom_call.1} parent=11 // pred_fallthru
          _
        // Predicated region
        $region17: #{tpu_custom_call.1} parent=11 // pred_check
          %p160 = pneg %p85
        $region18: #{tpu_custom_call.1} parent=11 // pred_check_branch
          %162 = sbr.rel (%p160) target = $region20
        $region19: #{tpu_custom_call.1} parent=11 // pred_region
          %s164 = ssub.s32 512, 512
          %165 = vsyncadd [#allocation7], %s164
          %s166 = sshll.u32 [#allocation8], 4
          %s167 = int_to_ptr.vmem [resolvable:$true] %s166
          %172 = dma.hbm_to_vmem [thread:$0]  %s2, 512, %s167, [#allocation7], 256, 256, 16
        $region20: #{tpu_custom_call.1} parent=11 // pred_fallthru
          _
        // Predicated region
        $region21: #{tpu_custom_call.1} parent=11 // pred_check
          %p173 = pneg %p106
        $region22: #{tpu_custom_call.1} parent=11 // pred_check_branch
          %175 = sbr.rel (%p173) target = $region24
        $region23: #{tpu_custom_call.1} parent=11 // pred_region
          _
        $region24: #{tpu_custom_call.1} parent=11 // pred_fallthru
          _
      $region12: #{tpu_custom_call.1} parent=5 // pred_fallthru
        _
      %p176 = scmp.lt.s32.totalorder %s17, 2
      // Predicated region
      $region25: #{tpu_custom_call.1} parent=5 // pred_check
        %p177 = pneg %p176
      $region26: #{tpu_custom_call.1} parent=5 // pred_check_branch
        %179 = sbr.rel (%p177) target = $region28
      $region27: #{tpu_custom_call.1} parent=5 // pred_region
        // Predicated region
        $region29: #{tpu_custom_call.1} parent=27 // pred_check
          %p180 = pneg %p37
        $region30: #{tpu_custom_call.1} parent=27 // pred_check_branch
          %182 = sbr.rel (%p180) target = $region32
        $region31: #{tpu_custom_call.1} parent=27 // pred_region
          %s183 = sand.u32 %s27, 1
          %s184 = scalar_lea.sflag [#allocation4], %s183
          %s185 = sand.u32 %s27, 1
          %s186 = smul.addr %s185, 16
          %s187 = scalar_lea.vmem [#allocation3], %s186
          %s189 = ssub.s32 256, 256
          %190 = vsyncadd %s184, %s189
          %s191 = smul.addr %s17, 2
          %s192 = smul.addr %s191, 128
          %s193 = scalar_lea.hbm %s0, %s192
          %s195 = sshll.u32 %s187, 4
          %s196 = int_to_ptr.vmem [resolvable:$true] %s195
          %198 = dma.hbm_to_vmem [thread:$0]  %s193, 256, %s196, %s184
        $region32: #{tpu_custom_call.1} parent=27 // pred_fallthru
          _
      $region28: #{tpu_custom_call.1} parent=5 // pred_fallthru
        _
      %p199 = scmp.le.s32.totalorder 1, %s17
      %p200 = scmp.lt.s32.totalorder %s17, 3
      %p201 = pnand %p199, %p200
      %p202 = pneg %p201
      // Predicated region
      $region33: #{tpu_custom_call.1} parent=5 // pred_check
        _
      $region34: #{tpu_custom_call.1} parent=5 // pred_check_branch
        %204 = sbr.rel (%p201) target = $region36
      $region35: #{tpu_custom_call.1} parent=5 // pred_region
        %s205 = ssub.s32 %s17, 1
        %s206 = sand.u32 %s30, 1
        %s207 = scalar_lea.sflag [#allocation4], %s206
        %s208 = sand.u32 %s30, 1
        %s209 = smul.addr %s208, 16
        %s210 = scalar_lea.vmem [#allocation3], %s209
        // Predicated region
        $region37: #{tpu_custom_call.1} parent=35 // pred_check
          %p211 = pneg %p43
        $region38: #{tpu_custom_call.1} parent=35 // pred_check_branch
          %213 = sbr.rel (%p211) target = $region40
        $region39: #{tpu_custom_call.1} parent=35 // pred_region
          %214 = dma.done %s207, 256
        $region40: #{tpu_custom_call.1} parent=35 // pred_fallthru
          _
        // Predicated region
        $region41: #{tpu_custom_call.1} parent=35 // pred_check
          %p215 = pneg %p64
        $region42: #{tpu_custom_call.1} parent=35 // pred_check_branch
          %217 = sbr.rel (%p215) target = $region44
        $region43: #{tpu_custom_call.1} parent=35 // pred_region
          %218 = dma.done [#allocation7], 1280
        $region44: #{tpu_custom_call.1} parent=35 // pred_fallthru
          _
        // Predicated region
        $region45: #{tpu_custom_call.1} parent=35 // pred_check
          %p219 = pneg %p85
        $region46: #{tpu_custom_call.1} parent=35 // pred_check_branch
          %221 = sbr.rel (%p219) target = $region48
        $region47: #{tpu_custom_call.1} parent=35 // pred_region
          %222 = dma.done [#allocation7], 512
        $region48: #{tpu_custom_call.1} parent=35 // pred_fallthru
          _
        %s223 = sand.u32 %s30, 1
        %s224 = scalar_lea.sflag [#allocation4], %s223
        %s225 = sand.u32 %s30, 1
        %s226 = smul.addr %s225, 16
        %s227 = scalar_lea.vmem [#allocation3], %s226
        %p228 = pneg %p43
        %p229 = pneg %p40
        %p230 = pneg %p64
        %p231 = pneg %p61
        %p232 = pneg %p85
        %p233 = pneg %p82
        %p234 = pneg %p106
        %p235 = pneg %p103
        %p236 = pneg %p132
        %p237 = pneg %p129
        %s238 = sand.u32 %s119, 1
        %s239 = scalar_lea.sflag [#allocation5], %s238
        %s240 = sand.u32 %s119, 1
        %s241 = smul.addr %s240, 16
        %s242 = scalar_lea.vmem [#allocation9], %s241
        %v243 = vld [vmem:[%s210] sm:$0xff]
        %v244 = vld [vmem:[%s210 + $0x8] sm:$0xff]
        %245 = vrot.lane.b32.xlu0 %v243, 17
        %v246 = vpop.permute.xlu0 %245
        %247 = vrot.lane.b32.xlu0 %v244, 17
        %v248 = vpop.permute.xlu0 %247
        %v249 = vlaneseq
        %v250 = vand.u32 %v249, 127
        %vm251 = vcmp.lt.s32.totalorder %v250, 17
        %v252 = vsel %vm251, %v246, %v248
        %v253 = vsel %vm251, %v248, %v246
        %v254 = vld [vmem:[#allocation8] ss:$8 sm:$0x3]
        %v256 = vlaneseq
        %v257 = vshrl.u32 %v256, 7
        %v258 = vsub.s32 0, %v257
        %v259 = vrot.slane %v254, %v258
        %v260 = vlaneseq
        %v261 = vshrl.u32 %v260, 7
        %v262 = vsub.s32 1, %v261
        %v263 = vrot.slane %v254, %v262
        %v266 = vmul.f32 %v253, %v259
        %v267 = vmul.f32 %v252, %v263
        %268 = vst [vmem:[#allocation2] sm:$0xff] %v266
        %269 = vst [vmem:[#allocation2 + $0x8] sm:$0xff] %v267
        %270 = vrot.lane.b32.xlu0 %v243, 16
        %v271 = vpop.permute.xlu0 %270
        %272 = vrot.lane.b32.xlu0 %v244, 16
        %v273 = vpop.permute.xlu0 %272
        %vm274 = vcmp.lt.s32.totalorder %v250, 16
        %v275 = vsel %vm274, %v271, %v273
        %v276 = vsel %vm274, %v273, %v271
        %s277 = scalar_lea.vmem [#allocation8], 1
        %v278 = vld [vmem:[%s277] ss:$8 sm:$0x3]
        %v280 = vlaneseq
        %v281 = vshrl.u32 %v280, 7
        %v282 = vsub.s32 0, %v281
        %v283 = vrot.slane %v278, %v282
        %v284 = vlaneseq
        %v285 = vshrl.u32 %v284, 7
        %v286 = vsub.s32 1, %v285
        %v287 = vrot.slane %v278, %v286
        %v290 = vmul.f32 %v276, %v283
        %v291 = vmul.f32 %v275, %v287
        %292 = vst [vmem:[#allocation2 + $0x10] sm:$0xff] %v290
        %293 = vst [vmem:[#allocation2 + $0x18] sm:$0xff] %v291
        %294 = vrot.lane.b32.xlu0 %v243, 15
        %v295 = vpop.permute.xlu0 %294
        %296 = vrot.lane.b32.xlu0 %v244, 15
        %v297 = vpop.permute.xlu0 %296
        %vm298 = vcmp.lt.s32.totalorder %v250, 15
        %v299 = vsel %vm298, %v295, %v297
        %v300 = vsel %vm298, %v297, %v295
        %s301 = scalar_lea.vmem [#allocation8], 2
        %v302 = vld [vmem:[%s301] ss:$8 sm:$0x3]
        %v304 = vlaneseq
        %v305 = vshrl.u32 %v304, 7
        %v306 = vsub.s32 0, %v305
        %v307 = vrot.slane %v302, %v306
        %v308 = vlaneseq
        %v309 = vshrl.u32 %v308, 7
        %v310 = vsub.s32 1, %v309
        %v311 = vrot.slane %v302, %v310
        %v314 = vmul.f32 %v300, %v307
        %v315 = vmul.f32 %v299, %v311
        %316 = vst [vmem:[#allocation2 + $0x20] sm:$0xff] %v314
        %317 = vst [vmem:[#allocation2 + $0x28] sm:$0xff] %v315
        %318 = vrot.lane.b32.xlu0 %v243, 1
        %v319 = vpop.permute.xlu0 %318
        %320 = vrot.lane.b32.xlu0 %v244, 1
        %v321 = vpop.permute.xlu0 %320
        %vm322 = vcmp.lt.s32.totalorder %v250, 1
        %v323 = vsel %vm322, %v319, %v321
        %v324 = vsel %vm322, %v321, %v319
        %s325 = scalar_lea.vmem [#allocation8], 3
        %v326 = vld [vmem:[%s325] ss:$8 sm:$0x3]
        %v328 = vlaneseq
        %v329 = vshrl.u32 %v328, 7
        %v330 = vsub.s32 0, %v329
        %v331 = vrot.slane %v326, %v330
        %v332 = vlaneseq
        %v333 = vshrl.u32 %v332, 7
        %v334 = vsub.s32 1, %v333
        %v335 = vrot.slane %v326, %v334
        %v338 = vmul.f32 %v324, %v331
        %v339 = vmul.f32 %v323, %v335
        %340 = vst [vmem:[#allocation2 + $0x30] sm:$0xff] %v338
        %341 = vst [vmem:[#allocation2 + $0x38] sm:$0xff] %v339
        %342 = vst [vmem:[#allocation2 + $0x40] sm:$0xff] %v243
        %343 = vst [vmem:[#allocation2 + $0x48] sm:$0xff] %v244
        %344 = vrot.lane.b32.xlu0 %v243, 127
        %v345 = vpop.permute.xlu0 %344
        %346 = vrot.lane.b32.xlu0 %v244, 127
        %v347 = vpop.permute.xlu0 %346
        %vm348 = vcmp.lt.s32.totalorder %v250, 127
        %v349 = vsel %vm348, %v345, %v347
        %v350 = vsel %vm348, %v347, %v345
        %s351 = scalar_lea.vmem [#allocation8], 5
        %v352 = vld [vmem:[%s351] ss:$8 sm:$0x3]
        %v354 = vlaneseq
        %v355 = vshrl.u32 %v354, 7
        %v356 = vsub.s32 0, %v355
        %v357 = vrot.slane %v352, %v356
        %v358 = vlaneseq
        %v359 = vshrl.u32 %v358, 7
        %v360 = vsub.s32 1, %v359
        %v361 = vrot.slane %v352, %v360
        %v364 = vmul.f32 %v349, %v357
        %v365 = vmul.f32 %v350, %v361
        %366 = vst [vmem:[#allocation2 + $0x50] sm:$0xff] %v364
        %367 = vst [vmem:[#allocation2 + $0x58] sm:$0xff] %v365
        %368 = vrot.lane.b32.xlu0 %v243, 113
        %v369 = vpop.permute.xlu0 %368
        %370 = vrot.lane.b32.xlu0 %v244, 113
        %v371 = vpop.permute.xlu0 %370
        %vm372 = vcmp.lt.s32.totalorder %v250, 113
        %v373 = vsel %vm372, %v369, %v371
        %v374 = vsel %vm372, %v371, %v369
        %s375 = scalar_lea.vmem [#allocation8], 6
        %v376 = vld [vmem:[%s375] ss:$8 sm:$0x3]
        %v378 = vlaneseq
        %v379 = vshrl.u32 %v378, 7
        %v380 = vsub.s32 0, %v379
        %v381 = vrot.slane %v376, %v380
        %v382 = vlaneseq
        %v383 = vshrl.u32 %v382, 7
        %v384 = vsub.s32 1, %v383
        %v385 = vrot.slane %v376, %v384
        %v388 = vmul.f32 %v373, %v381
        %v389 = vmul.f32 %v374, %v385
        %390 = vst [vmem:[#allocation2 + $0x60] sm:$0xff] %v388
        %391 = vst [vmem:[#allocation2 + $0x68] sm:$0xff] %v389
        %392 = vrot.lane.b32.xlu0 %v243, 112
        %v393 = vpop.permute.xlu0 %392
        %394 = vrot.lane.b32.xlu0 %v244, 112
        %v395 = vpop.permute.xlu0 %394
        %vm396 = vcmp.lt.s32.totalorder %v250, 112
        %v397 = vsel %vm396, %v393, %v395
        %v398 = vsel %vm396, %v395, %v393
        %s399 = scalar_lea.vmem [#allocation8], 7
        %v400 = vld [vmem:[%s399] ss:$8 sm:$0x3]
        %v402 = vlaneseq
        %v403 = vshrl.u32 %v402, 7
        %v404 = vsub.s32 0, %v403
        %v405 = vrot.slane %v400, %v404
        %v406 = vlaneseq
        %v407 = vshrl.u32 %v406, 7
        %v408 = vsub.s32 1, %v407
        %v409 = vrot.slane %v400, %v408
        %v412 = vmul.f32 %v397, %v405
        %v413 = vmul.f32 %v398, %v409
        %414 = vst [vmem:[#allocation2 + $0x70] sm:$0xff] %v412
        %415 = vst [vmem:[#allocation2 + $0x78] sm:$0xff] %v413
        %416 = vrot.lane.b32.xlu0 %v243, 111
        %v417 = vpop.permute.xlu0 %416
        %418 = vrot.lane.b32.xlu0 %v244, 111
        %v419 = vpop.permute.xlu0 %418
        %vm420 = vcmp.lt.s32.totalorder %v250, 111
        %v421 = vsel %vm420, %v417, %v419
        %v422 = vsel %vm420, %v419, %v417
        %s423 = scalar_lea.vmem [#allocation8], 16
        %v424 = vld [vmem:[%s423] ss:$8 sm:$0x3]
        %v426 = vlaneseq
        %v427 = vshrl.u32 %v426, 7
        %v428 = vsub.s32 0, %v427
        %v429 = vrot.slane %v424, %v428
        %v430 = vlaneseq
        %v431 = vshrl.u32 %v430, 7
        %v432 = vsub.s32 1, %v431
        %v433 = vrot.slane %v424, %v432
        %v436 = vmul.f32 %v421, %v429
        %v437 = vmul.f32 %v422, %v433
        %438 = vst [vmem:[#allocation2 + $0x80] sm:$0xff] %v436
        %439 = vst [vmem:[#allocation2 + $0x88] sm:$0xff] %v437
        %v440 = vld [vmem:[#allocation6] sm:$0xff]
        %v441 = vld [vmem:[#allocation2] sm:$0xff]
        %v442 = vld [vmem:[#allocation2 + $0x8] sm:$0xff]
        %v443 = vld [vmem:[#allocation2 + $0x10] sm:$0xff]
        %v444 = vld [vmem:[#allocation2 + $0x18] sm:$0xff]
        %v445 = vld [vmem:[#allocation2 + $0x20] sm:$0xff]
        %v446 = vld [vmem:[#allocation2 + $0x28] sm:$0xff]
        %v447 = vld [vmem:[#allocation2 + $0x30] sm:$0xff]
        %v448 = vld [vmem:[#allocation2 + $0x38] sm:$0xff]
        %v449 = vld [vmem:[#allocation2 + $0x40] sm:$0xff]
        %v450 = vld [vmem:[#allocation2 + $0x48] sm:$0xff]
        %v451 = vld [vmem:[#allocation2 + $0x50] sm:$0xff]
        %v452 = vld [vmem:[#allocation2 + $0x58] sm:$0xff]
        %v453 = vld [vmem:[#allocation2 + $0x60] sm:$0xff]
        %v454 = vld [vmem:[#allocation2 + $0x68] sm:$0xff]
        %v455 = vld [vmem:[#allocation2 + $0x70] sm:$0xff]
        %v456 = vld [vmem:[#allocation2 + $0x78] sm:$0xff]
        %v457 = vld [vmem:[#allocation2 + $0x80] sm:$0xff]
        %v458 = vld [vmem:[#allocation2 + $0x88] sm:$0xff]
        %vm459 = vcmask 588800
        %v461 = vsel %vm459, %v440, 0
        %463 = vmatprep.subr.mxu0 %v442
        %464 = vmatpush1.msra.mxu0 %v441
        %465 = vmatprep.subr.mxu0 %v444
        %466 = vmatpush1.msra.mxu0 %v443
        %467 = vmatprep.subr.mxu0 %v446
        %468 = vmatpush1.msra.mxu0 %v445
        %469 = vmatprep.subr.mxu0 %v448
        %470 = vmatpush1.msra.mxu0 %v447
        %471 = vmatprep.subr.mxu0 %v450
        %472 = vmatpush1.msra.mxu0 %v449
        %473 = vmatprep.subr.mxu0 %v452
        %474 = vmatpush1.msra.mxu0 %v451
        %475 = vmatprep.subr.mxu0 %v454
        %476 = vmatpush1.msra.mxu0 %v453
        %477 = vmatprep.subr.mxu0 %v456
        %478 = vmatpush1.msra.mxu0 %v455
        %479 = vmatprep.subr.mxu0 %v458
        %480 = vmatpush1.msra.mxu0 %v457
        %481 = vmatprep.subr.mxu0 0.0
        %482 = vmatpush1.msra.mxu0 0.0
        %483 = vmatprep.subr.mxu0 0.0
        %484 = vmatpush1.msra.mxu0 0.0
        %485 = vmatprep.subr.mxu0 0.0
        %486 = vmatpush1.msra.mxu0 0.0
        %487 = vmatprep.subr.mxu0 0.0
        %488 = vmatpush1.msra.mxu0 0.0
        %489 = vmatprep.subr.mxu0 0.0
        %490 = vmatpush1.msra.mxu0 0.0
        %491 = vmatprep.subr.mxu0 0.0
        %492 = vmatpush1.msra.mxu0 0.0
        %493 = vmatprep.subr.mxu0 0.0
        %494 = vmatpush1.msra.mxu0 0.0
        %495 = vmatprep.subr.mxu0 0.0
        %496 = vmatpush1.msra.mxu0 0.0
        %497 = vmatprep.subr.mxu0 0.0
        %498 = vmatpush1.msra.mxu0 0.0
        %499 = vmatprep.subr.mxu0 0.0
        %500 = vmatpush1.msra.mxu0 0.0
        %501 = vmatprep.subr.mxu0 0.0
        %502 = vmatpush1.msra.mxu0 0.0
        %503 = vmatprep.subr.mxu0 0.0
        %504 = vmatpush1.msra.mxu0 0.0
        %505 = vmatprep.subr.mxu0 0.0
        %506 = vmatpush1.msra.mxu0 0.0
        %507 = vmatprep.subr.mxu0 0.0
        %508 = vmatpush1.msra.mxu0 0.0
        %509 = vmatprep.subr.mxu0 0.0
        %510 = vmatpush1.msra.mxu0 0.0
        %511 = vmatprep.subr.mxu0 0.0
        %512 = vmatpush1.msra.mxu0 0.0
        %513 = vmatprep.subr.mxu0 0.0
        %514 = vmatpush1.msra.mxu0 0.0
        %515 = vmatprep.subr.mxu0 0.0
        %516 = vmatpush1.msra.mxu0 0.0
        %517 = vmatprep.subr.mxu0 0.0
        %518 = vmatpush1.msra.mxu0 0.0
        %519 = vmatprep.subr.mxu0 0.0
        %520 = vmatpush1.msra.mxu0 0.0
        %521 = vmatprep.subr.mxu0 0.0
        %522 = vmatpush1.msra.mxu0 0.0
        %523 = vmatprep.subr.mxu0 0.0
        %524 = vmatpush1.msra.mxu0 0.0
        %525 = vmatprep.subr.mxu0 0.0
        %526 = vmatpush1.msra.mxu0 0.0
        %527 = vmatprep.mubr.f32.mxu0 0.0
        %528 = vmatmul.mubr.f32.gmra.mrb[0].mxu0 %v461
        %v529 = vpop.f32.mrb[0].mxu0
        %v530 = vadd.f32 0.0, %v529
        %v531 = vpop.f32.mrb[0].mxu0
        %v532 = vadd.f32 0.0, %v531
        %533 = vdwg.mxu0
        %v534 = vadd.f32 %v243, %v530
        %v535 = vadd.f32 %v244, %v532
        %536 = vrot.lane.b32.xlu0 %v530, 17
        %v537 = vpop.permute.xlu0 %536
        %538 = vrot.lane.b32.xlu0 %v532, 17
        %v539 = vpop.permute.xlu0 %538
        %v540 = vsel %vm251, %v537, %v539
        %v541 = vsel %vm251, %v539, %v537
        %v542 = vld [vmem:[#allocation8] ss:$8 sm:$0x3]
        %v544 = vlaneseq
        %v545 = vshrl.u32 %v544, 7
        %v546 = vsub.s32 0, %v545
        %v547 = vrot.slane %v542, %v546
        %v548 = vlaneseq
        %v549 = vshrl.u32 %v548, 7
        %v550 = vsub.s32 1, %v549
        %v551 = vrot.slane %v542, %v550
        %v554 = vmul.f32 %v541, %v547
        %v555 = vmul.f32 %v540, %v551
        %556 = vst [vmem:[#allocation2] sm:$0xff] %v554
        %557 = vst [vmem:[#allocation2 + $0x8] sm:$0xff] %v555
        %558 = vrot.lane.b32.xlu0 %v530, 16
        %v559 = vpop.permute.xlu0 %558
        %560 = vrot.lane.b32.xlu0 %v532, 16
        %v561 = vpop.permute.xlu0 %560
        %v562 = vsel %vm274, %v559, %v561
        %v563 = vsel %vm274, %v561, %v559
        %v564 = vld [vmem:[%s277] ss:$8 sm:$0x3]
        %v566 = vlaneseq
        %v567 = vshrl.u32 %v566, 7
        %v568 = vsub.s32 0, %v567
        %v569 = vrot.slane %v564, %v568
        %v570 = vlaneseq
        %v571 = vshrl.u32 %v570, 7
        %v572 = vsub.s32 1, %v571
        %v573 = vrot.slane %v564, %v572
        %v576 = vmul.f32 %v563, %v569
        %v577 = vmul.f32 %v562, %v573
        %578 = vst [vmem:[#allocation2 + $0x10] sm:$0xff] %v576
        %579 = vst [vmem:[#allocation2 + $0x18] sm:$0xff] %v577
        %580 = vrot.lane.b32.xlu0 %v530, 15
        %v581 = vpop.permute.xlu0 %580
        %582 = vrot.lane.b32.xlu0 %v532, 15
        %v583 = vpop.permute.xlu0 %582
        %v584 = vsel %vm298, %v581, %v583
        %v585 = vsel %vm298, %v583, %v581
        %v586 = vld [vmem:[%s301] ss:$8 sm:$0x3]
        %v588 = vlaneseq
        %v589 = vshrl.u32 %v588, 7
        %v590 = vsub.s32 0, %v589
        %v591 = vrot.slane %v586, %v590
        %v592 = vlaneseq
        %v593 = vshrl.u32 %v592, 7
        %v594 = vsub.s32 1, %v593
        %v595 = vrot.slane %v586, %v594
        %v598 = vmul.f32 %v585, %v591
        %v599 = vmul.f32 %v584, %v595
        %600 = vst [vmem:[#allocation2 + $0x20] sm:$0xff] %v598
        %601 = vst [vmem:[#allocation2 + $0x28] sm:$0xff] %v599
        %602 = vrot.lane.b32.xlu0 %v530, 1
        %v603 = vpop.permute.xlu0 %602
        %604 = vrot.lane.b32.xlu0 %v532, 1
        %v605 = vpop.permute.xlu0 %604
        %v606 = vsel %vm322, %v603, %v605
        %v607 = vsel %vm322, %v605, %v603
        %v608 = vld [vmem:[%s325] ss:$8 sm:$0x3]
        %v610 = vlaneseq
        %v611 = vshrl.u32 %v610, 7
        %v612 = vsub.s32 0, %v611
        %v613 = vrot.slane %v608, %v612
        %v614 = vlaneseq
        %v615 = vshrl.u32 %v614, 7
        %v616 = vsub.s32 1, %v615
        %v617 = vrot.slane %v608, %v616
        %v620 = vmul.f32 %v607, %v613
        %v621 = vmul.f32 %v606, %v617
        %622 = vst [vmem:[#allocation2 + $0x30] sm:$0xff] %v620
        %623 = vst [vmem:[#allocation2 + $0x38] sm:$0xff] %v621
        %624 = vst [vmem:[#allocation2 + $0x40] sm:$0xff] %v530
        %625 = vst [vmem:[#allocation2 + $0x48] sm:$0xff] %v532
        %626 = vrot.lane.b32.xlu0 %v530, 127
        %v627 = vpop.permute.xlu0 %626
        %628 = vrot.lane.b32.xlu0 %v532, 127
        %v629 = vpop.permute.xlu0 %628
        %v630 = vsel %vm348, %v627, %v629
        %v631 = vsel %vm348, %v629, %v627
        %v632 = vld [vmem:[%s351] ss:$8 sm:$0x3]
        %v634 = vlaneseq
        %v635 = vshrl.u32 %v634, 7
        %v636 = vsub.s32 0, %v635
        %v637 = vrot.slane %v632, %v636
        %v638 = vlaneseq
        %v639 = vshrl.u32 %v638, 7
        %v640 = vsub.s32 1, %v639
        %v641 = vrot.slane %v632, %v640
        %v644 = vmul.f32 %v630, %v637
        %v645 = vmul.f32 %v631, %v641
        %646 = vst [vmem:[#allocation2 + $0x50] sm:$0xff] %v644
        %647 = vst [vmem:[#allocation2 + $0x58] sm:$0xff] %v645
        %648 = vrot.lane.b32.xlu0 %v530, 113
        %v649 = vpop.permute.xlu0 %648
        %650 = vrot.lane.b32.xlu0 %v532, 113
        %v651 = vpop.permute.xlu0 %650
        %v652 = vsel %vm372, %v649, %v651
        %v653 = vsel %vm372, %v651, %v649
        %v654 = vld [vmem:[%s375] ss:$8 sm:$0x3]
        %v656 = vlaneseq
        %v657 = vshrl.u32 %v656, 7
        %v658 = vsub.s32 0, %v657
        %v659 = vrot.slane %v654, %v658
        %v660 = vlaneseq
        %v661 = vshrl.u32 %v660, 7
        %v662 = vsub.s32 1, %v661
        %v663 = vrot.slane %v654, %v662
        %v666 = vmul.f32 %v652, %v659
        %v667 = vmul.f32 %v653, %v663
        %668 = vst [vmem:[#allocation2 + $0x60] sm:$0xff] %v666
        %669 = vst [vmem:[#allocation2 + $0x68] sm:$0xff] %v667
        %670 = vrot.lane.b32.xlu0 %v530, 112
        %v671 = vpop.permute.xlu0 %670
        %672 = vrot.lane.b32.xlu0 %v532, 112
        %v673 = vpop.permute.xlu0 %672
        %v674 = vsel %vm396, %v671, %v673
        %v675 = vsel %vm396, %v673, %v671
        %v676 = vld [vmem:[%s399] ss:$8 sm:$0x3]
        %v678 = vlaneseq
        %v679 = vshrl.u32 %v678, 7
        %v680 = vsub.s32 0, %v679
        %v681 = vrot.slane %v676, %v680
        %v682 = vlaneseq
        %v683 = vshrl.u32 %v682, 7
        %v684 = vsub.s32 1, %v683
        %v685 = vrot.slane %v676, %v684
        %v688 = vmul.f32 %v674, %v681
        %v689 = vmul.f32 %v675, %v685
        %690 = vst [vmem:[#allocation2 + $0x70] sm:$0xff] %v688
        %691 = vst [vmem:[#allocation2 + $0x78] sm:$0xff] %v689
        %692 = vrot.lane.b32.xlu0 %v530, 111
        %v693 = vpop.permute.xlu0 %692
        %694 = vrot.lane.b32.xlu0 %v532, 111
        %v695 = vpop.permute.xlu0 %694
        %v696 = vsel %vm420, %v693, %v695
        %v697 = vsel %vm420, %v695, %v693
        %v698 = vld [vmem:[%s423] ss:$8 sm:$0x3]
        %v700 = vlaneseq
        %v701 = vshrl.u32 %v700, 7
        %v702 = vsub.s32 0, %v701
        %v703 = vrot.slane %v698, %v702
        %v704 = vlaneseq
        %v705 = vshrl.u32 %v704, 7
        %v706 = vsub.s32 1, %v705
        %v707 = vrot.slane %v698, %v706
        %v710 = vmul.f32 %v696, %v703
        %v711 = vmul.f32 %v697, %v707
        %712 = vst [vmem:[#allocation2 + $0x80] sm:$0xff] %v710
        %713 = vst [vmem:[#allocation2 + $0x88] sm:$0xff] %v711
        %s714 = scalar_lea.vmem [#allocation6], 8
        %v715 = vld [vmem:[%s714] sm:$0xff]
        %v716 = vld [vmem:[#allocation2] sm:$0xff]
        %v717 = vld [vmem:[#allocation2 + $0x8] sm:$0xff]
        %v718 = vld [vmem:[#allocation2 + $0x10] sm:$0xff]
        %v719 = vld [vmem:[#allocation2 + $0x18] sm:$0xff]
        %v720 = vld [vmem:[#allocation2 + $0x20] sm:$0xff]
        %v721 = vld [vmem:[#allocation2 + $0x28] sm:$0xff]
        %v722 = vld [vmem:[#allocation2 + $0x30] sm:$0xff]
        %v723 = vld [vmem:[#allocation2 + $0x38] sm:$0xff]
        %v724 = vld [vmem:[#allocation2 + $0x40] sm:$0xff]
        %v725 = vld [vmem:[#allocation2 + $0x48] sm:$0xff]
        %v726 = vld [vmem:[#allocation2 + $0x50] sm:$0xff]
        %v727 = vld [vmem:[#allocation2 + $0x58] sm:$0xff]
        %v728 = vld [vmem:[#allocation2 + $0x60] sm:$0xff]
        %v729 = vld [vmem:[#allocation2 + $0x68] sm:$0xff]
        %v730 = vld [vmem:[#allocation2 + $0x70] sm:$0xff]
        %v731 = vld [vmem:[#allocation2 + $0x78] sm:$0xff]
        %v732 = vld [vmem:[#allocation2 + $0x80] sm:$0xff]
        %v733 = vld [vmem:[#allocation2 + $0x88] sm:$0xff]
        %v735 = vsel %vm459, %v715, 0
        %737 = vmatprep.subr.mxu0 %v717
        %738 = vmatpush1.msra.mxu0 %v716
        %739 = vmatprep.subr.mxu0 %v719
        %740 = vmatpush1.msra.mxu0 %v718
        %741 = vmatprep.subr.mxu0 %v721
        %742 = vmatpush1.msra.mxu0 %v720
        %743 = vmatprep.subr.mxu0 %v723
        %744 = vmatpush1.msra.mxu0 %v722
        %745 = vmatprep.subr.mxu0 %v725
        %746 = vmatpush1.msra.mxu0 %v724
        %747 = vmatprep.subr.mxu0 %v727
        %748 = vmatpush1.msra.mxu0 %v726
        %749 = vmatprep.subr.mxu0 %v729
        %750 = vmatpush1.msra.mxu0 %v728
        %751 = vmatprep.subr.mxu0 %v731
        %752 = vmatpush1.msra.mxu0 %v730
        %753 = vmatprep.subr.mxu0 %v733
        %754 = vmatpush1.msra.mxu0 %v732
        %755 = vmatprep.subr.mxu0 0.0
        %756 = vmatpush1.msra.mxu0 0.0
        %757 = vmatprep.subr.mxu0 0.0
        %758 = vmatpush1.msra.mxu0 0.0
        %759 = vmatprep.subr.mxu0 0.0
        %760 = vmatpush1.msra.mxu0 0.0
        %761 = vmatprep.subr.mxu0 0.0
        %762 = vmatpush1.msra.mxu0 0.0
        %763 = vmatprep.subr.mxu0 0.0
        %764 = vmatpush1.msra.mxu0 0.0
        %765 = vmatprep.subr.mxu0 0.0
        %766 = vmatpush1.msra.mxu0 0.0
        %767 = vmatprep.subr.mxu0 0.0
        %768 = vmatpush1.msra.mxu0 0.0
        %769 = vmatprep.subr.mxu0 0.0
        %770 = vmatpush1.msra.mxu0 0.0
        %771 = vmatprep.subr.mxu0 0.0
        %772 = vmatpush1.msra.mxu0 0.0
        %773 = vmatprep.subr.mxu0 0.0
        %774 = vmatpush1.msra.mxu0 0.0
        %775 = vmatprep.subr.mxu0 0.0
        %776 = vmatpush1.msra.mxu0 0.0
        %777 = vmatprep.subr.mxu0 0.0
        %778 = vmatpush1.msra.mxu0 0.0
        %779 = vmatprep.subr.mxu0 0.0
        %780 = vmatpush1.msra.mxu0 0.0
        %781 = vmatprep.subr.mxu0 0.0
        %782 = vmatpush1.msra.mxu0 0.0
        %783 = vmatprep.subr.mxu0 0.0
        %784 = vmatpush1.msra.mxu0 0.0
        %785 = vmatprep.subr.mxu0 0.0
        %786 = vmatpush1.msra.mxu0 0.0
        %787 = vmatprep.subr.mxu0 0.0
        %788 = vmatpush1.msra.mxu0 0.0
        %789 = vmatprep.subr.mxu0 0.0
        %790 = vmatpush1.msra.mxu0 0.0
        %791 = vmatprep.subr.mxu0 0.0
        %792 = vmatpush1.msra.mxu0 0.0
        %793 = vmatprep.subr.mxu0 0.0
        %794 = vmatpush1.msra.mxu0 0.0
        %795 = vmatprep.subr.mxu0 0.0
        %796 = vmatpush1.msra.mxu0 0.0
        %797 = vmatprep.subr.mxu0 0.0
        %798 = vmatpush1.msra.mxu0 0.0
        %799 = vmatprep.subr.mxu0 0.0
        %800 = vmatpush1.msra.mxu0 0.0
        %801 = vmatprep.mubr.f32.mxu0 0.0
        %802 = vmatmul.mubr.f32.gmra.mrb[0].mxu0 %v735
        %v803 = vpop.f32.mrb[0].mxu0
        %v804 = vadd.f32 0.0, %v803
        %v805 = vpop.f32.mrb[0].mxu0
        %v806 = vadd.f32 0.0, %v805
        %807 = vdwg.mxu0
        %v808 = vadd.f32 %v534, %v804
        %v809 = vadd.f32 %v535, %v806
        %810 = vrot.lane.b32.xlu0 %v804, 17
        %v811 = vpop.permute.xlu0 %810
        %812 = vrot.lane.b32.xlu0 %v806, 17
        %v813 = vpop.permute.xlu0 %812
        %v814 = vsel %vm251, %v811, %v813
        %v815 = vsel %vm251, %v813, %v811
        %v816 = vld [vmem:[#allocation8] ss:$8 sm:$0x3]
        %v818 = vlaneseq
        %v819 = vshrl.u32 %v818, 7
        %v820 = vsub.s32 0, %v819
        %v821 = vrot.slane %v816, %v820
        %v822 = vlaneseq
        %v823 = vshrl.u32 %v822, 7
        %v824 = vsub.s32 1, %v823
        %v825 = vrot.slane %v816, %v824
        %v828 = vmul.f32 %v815, %v821
        %v829 = vmul.f32 %v814, %v825
        %830 = vst [vmem:[#allocation2] sm:$0xff] %v828
        %831 = vst [vmem:[#allocation2 + $0x8] sm:$0xff] %v829
        %832 = vrot.lane.b32.xlu0 %v804, 16
        %v833 = vpop.permute.xlu0 %832
        %834 = vrot.lane.b32.xlu0 %v806, 16
        %v835 = vpop.permute.xlu0 %834
        %v836 = vsel %vm274, %v833, %v835
        %v837 = vsel %vm274, %v835, %v833
        %v838 = vld [vmem:[%s277] ss:$8 sm:$0x3]
        %v840 = vlaneseq
        %v841 = vshrl.u32 %v840, 7
        %v842 = vsub.s32 0, %v841
        %v843 = vrot.slane %v838, %v842
        %v844 = vlaneseq
        %v845 = vshrl.u32 %v844, 7
        %v846 = vsub.s32 1, %v845
        %v847 = vrot.slane %v838, %v846
        %v850 = vmul.f32 %v837, %v843
        %v851 = vmul.f32 %v836, %v847
        %852 = vst [vmem:[#allocation2 + $0x10] sm:$0xff] %v850
        %853 = vst [vmem:[#allocation2 + $0x18] sm:$0xff] %v851
        %854 = vrot.lane.b32.xlu0 %v804, 15
        %v855 = vpop.permute.xlu0 %854
        %856 = vrot.lane.b32.xlu0 %v806, 15
        %v857 = vpop.permute.xlu0 %856
        %v858 = vsel %vm298, %v855, %v857
        %v859 = vsel %vm298, %v857, %v855
        %v860 = vld [vmem:[%s301] ss:$8 sm:$0x3]
        %v862 = vlaneseq
        %v863 = vshrl.u32 %v862, 7
        %v864 = vsub.s32 0, %v863
        %v865 = vrot.slane %v860, %v864
        %v866 = vlaneseq
        %v867 = vshrl.u32 %v866, 7
        %v868 = vsub.s32 1, %v867
        %v869 = vrot.slane %v860, %v868
        %v872 = vmul.f32 %v859, %v865
        %v873 = vmul.f32 %v858, %v869
        %874 = vst [vmem:[#allocation2 + $0x20] sm:$0xff] %v872
        %875 = vst [vmem:[#allocation2 + $0x28] sm:$0xff] %v873
        %876 = vrot.lane.b32.xlu0 %v804, 1
        %v877 = vpop.permute.xlu0 %876
        %878 = vrot.lane.b32.xlu0 %v806, 1
        %v879 = vpop.permute.xlu0 %878
        %v880 = vsel %vm322, %v877, %v879
        %v881 = vsel %vm322, %v879, %v877
        %v882 = vld [vmem:[%s325] ss:$8 sm:$0x3]
        %v884 = vlaneseq
        %v885 = vshrl.u32 %v884, 7
        %v886 = vsub.s32 0, %v885
        %v887 = vrot.slane %v882, %v886
        %v888 = vlaneseq
        %v889 = vshrl.u32 %v888, 7
        %v890 = vsub.s32 1, %v889
        %v891 = vrot.slane %v882, %v890
        %v894 = vmul.f32 %v881, %v887
        %v895 = vmul.f32 %v880, %v891
        %896 = vst [vmem:[#allocation2 + $0x30] sm:$0xff] %v894
        %897 = vst [vmem:[#allocation2 + $0x38] sm:$0xff] %v895
        %898 = vst [vmem:[#allocation2 + $0x40] sm:$0xff] %v804
        %899 = vst [vmem:[#allocation2 + $0x48] sm:$0xff] %v806
        %900 = vrot.lane.b32.xlu0 %v804, 127
        %v901 = vpop.permute.xlu0 %900
        %902 = vrot.lane.b32.xlu0 %v806, 127
        %v903 = vpop.permute.xlu0 %902
        %v904 = vsel %vm348, %v901, %v903
        %v905 = vsel %vm348, %v903, %v901
        %v906 = vld [vmem:[%s351] ss:$8 sm:$0x3]
        %v908 = vlaneseq
        %v909 = vshrl.u32 %v908, 7
        %v910 = vsub.s32 0, %v909
        %v911 = vrot.slane %v906, %v910
        %v912 = vlaneseq
        %v913 = vshrl.u32 %v912, 7
        %v914 = vsub.s32 1, %v913
        %v915 = vrot.slane %v906, %v914
        %v918 = vmul.f32 %v904, %v911
        %v919 = vmul.f32 %v905, %v915
        %920 = vst [vmem:[#allocation2 + $0x50] sm:$0xff] %v918
        %921 = vst [vmem:[#allocation2 + $0x58] sm:$0xff] %v919
        %922 = vrot.lane.b32.xlu0 %v804, 113
        %v923 = vpop.permute.xlu0 %922
        %924 = vrot.lane.b32.xlu0 %v806, 113
        %v925 = vpop.permute.xlu0 %924
        %v926 = vsel %vm372, %v923, %v925
        %v927 = vsel %vm372, %v925, %v923
        %v928 = vld [vmem:[%s375] ss:$8 sm:$0x3]
        %v930 = vlaneseq
        %v931 = vshrl.u32 %v930, 7
        %v932 = vsub.s32 0, %v931
        %v933 = vrot.slane %v928, %v932
        %v934 = vlaneseq
        %v935 = vshrl.u32 %v934, 7
        %v936 = vsub.s32 1, %v935
        %v937 = vrot.slane %v928, %v936
        %v940 = vmul.f32 %v926, %v933
        %v941 = vmul.f32 %v927, %v937
        %942 = vst [vmem:[#allocation2 + $0x60] sm:$0xff] %v940
        %943 = vst [vmem:[#allocation2 + $0x68] sm:$0xff] %v941
        %944 = vrot.lane.b32.xlu0 %v804, 112
        %v945 = vpop.permute.xlu0 %944
        %946 = vrot.lane.b32.xlu0 %v806, 112
        %v947 = vpop.permute.xlu0 %946
        %v948 = vsel %vm396, %v945, %v947
        %v949 = vsel %vm396, %v947, %v945
        %v950 = vld [vmem:[%s399] ss:$8 sm:$0x3]
        %v952 = vlaneseq
        %v953 = vshrl.u32 %v952, 7
        %v954 = vsub.s32 0, %v953
        %v955 = vrot.slane %v950, %v954
        %v956 = vlaneseq
        %v957 = vshrl.u32 %v956, 7
        %v958 = vsub.s32 1, %v957
        %v959 = vrot.slane %v950, %v958
        %v962 = vmul.f32 %v948, %v955
        %v963 = vmul.f32 %v949, %v959
        %964 = vst [vmem:[#allocation2 + $0x70] sm:$0xff] %v962
        %965 = vst [vmem:[#allocation2 + $0x78] sm:$0xff] %v963
        %966 = vrot.lane.b32.xlu0 %v804, 111
        %v967 = vpop.permute.xlu0 %966
        %968 = vrot.lane.b32.xlu0 %v806, 111
        %v969 = vpop.permute.xlu0 %968
        %v970 = vsel %vm420, %v967, %v969
        %v971 = vsel %vm420, %v969, %v967
        %v972 = vld [vmem:[%s423] ss:$8 sm:$0x3]
        %v974 = vlaneseq
        %v975 = vshrl.u32 %v974, 7
        %v976 = vsub.s32 0, %v975
        %v977 = vrot.slane %v972, %v976
        %v978 = vlaneseq
        %v979 = vshrl.u32 %v978, 7
        %v980 = vsub.s32 1, %v979
        %v981 = vrot.slane %v972, %v980
        %v984 = vmul.f32 %v970, %v977
        %v985 = vmul.f32 %v971, %v981
        %986 = vst [vmem:[#allocation2 + $0x80] sm:$0xff] %v984
        %987 = vst [vmem:[#allocation2 + $0x88] sm:$0xff] %v985
        %s988 = scalar_lea.vmem [#allocation6], 16
        %v989 = vld [vmem:[%s988] sm:$0xff]
        %v990 = vld [vmem:[#allocation2] sm:$0xff]
        %v991 = vld [vmem:[#allocation2 + $0x8] sm:$0xff]
        %v992 = vld [vmem:[#allocation2 + $0x10] sm:$0xff]
        %v993 = vld [vmem:[#allocation2 + $0x18] sm:$0xff]
        %v994 = vld [vmem:[#allocation2 + $0x20] sm:$0xff]
        %v995 = vld [vmem:[#allocation2 + $0x28] sm:$0xff]
        %v996 = vld [vmem:[#allocation2 + $0x30] sm:$0xff]
        %v997 = vld [vmem:[#allocation2 + $0x38] sm:$0xff]
        %v998 = vld [vmem:[#allocation2 + $0x40] sm:$0xff]
        %v999 = vld [vmem:[#allocation2 + $0x48] sm:$0xff]
        %v1000 = vld [vmem:[#allocation2 + $0x50] sm:$0xff]
        %v1001 = vld [vmem:[#allocation2 + $0x58] sm:$0xff]
        %v1002 = vld [vmem:[#allocation2 + $0x60] sm:$0xff]
        %v1003 = vld [vmem:[#allocation2 + $0x68] sm:$0xff]
        %v1004 = vld [vmem:[#allocation2 + $0x70] sm:$0xff]
        %v1005 = vld [vmem:[#allocation2 + $0x78] sm:$0xff]
        %v1006 = vld [vmem:[#allocation2 + $0x80] sm:$0xff]
        %v1007 = vld [vmem:[#allocation2 + $0x88] sm:$0xff]
        %v1009 = vsel %vm459, %v989, 0
        %1011 = vmatprep.subr.mxu0 %v991
        %1012 = vmatpush1.msra.mxu0 %v990
        %1013 = vmatprep.subr.mxu0 %v993
        %1014 = vmatpush1.msra.mxu0 %v992
        %1015 = vmatprep.subr.mxu0 %v995
        %1016 = vmatpush1.msra.mxu0 %v994
        %1017 = vmatprep.subr.mxu0 %v997
        %1018 = vmatpush1.msra.mxu0 %v996
        %1019 = vmatprep.subr.mxu0 %v999
        %1020 = vmatpush1.msra.mxu0 %v998
        %1021 = vmatprep.subr.mxu0 %v1001
        %1022 = vmatpush1.msra.mxu0 %v1000
        %1023 = vmatprep.subr.mxu0 %v1003
        %1024 = vmatpush1.msra.mxu0 %v1002
        %1025 = vmatprep.subr.mxu0 %v1005
        %1026 = vmatpush1.msra.mxu0 %v1004
        %1027 = vmatprep.subr.mxu0 %v1007
        %1028 = vmatpush1.msra.mxu0 %v1006
        %1029 = vmatprep.subr.mxu0 0.0
        %1030 = vmatpush1.msra.mxu0 0.0
        %1031 = vmatprep.subr.mxu0 0.0
        %1032 = vmatpush1.msra.mxu0 0.0
        %1033 = vmatprep.subr.mxu0 0.0
        %1034 = vmatpush1.msra.mxu0 0.0
        %1035 = vmatprep.subr.mxu0 0.0
        %1036 = vmatpush1.msra.mxu0 0.0
        %1037 = vmatprep.subr.mxu0 0.0
        %1038 = vmatpush1.msra.mxu0 0.0
        %1039 = vmatprep.subr.mxu0 0.0
        %1040 = vmatpush1.msra.mxu0 0.0
        %1041 = vmatprep.subr.mxu0 0.0
        %1042 = vmatpush1.msra.mxu0 0.0
        %1043 = vmatprep.subr.mxu0 0.0
        %1044 = vmatpush1.msra.mxu0 0.0
        %1045 = vmatprep.subr.mxu0 0.0
        %1046 = vmatpush1.msra.mxu0 0.0
        %1047 = vmatprep.subr.mxu0 0.0
        %1048 = vmatpush1.msra.mxu0 0.0
        %1049 = vmatprep.subr.mxu0 0.0
        %1050 = vmatpush1.msra.mxu0 0.0
        %1051 = vmatprep.subr.mxu0 0.0
        %1052 = vmatpush1.msra.mxu0 0.0
        %1053 = vmatprep.subr.mxu0 0.0
        %1054 = vmatpush1.msra.mxu0 0.0
        %1055 = vmatprep.subr.mxu0 0.0
        %1056 = vmatpush1.msra.mxu0 0.0
        %1057 = vmatprep.subr.mxu0 0.0
        %1058 = vmatpush1.msra.mxu0 0.0
        %1059 = vmatprep.subr.mxu0 0.0
        %1060 = vmatpush1.msra.mxu0 0.0
        %1061 = vmatprep.subr.mxu0 0.0
        %1062 = vmatpush1.msra.mxu0 0.0
        %1063 = vmatprep.subr.mxu0 0.0
        %1064 = vmatpush1.msra.mxu0 0.0
        %1065 = vmatprep.subr.mxu0 0.0
        %1066 = vmatpush1.msra.mxu0 0.0
        %1067 = vmatprep.subr.mxu0 0.0
        %1068 = vmatpush1.msra.mxu0 0.0
        %1069 = vmatprep.subr.mxu0 0.0
        %1070 = vmatpush1.msra.mxu0 0.0
        %1071 = vmatprep.subr.mxu0 0.0
        %1072 = vmatpush1.msra.mxu0 0.0
        %1073 = vmatprep.subr.mxu0 0.0
        %1074 = vmatpush1.msra.mxu0 0.0
        %1075 = vmatprep.mubr.f32.mxu0 0.0
        %1076 = vmatmul.mubr.f32.gmra.mrb[0].mxu0 %v1009
        %v1077 = vpop.f32.mrb[0].mxu0
        %v1078 = vadd.f32 0.0, %v1077
        %v1079 = vpop.f32.mrb[0].mxu0
        %v1080 = vadd.f32 0.0, %v1079
        %1081 = vdwg.mxu0
        %v1082 = vadd.f32 %v808, %v1078
        %v1083 = vadd.f32 %v809, %v1080
        %1084 = vrot.lane.b32.xlu0 %v1078, 17
        %v1085 = vpop.permute.xlu0 %1084
        %1086 = vrot.lane.b32.xlu0 %v1080, 17
        %v1087 = vpop.permute.xlu0 %1086
        %v1088 = vsel %vm251, %v1085, %v1087
        %v1089 = vsel %vm251, %v1087, %v1085
        %v1090 = vld [vmem:[#allocation8] ss:$8 sm:$0x3]
        %v1092 = vlaneseq
        %v1093 = vshrl.u32 %v1092, 7
        %v1094 = vsub.s32 0, %v1093
        %v1095 = vrot.slane %v1090, %v1094
        %v1096 = vlaneseq
        %v1097 = vshrl.u32 %v1096, 7
        %v1098 = vsub.s32 1, %v1097
        %v1099 = vrot.slane %v1090, %v1098
        %v1102 = vmul.f32 %v1089, %v1095
        %v1103 = vmul.f32 %v1088, %v1099
        %1104 = vst [vmem:[#allocation2] sm:$0xff] %v1102
        %1105 = vst [vmem:[#allocation2 + $0x8] sm:$0xff] %v1103
        %1106 = vrot.lane.b32.xlu0 %v1078, 16
        %v1107 = vpop.permute.xlu0 %1106
        %1108 = vrot.lane.b32.xlu0 %v1080, 16
        %v1109 = vpop.permute.xlu0 %1108
        %v1110 = vsel %vm274, %v1107, %v1109
        %v1111 = vsel %vm274, %v1109, %v1107
        %v1112 = vld [vmem:[%s277] ss:$8 sm:$0x3]
        %v1114 = vlaneseq
        %v1115 = vshrl.u32 %v1114, 7
        %v1116 = vsub.s32 0, %v1115
        %v1117 = vrot.slane %v1112, %v1116
        %v1118 = vlaneseq
        %v1119 = vshrl.u32 %v1118, 7
        %v1120 = vsub.s32 1, %v1119
        %v1121 = vrot.slane %v1112, %v1120
        %v1124 = vmul.f32 %v1111, %v1117
        %v1125 = vmul.f32 %v1110, %v1121
        %1126 = vst [vmem:[#allocation2 + $0x10] sm:$0xff] %v1124
        %1127 = vst [vmem:[#allocation2 + $0x18] sm:$0xff] %v1125
        %1128 = vrot.lane.b32.xlu0 %v1078, 15
        %v1129 = vpop.permute.xlu0 %1128
        %1130 = vrot.lane.b32.xlu0 %v1080, 15
        %v1131 = vpop.permute.xlu0 %1130
        %v1132 = vsel %vm298, %v1129, %v1131
        %v1133 = vsel %vm298, %v1131, %v1129
        %v1134 = vld [vmem:[%s301] ss:$8 sm:$0x3]
        %v1136 = vlaneseq
        %v1137 = vshrl.u32 %v1136, 7
        %v1138 = vsub.s32 0, %v1137
        %v1139 = vrot.slane %v1134, %v1138
        %v1140 = vlaneseq
        %v1141 = vshrl.u32 %v1140, 7
        %v1142 = vsub.s32 1, %v1141
        %v1143 = vrot.slane %v1134, %v1142
        %v1146 = vmul.f32 %v1133, %v1139
        %v1147 = vmul.f32 %v1132, %v1143
        %1148 = vst [vmem:[#allocation2 + $0x20] sm:$0xff] %v1146
        %1149 = vst [vmem:[#allocation2 + $0x28] sm:$0xff] %v1147
        %1150 = vrot.lane.b32.xlu0 %v1078, 1
        %v1151 = vpop.permute.xlu0 %1150
        %1152 = vrot.lane.b32.xlu0 %v1080, 1
        %v1153 = vpop.permute.xlu0 %1152
        %v1154 = vsel %vm322, %v1151, %v1153
        %v1155 = vsel %vm322, %v1153, %v1151
        %v1156 = vld [vmem:[%s325] ss:$8 sm:$0x3]
        %v1158 = vlaneseq
        %v1159 = vshrl.u32 %v1158, 7
        %v1160 = vsub.s32 0, %v1159
        %v1161 = vrot.slane %v1156, %v1160
        %v1162 = vlaneseq
        %v1163 = vshrl.u32 %v1162, 7
        %v1164 = vsub.s32 1, %v1163
        %v1165 = vrot.slane %v1156, %v1164
        %v1168 = vmul.f32 %v1155, %v1161
        %v1169 = vmul.f32 %v1154, %v1165
        %1170 = vst [vmem:[#allocation2 + $0x30] sm:$0xff] %v1168
        %1171 = vst [vmem:[#allocation2 + $0x38] sm:$0xff] %v1169
        %1172 = vst [vmem:[#allocation2 + $0x40] sm:$0xff] %v1078
        %1173 = vst [vmem:[#allocation2 + $0x48] sm:$0xff] %v1080
        %1174 = vrot.lane.b32.xlu0 %v1078, 127
        %v1175 = vpop.permute.xlu0 %1174
        %1176 = vrot.lane.b32.xlu0 %v1080, 127
        %v1177 = vpop.permute.xlu0 %1176
        %v1178 = vsel %vm348, %v1175, %v1177
        %v1179 = vsel %vm348, %v1177, %v1175
        %v1180 = vld [vmem:[%s351] ss:$8 sm:$0x3]
        %v1182 = vlaneseq
        %v1183 = vshrl.u32 %v1182, 7
        %v1184 = vsub.s32 0, %v1183
        %v1185 = vrot.slane %v1180, %v1184
        %v1186 = vlaneseq
        %v1187 = vshrl.u32 %v1186, 7
        %v1188 = vsub.s32 1, %v1187
        %v1189 = vrot.slane %v1180, %v1188
        %v1192 = vmul.f32 %v1178, %v1185
        %v1193 = vmul.f32 %v1179, %v1189
        %1194 = vst [vmem:[#allocation2 + $0x50] sm:$0xff] %v1192
        %1195 = vst [vmem:[#allocation2 + $0x58] sm:$0xff] %v1193
        %1196 = vrot.lane.b32.xlu0 %v1078, 113
        %v1197 = vpop.permute.xlu0 %1196
        %1198 = vrot.lane.b32.xlu0 %v1080, 113
        %v1199 = vpop.permute.xlu0 %1198
        %v1200 = vsel %vm372, %v1197, %v1199
        %v1201 = vsel %vm372, %v1199, %v1197
        %v1202 = vld [vmem:[%s375] ss:$8 sm:$0x3]
        %v1204 = vlaneseq
        %v1205 = vshrl.u32 %v1204, 7
        %v1206 = vsub.s32 0, %v1205
        %v1207 = vrot.slane %v1202, %v1206
        %v1208 = vlaneseq
        %v1209 = vshrl.u32 %v1208, 7
        %v1210 = vsub.s32 1, %v1209
        %v1211 = vrot.slane %v1202, %v1210
        %v1214 = vmul.f32 %v1200, %v1207
        %v1215 = vmul.f32 %v1201, %v1211
        %1216 = vst [vmem:[#allocation2 + $0x60] sm:$0xff] %v1214
        %1217 = vst [vmem:[#allocation2 + $0x68] sm:$0xff] %v1215
        %1218 = vrot.lane.b32.xlu0 %v1078, 112
        %v1219 = vpop.permute.xlu0 %1218
        %1220 = vrot.lane.b32.xlu0 %v1080, 112
        %v1221 = vpop.permute.xlu0 %1220
        %v1222 = vsel %vm396, %v1219, %v1221
        %v1223 = vsel %vm396, %v1221, %v1219
        %v1224 = vld [vmem:[%s399] ss:$8 sm:$0x3]
        %v1226 = vlaneseq
        %v1227 = vshrl.u32 %v1226, 7
        %v1228 = vsub.s32 0, %v1227
        %v1229 = vrot.slane %v1224, %v1228
        %v1230 = vlaneseq
        %v1231 = vshrl.u32 %v1230, 7
        %v1232 = vsub.s32 1, %v1231
        %v1233 = vrot.slane %v1224, %v1232
        %v1236 = vmul.f32 %v1222, %v1229
        %v1237 = vmul.f32 %v1223, %v1233
        %1238 = vst [vmem:[#allocation2 + $0x70] sm:$0xff] %v1236
        %1239 = vst [vmem:[#allocation2 + $0x78] sm:$0xff] %v1237
        %1240 = vrot.lane.b32.xlu0 %v1078, 111
        %v1241 = vpop.permute.xlu0 %1240
        %1242 = vrot.lane.b32.xlu0 %v1080, 111
        %v1243 = vpop.permute.xlu0 %1242
        %v1244 = vsel %vm420, %v1241, %v1243
        %v1245 = vsel %vm420, %v1243, %v1241
        %v1246 = vld [vmem:[%s423] ss:$8 sm:$0x3]
        %v1248 = vlaneseq
        %v1249 = vshrl.u32 %v1248, 7
        %v1250 = vsub.s32 0, %v1249
        %v1251 = vrot.slane %v1246, %v1250
        %v1252 = vlaneseq
        %v1253 = vshrl.u32 %v1252, 7
        %v1254 = vsub.s32 1, %v1253
        %v1255 = vrot.slane %v1246, %v1254
        %v1258 = vmul.f32 %v1244, %v1251
        %v1259 = vmul.f32 %v1245, %v1255
        %1260 = vst [vmem:[#allocation2 + $0x80] sm:$0xff] %v1258
        %1261 = vst [vmem:[#allocation2 + $0x88] sm:$0xff] %v1259
        %s1262 = scalar_lea.vmem [#allocation6], 24
        %v1263 = vld [vmem:[%s1262] sm:$0xff]
        %v1264 = vld [vmem:[#allocation2] sm:$0xff]
        %v1265 = vld [vmem:[#allocation2 + $0x8] sm:$0xff]
        %v1266 = vld [vmem:[#allocation2 + $0x10] sm:$0xff]
        %v1267 = vld [vmem:[#allocation2 + $0x18] sm:$0xff]
        %v1268 = vld [vmem:[#allocation2 + $0x20] sm:$0xff]
        %v1269 = vld [vmem:[#allocation2 + $0x28] sm:$0xff]
        %v1270 = vld [vmem:[#allocation2 + $0x30] sm:$0xff]
        %v1271 = vld [vmem:[#allocation2 + $0x38] sm:$0xff]
        %v1272 = vld [vmem:[#allocation2 + $0x40] sm:$0xff]
        %v1273 = vld [vmem:[#allocation2 + $0x48] sm:$0xff]
        %v1274 = vld [vmem:[#allocation2 + $0x50] sm:$0xff]
        %v1275 = vld [vmem:[#allocation2 + $0x58] sm:$0xff]
        %v1276 = vld [vmem:[#allocation2 + $0x60] sm:$0xff]
        %v1277 = vld [vmem:[#allocation2 + $0x68] sm:$0xff]
        %v1278 = vld [vmem:[#allocation2 + $0x70] sm:$0xff]
        %v1279 = vld [vmem:[#allocation2 + $0x78] sm:$0xff]
        %v1280 = vld [vmem:[#allocation2 + $0x80] sm:$0xff]
        %v1281 = vld [vmem:[#allocation2 + $0x88] sm:$0xff]
        %v1283 = vsel %vm459, %v1263, 0
        %1285 = vmatprep.subr.mxu0 %v1265
        %1286 = vmatpush1.msra.mxu0 %v1264
        %1287 = vmatprep.subr.mxu0 %v1267
        %1288 = vmatpush1.msra.mxu0 %v1266
        %1289 = vmatprep.subr.mxu0 %v1269
        %1290 = vmatpush1.msra.mxu0 %v1268
        %1291 = vmatprep.subr.mxu0 %v1271
        %1292 = vmatpush1.msra.mxu0 %v1270
        %1293 = vmatprep.subr.mxu0 %v1273
        %1294 = vmatpush1.msra.mxu0 %v1272
        %1295 = vmatprep.subr.mxu0 %v1275
        %1296 = vmatpush1.msra.mxu0 %v1274
        %1297 = vmatprep.subr.mxu0 %v1277
        %1298 = vmatpush1.msra.mxu0 %v1276
        %1299 = vmatprep.subr.mxu0 %v1279
        %1300 = vmatpush1.msra.mxu0 %v1278
        %1301 = vmatprep.subr.mxu0 %v1281
        %1302 = vmatpush1.msra.mxu0 %v1280
        %1303 = vmatprep.subr.mxu0 0.0
        %1304 = vmatpush1.msra.mxu0 0.0
        %1305 = vmatprep.subr.mxu0 0.0
        %1306 = vmatpush1.msra.mxu0 0.0
        %1307 = vmatprep.subr.mxu0 0.0
        %1308 = vmatpush1.msra.mxu0 0.0
        %1309 = vmatprep.subr.mxu0 0.0
        %1310 = vmatpush1.msra.mxu0 0.0
        %1311 = vmatprep.subr.mxu0 0.0
        %1312 = vmatpush1.msra.mxu0 0.0
        %1313 = vmatprep.subr.mxu0 0.0
        %1314 = vmatpush1.msra.mxu0 0.0
        %1315 = vmatprep.subr.mxu0 0.0
        %1316 = vmatpush1.msra.mxu0 0.0
        %1317 = vmatprep.subr.mxu0 0.0
        %1318 = vmatpush1.msra.mxu0 0.0
        %1319 = vmatprep.subr.mxu0 0.0
        %1320 = vmatpush1.msra.mxu0 0.0
        %1321 = vmatprep.subr.mxu0 0.0
        %1322 = vmatpush1.msra.mxu0 0.0
        %1323 = vmatprep.subr.mxu0 0.0
        %1324 = vmatpush1.msra.mxu0 0.0
        %1325 = vmatprep.subr.mxu0 0.0
        %1326 = vmatpush1.msra.mxu0 0.0
        %1327 = vmatprep.subr.mxu0 0.0
        %1328 = vmatpush1.msra.mxu0 0.0
        %1329 = vmatprep.subr.mxu0 0.0
        %1330 = vmatpush1.msra.mxu0 0.0
        %1331 = vmatprep.subr.mxu0 0.0
        %1332 = vmatpush1.msra.mxu0 0.0
        %1333 = vmatprep.subr.mxu0 0.0
        %1334 = vmatpush1.msra.mxu0 0.0
        %1335 = vmatprep.subr.mxu0 0.0
        %1336 = vmatpush1.msra.mxu0 0.0
        %1337 = vmatprep.subr.mxu0 0.0
        %1338 = vmatpush1.msra.mxu0 0.0
        %1339 = vmatprep.subr.mxu0 0.0
        %1340 = vmatpush1.msra.mxu0 0.0
        %1341 = vmatprep.subr.mxu0 0.0
        %1342 = vmatpush1.msra.mxu0 0.0
        %1343 = vmatprep.subr.mxu0 0.0
        %1344 = vmatpush1.msra.mxu0 0.0
        %1345 = vmatprep.subr.mxu0 0.0
        %1346 = vmatpush1.msra.mxu0 0.0
        %1347 = vmatprep.subr.mxu0 0.0
        %1348 = vmatpush1.msra.mxu0 0.0
        %1349 = vmatprep.mubr.f32.mxu0 0.0
        %1350 = vmatmul.mubr.f32.gmra.mrb[0].mxu0 %v1283
        %v1351 = vpop.f32.mrb[0].mxu0
        %v1352 = vadd.f32 0.0, %v1351
        %v1353 = vpop.f32.mrb[0].mxu0
        %v1354 = vadd.f32 0.0, %v1353
        %1355 = vdwg.mxu0
        %v1356 = vadd.f32 %v1082, %v1352
        %v1357 = vadd.f32 %v1083, %v1354
        %1358 = vrot.lane.b32.xlu0 %v1352, 17
        %v1359 = vpop.permute.xlu0 %1358
        %1360 = vrot.lane.b32.xlu0 %v1354, 17
        %v1361 = vpop.permute.xlu0 %1360
        %v1362 = vsel %vm251, %v1359, %v1361
        %v1363 = vsel %vm251, %v1361, %v1359
        %v1364 = vld [vmem:[#allocation8] ss:$8 sm:$0x3]
        %v1366 = vlaneseq
        %v1367 = vshrl.u32 %v1366, 7
        %v1368 = vsub.s32 0, %v1367
        %v1369 = vrot.slane %v1364, %v1368
        %v1370 = vlaneseq
        %v1371 = vshrl.u32 %v1370, 7
        %v1372 = vsub.s32 1, %v1371
        %v1373 = vrot.slane %v1364, %v1372
        %v1376 = vmul.f32 %v1363, %v1369
        %v1377 = vmul.f32 %v1362, %v1373
        %1378 = vst [vmem:[#allocation2] sm:$0xff] %v1376
        %1379 = vst [vmem:[#allocation2 + $0x8] sm:$0xff] %v1377
        %1380 = vrot.lane.b32.xlu0 %v1352, 16
        %v1381 = vpop.permute.xlu0 %1380
        %1382 = vrot.lane.b32.xlu0 %v1354, 16
        %v1383 = vpop.permute.xlu0 %1382
        %v1384 = vsel %vm274, %v1381, %v1383
        %v1385 = vsel %vm274, %v1383, %v1381
        %v1386 = vld [vmem:[%s277] ss:$8 sm:$0x3]
        %v1388 = vlaneseq
        %v1389 = vshrl.u32 %v1388, 7
        %v1390 = vsub.s32 0, %v1389
        %v1391 = vrot.slane %v1386, %v1390
        %v1392 = vlaneseq
        %v1393 = vshrl.u32 %v1392, 7
        %v1394 = vsub.s32 1, %v1393
        %v1395 = vrot.slane %v1386, %v1394
        %v1398 = vmul.f32 %v1385, %v1391
        %v1399 = vmul.f32 %v1384, %v1395
        %1400 = vst [vmem:[#allocation2 + $0x10] sm:$0xff] %v1398
        %1401 = vst [vmem:[#allocation2 + $0x18] sm:$0xff] %v1399
        %1402 = vrot.lane.b32.xlu0 %v1352, 15
        %v1403 = vpop.permute.xlu0 %1402
        %1404 = vrot.lane.b32.xlu0 %v1354, 15
        %v1405 = vpop.permute.xlu0 %1404
        %v1406 = vsel %vm298, %v1403, %v1405
        %v1407 = vsel %vm298, %v1405, %v1403
        %v1408 = vld [vmem:[%s301] ss:$8 sm:$0x3]
        %v1410 = vlaneseq
        %v1411 = vshrl.u32 %v1410, 7
        %v1412 = vsub.s32 0, %v1411
        %v1413 = vrot.slane %v1408, %v1412
        %v1414 = vlaneseq
        %v1415 = vshrl.u32 %v1414, 7
        %v1416 = vsub.s32 1, %v1415
        %v1417 = vrot.slane %v1408, %v1416
        %v1420 = vmul.f32 %v1407, %v1413
        %v1421 = vmul.f32 %v1406, %v1417
        %1422 = vst [vmem:[#allocation2 + $0x20] sm:$0xff] %v1420
        %1423 = vst [vmem:[#allocation2 + $0x28] sm:$0xff] %v1421
        %1424 = vrot.lane.b32.xlu0 %v1352, 1
        %v1425 = vpop.permute.xlu0 %1424
        %1426 = vrot.lane.b32.xlu0 %v1354, 1
        %v1427 = vpop.permute.xlu0 %1426
        %v1428 = vsel %vm322, %v1425, %v1427
        %v1429 = vsel %vm322, %v1427, %v1425
        %v1430 = vld [vmem:[%s325] ss:$8 sm:$0x3]
        %v1432 = vlaneseq
        %v1433 = vshrl.u32 %v1432, 7
        %v1434 = vsub.s32 0, %v1433
        %v1435 = vrot.slane %v1430, %v1434
        %v1436 = vlaneseq
        %v1437 = vshrl.u32 %v1436, 7
        %v1438 = vsub.s32 1, %v1437
        %v1439 = vrot.slane %v1430, %v1438
        %v1442 = vmul.f32 %v1429, %v1435
        %v1443 = vmul.f32 %v1428, %v1439
        %1444 = vst [vmem:[#allocation2 + $0x30] sm:$0xff] %v1442
        %1445 = vst [vmem:[#allocation2 + $0x38] sm:$0xff] %v1443
        %1446 = vst [vmem:[#allocation2 + $0x40] sm:$0xff] %v1352
        %1447 = vst [vmem:[#allocation2 + $0x48] sm:$0xff] %v1354
        %1448 = vrot.lane.b32.xlu0 %v1352, 127
        %v1449 = vpop.permute.xlu0 %1448
        %1450 = vrot.lane.b32.xlu0 %v1354, 127
        %v1451 = vpop.permute.xlu0 %1450
        %v1452 = vsel %vm348, %v1449, %v1451
        %v1453 = vsel %vm348, %v1451, %v1449
        %v1454 = vld [vmem:[%s351] ss:$8 sm:$0x3]
        %v1456 = vlaneseq
        %v1457 = vshrl.u32 %v1456, 7
        %v1458 = vsub.s32 0, %v1457
        %v1459 = vrot.slane %v1454, %v1458
        %v1460 = vlaneseq
        %v1461 = vshrl.u32 %v1460, 7
        %v1462 = vsub.s32 1, %v1461
        %v1463 = vrot.slane %v1454, %v1462
        %v1466 = vmul.f32 %v1452, %v1459
        %v1467 = vmul.f32 %v1453, %v1463
        %1468 = vst [vmem:[#allocation2 + $0x50] sm:$0xff] %v1466
        %1469 = vst [vmem:[#allocation2 + $0x58] sm:$0xff] %v1467
        %1470 = vrot.lane.b32.xlu0 %v1352, 113
        %v1471 = vpop.permute.xlu0 %1470
        %1472 = vrot.lane.b32.xlu0 %v1354, 113
        %v1473 = vpop.permute.xlu0 %1472
        %v1474 = vsel %vm372, %v1471, %v1473
        %v1475 = vsel %vm372, %v1473, %v1471
        %v1476 = vld [vmem:[%s375] ss:$8 sm:$0x3]
        %v1478 = vlaneseq
        %v1479 = vshrl.u32 %v1478, 7
        %v1480 = vsub.s32 0, %v1479
        %v1481 = vrot.slane %v1476, %v1480
        %v1482 = vlaneseq
        %v1483 = vshrl.u32 %v1482, 7
        %v1484 = vsub.s32 1, %v1483
        %v1485 = vrot.slane %v1476, %v1484
        %v1488 = vmul.f32 %v1474, %v1481
        %v1489 = vmul.f32 %v1475, %v1485
        %1490 = vst [vmem:[#allocation2 + $0x60] sm:$0xff] %v1488
        %1491 = vst [vmem:[#allocation2 + $0x68] sm:$0xff] %v1489
        %1492 = vrot.lane.b32.xlu0 %v1352, 112
        %v1493 = vpop.permute.xlu0 %1492
        %1494 = vrot.lane.b32.xlu0 %v1354, 112
        %v1495 = vpop.permute.xlu0 %1494
        %v1496 = vsel %vm396, %v1493, %v1495
        %v1497 = vsel %vm396, %v1495, %v1493
        %v1498 = vld [vmem:[%s399] ss:$8 sm:$0x3]
        %v1500 = vlaneseq
        %v1501 = vshrl.u32 %v1500, 7
        %v1502 = vsub.s32 0, %v1501
        %v1503 = vrot.slane %v1498, %v1502
        %v1504 = vlaneseq
        %v1505 = vshrl.u32 %v1504, 7
        %v1506 = vsub.s32 1, %v1505
        %v1507 = vrot.slane %v1498, %v1506
        %v1510 = vmul.f32 %v1496, %v1503
        %v1511 = vmul.f32 %v1497, %v1507
        %1512 = vst [vmem:[#allocation2 + $0x70] sm:$0xff] %v1510
        %1513 = vst [vmem:[#allocation2 + $0x78] sm:$0xff] %v1511
        %1514 = vrot.lane.b32.xlu0 %v1352, 111
        %v1515 = vpop.permute.xlu0 %1514
        %1516 = vrot.lane.b32.xlu0 %v1354, 111
        %v1517 = vpop.permute.xlu0 %1516
        %v1518 = vsel %vm420, %v1515, %v1517
        %v1519 = vsel %vm420, %v1517, %v1515
        %v1520 = vld [vmem:[%s423] ss:$8 sm:$0x3]
        %v1522 = vlaneseq
        %v1523 = vshrl.u32 %v1522, 7
        %v1524 = vsub.s32 0, %v1523
        %v1525 = vrot.slane %v1520, %v1524
        %v1526 = vlaneseq
        %v1527 = vshrl.u32 %v1526, 7
        %v1528 = vsub.s32 1, %v1527
        %v1529 = vrot.slane %v1520, %v1528
        %v1532 = vmul.f32 %v1518, %v1525
        %v1533 = vmul.f32 %v1519, %v1529
        %1534 = vst [vmem:[#allocation2 + $0x80] sm:$0xff] %v1532
        %1535 = vst [vmem:[#allocation2 + $0x88] sm:$0xff] %v1533
        %s1536 = scalar_lea.vmem [#allocation6], 32
        %v1537 = vld [vmem:[%s1536] sm:$0xff]
        %v1538 = vld [vmem:[#allocation2] sm:$0xff]
        %v1539 = vld [vmem:[#allocation2 + $0x8] sm:$0xff]
        %v1540 = vld [vmem:[#allocation2 + $0x10] sm:$0xff]
        %v1541 = vld [vmem:[#allocation2 + $0x18] sm:$0xff]
        %v1542 = vld [vmem:[#allocation2 + $0x20] sm:$0xff]
        %v1543 = vld [vmem:[#allocation2 + $0x28] sm:$0xff]
        %v1544 = vld [vmem:[#allocation2 + $0x30] sm:$0xff]
        %v1545 = vld [vmem:[#allocation2 + $0x38] sm:$0xff]
        %v1546 = vld [vmem:[#allocation2 + $0x40] sm:$0xff]
        %v1547 = vld [vmem:[#allocation2 + $0x48] sm:$0xff]
        %v1548 = vld [vmem:[#allocation2 + $0x50] sm:$0xff]
        %v1549 = vld [vmem:[#allocation2 + $0x58] sm:$0xff]
        %v1550 = vld [vmem:[#allocation2 + $0x60] sm:$0xff]
        %v1551 = vld [vmem:[#allocation2 + $0x68] sm:$0xff]
        %v1552 = vld [vmem:[#allocation2 + $0x70] sm:$0xff]
        %v1553 = vld [vmem:[#allocation2 + $0x78] sm:$0xff]
        %v1554 = vld [vmem:[#allocation2 + $0x80] sm:$0xff]
        %v1555 = vld [vmem:[#allocation2 + $0x88] sm:$0xff]
        %v1557 = vsel %vm459, %v1537, 0
        %1559 = vmatprep.subr.mxu0 %v1539
        %1560 = vmatpush1.msra.mxu0 %v1538
        %1561 = vmatprep.subr.mxu0 %v1541
        %1562 = vmatpush1.msra.mxu0 %v1540
        %1563 = vmatprep.subr.mxu0 %v1543
        %1564 = vmatpush1.msra.mxu0 %v1542
        %1565 = vmatprep.subr.mxu0 %v1545
        %1566 = vmatpush1.msra.mxu0 %v1544
        %1567 = vmatprep.subr.mxu0 %v1547
        %1568 = vmatpush1.msra.mxu0 %v1546
        %1569 = vmatprep.subr.mxu0 %v1549
        %1570 = vmatpush1.msra.mxu0 %v1548
        %1571 = vmatprep.subr.mxu0 %v1551
        %1572 = vmatpush1.msra.mxu0 %v1550
        %1573 = vmatprep.subr.mxu0 %v1553
        %1574 = vmatpush1.msra.mxu0 %v1552
        %1575 = vmatprep.subr.mxu0 %v1555
        %1576 = vmatpush1.msra.mxu0 %v1554
        %1577 = vmatprep.subr.mxu0 0.0
        %1578 = vmatpush1.msra.mxu0 0.0
        %1579 = vmatprep.subr.mxu0 0.0
        %1580 = vmatpush1.msra.mxu0 0.0
        %1581 = vmatprep.subr.mxu0 0.0
        %1582 = vmatpush1.msra.mxu0 0.0
        %1583 = vmatprep.subr.mxu0 0.0
        %1584 = vmatpush1.msra.mxu0 0.0
        %1585 = vmatprep.subr.mxu0 0.0
        %1586 = vmatpush1.msra.mxu0 0.0
        %1587 = vmatprep.subr.mxu0 0.0
        %1588 = vmatpush1.msra.mxu0 0.0
        %1589 = vmatprep.subr.mxu0 0.0
        %1590 = vmatpush1.msra.mxu0 0.0
        %1591 = vmatprep.subr.mxu0 0.0
        %1592 = vmatpush1.msra.mxu0 0.0
        %1593 = vmatprep.subr.mxu0 0.0
        %1594 = vmatpush1.msra.mxu0 0.0
        %1595 = vmatprep.subr.mxu0 0.0
        %1596 = vmatpush1.msra.mxu0 0.0
        %1597 = vmatprep.subr.mxu0 0.0
        %1598 = vmatpush1.msra.mxu0 0.0
        %1599 = vmatprep.subr.mxu0 0.0
        %1600 = vmatpush1.msra.mxu0 0.0
        %1601 = vmatprep.subr.mxu0 0.0
        %1602 = vmatpush1.msra.mxu0 0.0
        %1603 = vmatprep.subr.mxu0 0.0
        %1604 = vmatpush1.msra.mxu0 0.0
        %1605 = vmatprep.subr.mxu0 0.0
        %1606 = vmatpush1.msra.mxu0 0.0
        %1607 = vmatprep.subr.mxu0 0.0
        %1608 = vmatpush1.msra.mxu0 0.0
        %1609 = vmatprep.subr.mxu0 0.0
        %1610 = vmatpush1.msra.mxu0 0.0
        %1611 = vmatprep.subr.mxu0 0.0
        %1612 = vmatpush1.msra.mxu0 0.0
        %1613 = vmatprep.subr.mxu0 0.0
        %1614 = vmatpush1.msra.mxu0 0.0
        %1615 = vmatprep.subr.mxu0 0.0
        %1616 = vmatpush1.msra.mxu0 0.0
        %1617 = vmatprep.subr.mxu0 0.0
        %1618 = vmatpush1.msra.mxu0 0.0
        %1619 = vmatprep.subr.mxu0 0.0
        %1620 = vmatpush1.msra.mxu0 0.0
        %1621 = vmatprep.subr.mxu0 0.0
        %1622 = vmatpush1.msra.mxu0 0.0
        %1623 = vmatprep.mubr.f32.mxu0 0.0
        %1624 = vmatmul.mubr.f32.gmra.mrb[0].mxu0 %v1557
        %v1625 = vpop.f32.mrb[0].mxu0
        %v1626 = vadd.f32 0.0, %v1625
        %v1627 = vpop.f32.mrb[0].mxu0
        %v1628 = vadd.f32 0.0, %v1627
        %1629 = vdwg.mxu0
        %v1630 = vadd.f32 %v1356, %v1626
        %v1631 = vadd.f32 %v1357, %v1628
        %1632 = vrot.lane.b32.xlu0 %v1626, 17
        %v1633 = vpop.permute.xlu0 %1632
        %1634 = vrot.lane.b32.xlu0 %v1628, 17
        %v1635 = vpop.permute.xlu0 %1634
        %v1636 = vsel %vm251, %v1633, %v1635
        %v1637 = vsel %vm251, %v1635, %v1633
        %v1638 = vld [vmem:[#allocation8] ss:$8 sm:$0x3]
        %v1640 = vlaneseq
        %v1641 = vshrl.u32 %v1640, 7
        %v1642 = vsub.s32 0, %v1641
        %v1643 = vrot.slane %v1638, %v1642
        %v1644 = vlaneseq
        %v1645 = vshrl.u32 %v1644, 7
        %v1646 = vsub.s32 1, %v1645
        %v1647 = vrot.slane %v1638, %v1646
        %v1650 = vmul.f32 %v1637, %v1643
        %v1651 = vmul.f32 %v1636, %v1647
        %1652 = vst [vmem:[#allocation2] sm:$0xff] %v1650
        %1653 = vst [vmem:[#allocation2 + $0x8] sm:$0xff] %v1651
        %1654 = vrot.lane.b32.xlu0 %v1626, 16
        %v1655 = vpop.permute.xlu0 %1654
        %1656 = vrot.lane.b32.xlu0 %v1628, 16
        %v1657 = vpop.permute.xlu0 %1656
        %v1658 = vsel %vm274, %v1655, %v1657
        %v1659 = vsel %vm274, %v1657, %v1655
        %v1660 = vld [vmem:[%s277] ss:$8 sm:$0x3]
        %v1662 = vlaneseq
        %v1663 = vshrl.u32 %v1662, 7
        %v1664 = vsub.s32 0, %v1663
        %v1665 = vrot.slane %v1660, %v1664
        %v1666 = vlaneseq
        %v1667 = vshrl.u32 %v1666, 7
        %v1668 = vsub.s32 1, %v1667
        %v1669 = vrot.slane %v1660, %v1668
        %v1672 = vmul.f32 %v1659, %v1665
        %v1673 = vmul.f32 %v1658, %v1669
        %1674 = vst [vmem:[#allocation2 + $0x10] sm:$0xff] %v1672
        %1675 = vst [vmem:[#allocation2 + $0x18] sm:$0xff] %v1673
        %1676 = vrot.lane.b32.xlu0 %v1626, 15
        %v1677 = vpop.permute.xlu0 %1676
        %1678 = vrot.lane.b32.xlu0 %v1628, 15
        %v1679 = vpop.permute.xlu0 %1678
        %v1680 = vsel %vm298, %v1677, %v1679
        %v1681 = vsel %vm298, %v1679, %v1677
        %v1682 = vld [vmem:[%s301] ss:$8 sm:$0x3]
        %v1684 = vlaneseq
        %v1685 = vshrl.u32 %v1684, 7
        %v1686 = vsub.s32 0, %v1685
        %v1687 = vrot.slane %v1682, %v1686
        %v1688 = vlaneseq
        %v1689 = vshrl.u32 %v1688, 7
        %v1690 = vsub.s32 1, %v1689
        %v1691 = vrot.slane %v1682, %v1690
        %v1694 = vmul.f32 %v1681, %v1687
        %v1695 = vmul.f32 %v1680, %v1691
        %1696 = vst [vmem:[#allocation2 + $0x20] sm:$0xff] %v1694
        %1697 = vst [vmem:[#allocation2 + $0x28] sm:$0xff] %v1695
        %1698 = vrot.lane.b32.xlu0 %v1626, 1
        %v1699 = vpop.permute.xlu0 %1698
        %1700 = vrot.lane.b32.xlu0 %v1628, 1
        %v1701 = vpop.permute.xlu0 %1700
        %v1702 = vsel %vm322, %v1699, %v1701
        %v1703 = vsel %vm322, %v1701, %v1699
        %v1704 = vld [vmem:[%s325] ss:$8 sm:$0x3]
        %v1706 = vlaneseq
        %v1707 = vshrl.u32 %v1706, 7
        %v1708 = vsub.s32 0, %v1707
        %v1709 = vrot.slane %v1704, %v1708
        %v1710 = vlaneseq
        %v1711 = vshrl.u32 %v1710, 7
        %v1712 = vsub.s32 1, %v1711
        %v1713 = vrot.slane %v1704, %v1712
        %v1716 = vmul.f32 %v1703, %v1709
        %v1717 = vmul.f32 %v1702, %v1713
        %1718 = vst [vmem:[#allocation2 + $0x30] sm:$0xff] %v1716
        %1719 = vst [vmem:[#allocation2 + $0x38] sm:$0xff] %v1717
        %1720 = vst [vmem:[#allocation2 + $0x40] sm:$0xff] %v1626
        %1721 = vst [vmem:[#allocation2 + $0x48] sm:$0xff] %v1628
        %1722 = vrot.lane.b32.xlu0 %v1626, 127
        %v1723 = vpop.permute.xlu0 %1722
        %1724 = vrot.lane.b32.xlu0 %v1628, 127
        %v1725 = vpop.permute.xlu0 %1724
        %v1726 = vsel %vm348, %v1723, %v1725
        %v1727 = vsel %vm348, %v1725, %v1723
        %v1728 = vld [vmem:[%s351] ss:$8 sm:$0x3]
        %v1730 = vlaneseq
        %v1731 = vshrl.u32 %v1730, 7
        %v1732 = vsub.s32 0, %v1731
        %v1733 = vrot.slane %v1728, %v1732
        %v1734 = vlaneseq
        %v1735 = vshrl.u32 %v1734, 7
        %v1736 = vsub.s32 1, %v1735
        %v1737 = vrot.slane %v1728, %v1736
        %v1740 = vmul.f32 %v1726, %v1733
        %v1741 = vmul.f32 %v1727, %v1737
        %1742 = vst [vmem:[#allocation2 + $0x50] sm:$0xff] %v1740
        %1743 = vst [vmem:[#allocation2 + $0x58] sm:$0xff] %v1741
        %1744 = vrot.lane.b32.xlu0 %v1626, 113
        %v1745 = vpop.permute.xlu0 %1744
        %1746 = vrot.lane.b32.xlu0 %v1628, 113
        %v1747 = vpop.permute.xlu0 %1746
        %v1748 = vsel %vm372, %v1745, %v1747
        %v1749 = vsel %vm372, %v1747, %v1745
        %v1750 = vld [vmem:[%s375] ss:$8 sm:$0x3]
        %v1752 = vlaneseq
        %v1753 = vshrl.u32 %v1752, 7
        %v1754 = vsub.s32 0, %v1753
        %v1755 = vrot.slane %v1750, %v1754
        %v1756 = vlaneseq
        %v1757 = vshrl.u32 %v1756, 7
        %v1758 = vsub.s32 1, %v1757
        %v1759 = vrot.slane %v1750, %v1758
        %v1762 = vmul.f32 %v1748, %v1755
        %v1763 = vmul.f32 %v1749, %v1759
        %1764 = vst [vmem:[#allocation2 + $0x60] sm:$0xff] %v1762
        %1765 = vst [vmem:[#allocation2 + $0x68] sm:$0xff] %v1763
        %1766 = vrot.lane.b32.xlu0 %v1626, 112
        %v1767 = vpop.permute.xlu0 %1766
        %1768 = vrot.lane.b32.xlu0 %v1628, 112
        %v1769 = vpop.permute.xlu0 %1768
        %v1770 = vsel %vm396, %v1767, %v1769
        %v1771 = vsel %vm396, %v1769, %v1767
        %v1772 = vld [vmem:[%s399] ss:$8 sm:$0x3]
        %v1774 = vlaneseq
        %v1775 = vshrl.u32 %v1774, 7
        %v1776 = vsub.s32 0, %v1775
        %v1777 = vrot.slane %v1772, %v1776
        %v1778 = vlaneseq
        %v1779 = vshrl.u32 %v1778, 7
        %v1780 = vsub.s32 1, %v1779
        %v1781 = vrot.slane %v1772, %v1780
        %v1784 = vmul.f32 %v1770, %v1777
        %v1785 = vmul.f32 %v1771, %v1781
        %1786 = vst [vmem:[#allocation2 + $0x70] sm:$0xff] %v1784
        %1787 = vst [vmem:[#allocation2 + $0x78] sm:$0xff] %v1785
        %1788 = vrot.lane.b32.xlu0 %v1626, 111
        %v1789 = vpop.permute.xlu0 %1788
        %1790 = vrot.lane.b32.xlu0 %v1628, 111
        %v1791 = vpop.permute.xlu0 %1790
        %v1792 = vsel %vm420, %v1789, %v1791
        %v1793 = vsel %vm420, %v1791, %v1789
        %v1794 = vld [vmem:[%s423] ss:$8 sm:$0x3]
        %v1796 = vlaneseq
        %v1797 = vshrl.u32 %v1796, 7
        %v1798 = vsub.s32 0, %v1797
        %v1799 = vrot.slane %v1794, %v1798
        %v1800 = vlaneseq
        %v1801 = vshrl.u32 %v1800, 7
        %v1802 = vsub.s32 1, %v1801
        %v1803 = vrot.slane %v1794, %v1802
        %v1806 = vmul.f32 %v1792, %v1799
        %v1807 = vmul.f32 %v1793, %v1803
        %1808 = vst [vmem:[#allocation2 + $0x80] sm:$0xff] %v1806
        %1809 = vst [vmem:[#allocation2 + $0x88] sm:$0xff] %v1807
        %s1810 = scalar_lea.vmem [#allocation6], 40
        %v1811 = vld [vmem:[%s1810] sm:$0xff]
        %v1812 = vld [vmem:[#allocation2] sm:$0xff]
        %v1813 = vld [vmem:[#allocation2 + $0x8] sm:$0xff]
        %v1814 = vld [vmem:[#allocation2 + $0x10] sm:$0xff]
        %v1815 = vld [vmem:[#allocation2 + $0x18] sm:$0xff]
        %v1816 = vld [vmem:[#allocation2 + $0x20] sm:$0xff]
        %v1817 = vld [vmem:[#allocation2 + $0x28] sm:$0xff]
        %v1818 = vld [vmem:[#allocation2 + $0x30] sm:$0xff]
        %v1819 = vld [vmem:[#allocation2 + $0x38] sm:$0xff]
        %v1820 = vld [vmem:[#allocation2 + $0x40] sm:$0xff]
        %v1821 = vld [vmem:[#allocation2 + $0x48] sm:$0xff]
        %v1822 = vld [vmem:[#allocation2 + $0x50] sm:$0xff]
        %v1823 = vld [vmem:[#allocation2 + $0x58] sm:$0xff]
        %v1824 = vld [vmem:[#allocation2 + $0x60] sm:$0xff]
        %v1825 = vld [vmem:[#allocation2 + $0x68] sm:$0xff]
        %v1826 = vld [vmem:[#allocation2 + $0x70] sm:$0xff]
        %v1827 = vld [vmem:[#allocation2 + $0x78] sm:$0xff]
        %v1828 = vld [vmem:[#allocation2 + $0x80] sm:$0xff]
        %v1829 = vld [vmem:[#allocation2 + $0x88] sm:$0xff]
        %v1831 = vsel %vm459, %v1811, 0
        %1833 = vmatprep.subr.mxu0 %v1813
        %1834 = vmatpush1.msra.mxu0 %v1812
        %1835 = vmatprep.subr.mxu0 %v1815
        %1836 = vmatpush1.msra.mxu0 %v1814
        %1837 = vmatprep.subr.mxu0 %v1817
        %1838 = vmatpush1.msra.mxu0 %v1816
        %1839 = vmatprep.subr.mxu0 %v1819
        %1840 = vmatpush1.msra.mxu0 %v1818
        %1841 = vmatprep.subr.mxu0 %v1821
        %1842 = vmatpush1.msra.mxu0 %v1820
        %1843 = vmatprep.subr.mxu0 %v1823
        %1844 = vmatpush1.msra.mxu0 %v1822
        %1845 = vmatprep.subr.mxu0 %v1825
        %1846 = vmatpush1.msra.mxu0 %v1824
        %1847 = vmatprep.subr.mxu0 %v1827
        %1848 = vmatpush1.msra.mxu0 %v1826
        %1849 = vmatprep.subr.mxu0 %v1829
        %1850 = vmatpush1.msra.mxu0 %v1828
        %1851 = vmatprep.subr.mxu0 0.0
        %1852 = vmatpush1.msra.mxu0 0.0
        %1853 = vmatprep.subr.mxu0 0.0
        %1854 = vmatpush1.msra.mxu0 0.0
        %1855 = vmatprep.subr.mxu0 0.0
        %1856 = vmatpush1.msra.mxu0 0.0
        %1857 = vmatprep.subr.mxu0 0.0
        %1858 = vmatpush1.msra.mxu0 0.0
        %1859 = vmatprep.subr.mxu0 0.0
        %1860 = vmatpush1.msra.mxu0 0.0
        %1861 = vmatprep.subr.mxu0 0.0
        %1862 = vmatpush1.msra.mxu0 0.0
        %1863 = vmatprep.subr.mxu0 0.0
        %1864 = vmatpush1.msra.mxu0 0.0
        %1865 = vmatprep.subr.mxu0 0.0
        %1866 = vmatpush1.msra.mxu0 0.0
        %1867 = vmatprep.subr.mxu0 0.0
        %1868 = vmatpush1.msra.mxu0 0.0
        %1869 = vmatprep.subr.mxu0 0.0
        %1870 = vmatpush1.msra.mxu0 0.0
        %1871 = vmatprep.subr.mxu0 0.0
        %1872 = vmatpush1.msra.mxu0 0.0
        %1873 = vmatprep.subr.mxu0 0.0
        %1874 = vmatpush1.msra.mxu0 0.0
        %1875 = vmatprep.subr.mxu0 0.0
        %1876 = vmatpush1.msra.mxu0 0.0
        %1877 = vmatprep.subr.mxu0 0.0
        %1878 = vmatpush1.msra.mxu0 0.0
        %1879 = vmatprep.subr.mxu0 0.0
        %1880 = vmatpush1.msra.mxu0 0.0
        %1881 = vmatprep.subr.mxu0 0.0
        %1882 = vmatpush1.msra.mxu0 0.0
        %1883 = vmatprep.subr.mxu0 0.0
        %1884 = vmatpush1.msra.mxu0 0.0
        %1885 = vmatprep.subr.mxu0 0.0
        %1886 = vmatpush1.msra.mxu0 0.0
        %1887 = vmatprep.subr.mxu0 0.0
        %1888 = vmatpush1.msra.mxu0 0.0
        %1889 = vmatprep.subr.mxu0 0.0
        %1890 = vmatpush1.msra.mxu0 0.0
        %1891 = vmatprep.subr.mxu0 0.0
        %1892 = vmatpush1.msra.mxu0 0.0
        %1893 = vmatprep.subr.mxu0 0.0
        %1894 = vmatpush1.msra.mxu0 0.0
        %1895 = vmatprep.subr.mxu0 0.0
        %1896 = vmatpush1.msra.mxu0 0.0
        %1897 = vmatprep.mubr.f32.mxu0 0.0
        %1898 = vmatmul.mubr.f32.gmra.mrb[0].mxu0 %v1831
        %v1899 = vpop.f32.mrb[0].mxu0
        %v1900 = vadd.f32 0.0, %v1899
        %v1901 = vpop.f32.mrb[0].mxu0
        %v1902 = vadd.f32 0.0, %v1901
        %1903 = vdwg.mxu0
        %v1904 = vadd.f32 %v1630, %v1900
        %v1905 = vadd.f32 %v1631, %v1902
        %1906 = vrot.lane.b32.xlu0 %v1900, 17
        %v1907 = vpop.permute.xlu0 %1906
        %1908 = vrot.lane.b32.xlu0 %v1902, 17
        %v1909 = vpop.permute.xlu0 %1908
        %v1910 = vsel %vm251, %v1907, %v1909
        %v1911 = vsel %vm251, %v1909, %v1907
        %v1912 = vld [vmem:[#allocation8] ss:$8 sm:$0x3]
        %v1914 = vlaneseq
        %v1915 = vshrl.u32 %v1914, 7
        %v1916 = vsub.s32 0, %v1915
        %v1917 = vrot.slane %v1912, %v1916
        %v1918 = vlaneseq
        %v1919 = vshrl.u32 %v1918, 7
        %v1920 = vsub.s32 1, %v1919
        %v1921 = vrot.slane %v1912, %v1920
        %v1924 = vmul.f32 %v1911, %v1917
        %v1925 = vmul.f32 %v1910, %v1921
        %1926 = vst [vmem:[#allocation2] sm:$0xff] %v1924
        %1927 = vst [vmem:[#allocation2 + $0x8] sm:$0xff] %v1925
        %1928 = vrot.lane.b32.xlu0 %v1900, 16
        %v1929 = vpop.permute.xlu0 %1928
        %1930 = vrot.lane.b32.xlu0 %v1902, 16
        %v1931 = vpop.permute.xlu0 %1930
        %v1932 = vsel %vm274, %v1929, %v1931
        %v1933 = vsel %vm274, %v1931, %v1929
        %v1934 = vld [vmem:[%s277] ss:$8 sm:$0x3]
        %v1936 = vlaneseq
        %v1937 = vshrl.u32 %v1936, 7
        %v1938 = vsub.s32 0, %v1937
        %v1939 = vrot.slane %v1934, %v1938
        %v1940 = vlaneseq
        %v1941 = vshrl.u32 %v1940, 7
        %v1942 = vsub.s32 1, %v1941
        %v1943 = vrot.slane %v1934, %v1942
        %v1946 = vmul.f32 %v1933, %v1939
        %v1947 = vmul.f32 %v1932, %v1943
        %1948 = vst [vmem:[#allocation2 + $0x10] sm:$0xff] %v1946
        %1949 = vst [vmem:[#allocation2 + $0x18] sm:$0xff] %v1947
        %1950 = vrot.lane.b32.xlu0 %v1900, 15
        %v1951 = vpop.permute.xlu0 %1950
        %1952 = vrot.lane.b32.xlu0 %v1902, 15
        %v1953 = vpop.permute.xlu0 %1952
        %v1954 = vsel %vm298, %v1951, %v1953
        %v1955 = vsel %vm298, %v1953, %v1951
        %v1956 = vld [vmem:[%s301] ss:$8 sm:$0x3]
        %v1958 = vlaneseq
        %v1959 = vshrl.u32 %v1958, 7
        %v1960 = vsub.s32 0, %v1959
        %v1961 = vrot.slane %v1956, %v1960
        %v1962 = vlaneseq
        %v1963 = vshrl.u32 %v1962, 7
        %v1964 = vsub.s32 1, %v1963
        %v1965 = vrot.slane %v1956, %v1964
        %v1968 = vmul.f32 %v1955, %v1961
        %v1969 = vmul.f32 %v1954, %v1965
        %1970 = vst [vmem:[#allocation2 + $0x20] sm:$0xff] %v1968
        %1971 = vst [vmem:[#allocation2 + $0x28] sm:$0xff] %v1969
        %1972 = vrot.lane.b32.xlu0 %v1900, 1
        %v1973 = vpop.permute.xlu0 %1972
        %1974 = vrot.lane.b32.xlu0 %v1902, 1
        %v1975 = vpop.permute.xlu0 %1974
        %v1976 = vsel %vm322, %v1973, %v1975
        %v1977 = vsel %vm322, %v1975, %v1973
        %v1978 = vld [vmem:[%s325] ss:$8 sm:$0x3]
        %v1980 = vlaneseq
        %v1981 = vshrl.u32 %v1980, 7
        %v1982 = vsub.s32 0, %v1981
        %v1983 = vrot.slane %v1978, %v1982
        %v1984 = vlaneseq
        %v1985 = vshrl.u32 %v1984, 7
        %v1986 = vsub.s32 1, %v1985
        %v1987 = vrot.slane %v1978, %v1986
        %v1990 = vmul.f32 %v1977, %v1983
        %v1991 = vmul.f32 %v1976, %v1987
        %1992 = vst [vmem:[#allocation2 + $0x30] sm:$0xff] %v1990
        %1993 = vst [vmem:[#allocation2 + $0x38] sm:$0xff] %v1991
        %1994 = vst [vmem:[#allocation2 + $0x40] sm:$0xff] %v1900
        %1995 = vst [vmem:[#allocation2 + $0x48] sm:$0xff] %v1902
        %1996 = vrot.lane.b32.xlu0 %v1900, 127
        %v1997 = vpop.permute.xlu0 %1996
        %1998 = vrot.lane.b32.xlu0 %v1902, 127
        %v1999 = vpop.permute.xlu0 %1998
        %v2000 = vsel %vm348, %v1997, %v1999
        %v2001 = vsel %vm348, %v1999, %v1997
        %v2002 = vld [vmem:[%s351] ss:$8 sm:$0x3]
        %v2004 = vlaneseq
        %v2005 = vshrl.u32 %v2004, 7
        %v2006 = vsub.s32 0, %v2005
        %v2007 = vrot.slane %v2002, %v2006
        %v2008 = vlaneseq
        %v2009 = vshrl.u32 %v2008, 7
        %v2010 = vsub.s32 1, %v2009
        %v2011 = vrot.slane %v2002, %v2010
        %v2014 = vmul.f32 %v2000, %v2007
        %v2015 = vmul.f32 %v2001, %v2011
        %2016 = vst [vmem:[#allocation2 + $0x50] sm:$0xff] %v2014
        %2017 = vst [vmem:[#allocation2 + $0x58] sm:$0xff] %v2015
        %2018 = vrot.lane.b32.xlu0 %v1900, 113
        %v2019 = vpop.permute.xlu0 %2018
        %2020 = vrot.lane.b32.xlu0 %v1902, 113
        %v2021 = vpop.permute.xlu0 %2020
        %v2022 = vsel %vm372, %v2019, %v2021
        %v2023 = vsel %vm372, %v2021, %v2019
        %v2024 = vld [vmem:[%s375] ss:$8 sm:$0x3]
        %v2026 = vlaneseq
        %v2027 = vshrl.u32 %v2026, 7
        %v2028 = vsub.s32 0, %v2027
        %v2029 = vrot.slane %v2024, %v2028
        %v2030 = vlaneseq
        %v2031 = vshrl.u32 %v2030, 7
        %v2032 = vsub.s32 1, %v2031
        %v2033 = vrot.slane %v2024, %v2032
        %v2036 = vmul.f32 %v2022, %v2029
        %v2037 = vmul.f32 %v2023, %v2033
        %2038 = vst [vmem:[#allocation2 + $0x60] sm:$0xff] %v2036
        %2039 = vst [vmem:[#allocation2 + $0x68] sm:$0xff] %v2037
        %2040 = vrot.lane.b32.xlu0 %v1900, 112
        %v2041 = vpop.permute.xlu0 %2040
        %2042 = vrot.lane.b32.xlu0 %v1902, 112
        %v2043 = vpop.permute.xlu0 %2042
        %v2044 = vsel %vm396, %v2041, %v2043
        %v2045 = vsel %vm396, %v2043, %v2041
        %v2046 = vld [vmem:[%s399] ss:$8 sm:$0x3]
        %v2048 = vlaneseq
        %v2049 = vshrl.u32 %v2048, 7
        %v2050 = vsub.s32 0, %v2049
        %v2051 = vrot.slane %v2046, %v2050
        %v2052 = vlaneseq
        %v2053 = vshrl.u32 %v2052, 7
        %v2054 = vsub.s32 1, %v2053
        %v2055 = vrot.slane %v2046, %v2054
        %v2058 = vmul.f32 %v2044, %v2051
        %v2059 = vmul.f32 %v2045, %v2055
        %2060 = vst [vmem:[#allocation2 + $0x70] sm:$0xff] %v2058
        %2061 = vst [vmem:[#allocation2 + $0x78] sm:$0xff] %v2059
        %2062 = vrot.lane.b32.xlu0 %v1900, 111
        %v2063 = vpop.permute.xlu0 %2062
        %2064 = vrot.lane.b32.xlu0 %v1902, 111
        %v2065 = vpop.permute.xlu0 %2064
        %v2066 = vsel %vm420, %v2063, %v2065
        %v2067 = vsel %vm420, %v2065, %v2063
        %v2068 = vld [vmem:[%s423] ss:$8 sm:$0x3]
        %v2070 = vlaneseq
        %v2071 = vshrl.u32 %v2070, 7
        %v2072 = vsub.s32 0, %v2071
        %v2073 = vrot.slane %v2068, %v2072
        %v2074 = vlaneseq
        %v2075 = vshrl.u32 %v2074, 7
        %v2076 = vsub.s32 1, %v2075
        %v2077 = vrot.slane %v2068, %v2076
        %v2080 = vmul.f32 %v2066, %v2073
        %v2081 = vmul.f32 %v2067, %v2077
        %2082 = vst [vmem:[#allocation2 + $0x80] sm:$0xff] %v2080
        %2083 = vst [vmem:[#allocation2 + $0x88] sm:$0xff] %v2081
        %s2084 = scalar_lea.vmem [#allocation6], 48
        %v2085 = vld [vmem:[%s2084] sm:$0xff]
        %v2086 = vld [vmem:[#allocation2] sm:$0xff]
        %v2087 = vld [vmem:[#allocation2 + $0x8] sm:$0xff]
        %v2088 = vld [vmem:[#allocation2 + $0x10] sm:$0xff]
        %v2089 = vld [vmem:[#allocation2 + $0x18] sm:$0xff]
        %v2090 = vld [vmem:[#allocation2 + $0x20] sm:$0xff]
        %v2091 = vld [vmem:[#allocation2 + $0x28] sm:$0xff]
        %v2092 = vld [vmem:[#allocation2 + $0x30] sm:$0xff]
        %v2093 = vld [vmem:[#allocation2 + $0x38] sm:$0xff]
        %v2094 = vld [vmem:[#allocation2 + $0x40] sm:$0xff]
        %v2095 = vld [vmem:[#allocation2 + $0x48] sm:$0xff]
        %v2096 = vld [vmem:[#allocation2 + $0x50] sm:$0xff]
        %v2097 = vld [vmem:[#allocation2 + $0x58] sm:$0xff]
        %v2098 = vld [vmem:[#allocation2 + $0x60] sm:$0xff]
        %v2099 = vld [vmem:[#allocation2 + $0x68] sm:$0xff]
        %v2100 = vld [vmem:[#allocation2 + $0x70] sm:$0xff]
        %v2101 = vld [vmem:[#allocation2 + $0x78] sm:$0xff]
        %v2102 = vld [vmem:[#allocation2 + $0x80] sm:$0xff]
        %v2103 = vld [vmem:[#allocation2 + $0x88] sm:$0xff]
        %v2105 = vsel %vm459, %v2085, 0
        %2107 = vmatprep.subr.mxu0 %v2087
        %2108 = vmatpush1.msra.mxu0 %v2086
        %2109 = vmatprep.subr.mxu0 %v2089
        %2110 = vmatpush1.msra.mxu0 %v2088
        %2111 = vmatprep.subr.mxu0 %v2091
        %2112 = vmatpush1.msra.mxu0 %v2090
        %2113 = vmatprep.subr.mxu0 %v2093
        %2114 = vmatpush1.msra.mxu0 %v2092
        %2115 = vmatprep.subr.mxu0 %v2095
        %2116 = vmatpush1.msra.mxu0 %v2094
        %2117 = vmatprep.subr.mxu0 %v2097
        %2118 = vmatpush1.msra.mxu0 %v2096
        %2119 = vmatprep.subr.mxu0 %v2099
        %2120 = vmatpush1.msra.mxu0 %v2098
        %2121 = vmatprep.subr.mxu0 %v2101
        %2122 = vmatpush1.msra.mxu0 %v2100
        %2123 = vmatprep.subr.mxu0 %v2103
        %2124 = vmatpush1.msra.mxu0 %v2102
        %2125 = vmatprep.subr.mxu0 0.0
        %2126 = vmatpush1.msra.mxu0 0.0
        %2127 = vmatprep.subr.mxu0 0.0
        %2128 = vmatpush1.msra.mxu0 0.0
        %2129 = vmatprep.subr.mxu0 0.0
        %2130 = vmatpush1.msra.mxu0 0.0
        %2131 = vmatprep.subr.mxu0 0.0
        %2132 = vmatpush1.msra.mxu0 0.0
        %2133 = vmatprep.subr.mxu0 0.0
        %2134 = vmatpush1.msra.mxu0 0.0
        %2135 = vmatprep.subr.mxu0 0.0
        %2136 = vmatpush1.msra.mxu0 0.0
        %2137 = vmatprep.subr.mxu0 0.0
        %2138 = vmatpush1.msra.mxu0 0.0
        %2139 = vmatprep.subr.mxu0 0.0
        %2140 = vmatpush1.msra.mxu0 0.0
        %2141 = vmatprep.subr.mxu0 0.0
        %2142 = vmatpush1.msra.mxu0 0.0
        %2143 = vmatprep.subr.mxu0 0.0
        %2144 = vmatpush1.msra.mxu0 0.0
        %2145 = vmatprep.subr.mxu0 0.0
        %2146 = vmatpush1.msra.mxu0 0.0
        %2147 = vmatprep.subr.mxu0 0.0
        %2148 = vmatpush1.msra.mxu0 0.0
        %2149 = vmatprep.subr.mxu0 0.0
        %2150 = vmatpush1.msra.mxu0 0.0
        %2151 = vmatprep.subr.mxu0 0.0
        %2152 = vmatpush1.msra.mxu0 0.0
        %2153 = vmatprep.subr.mxu0 0.0
        %2154 = vmatpush1.msra.mxu0 0.0
        %2155 = vmatprep.subr.mxu0 0.0
        %2156 = vmatpush1.msra.mxu0 0.0
        %2157 = vmatprep.subr.mxu0 0.0
        %2158 = vmatpush1.msra.mxu0 0.0
        %2159 = vmatprep.subr.mxu0 0.0
        %2160 = vmatpush1.msra.mxu0 0.0
        %2161 = vmatprep.subr.mxu0 0.0
        %2162 = vmatpush1.msra.mxu0 0.0
        %2163 = vmatprep.subr.mxu0 0.0
        %2164 = vmatpush1.msra.mxu0 0.0
        %2165 = vmatprep.subr.mxu0 0.0
        %2166 = vmatpush1.msra.mxu0 0.0
        %2167 = vmatprep.subr.mxu0 0.0
        %2168 = vmatpush1.msra.mxu0 0.0
        %2169 = vmatprep.subr.mxu0 0.0
        %2170 = vmatpush1.msra.mxu0 0.0
        %2171 = vmatprep.mubr.f32.mxu0 0.0
        %2172 = vmatmul.mubr.f32.gmra.mrb[0].mxu0 %v2105
        %v2173 = vpop.f32.mrb[0].mxu0
        %v2174 = vadd.f32 0.0, %v2173
        %v2175 = vpop.f32.mrb[0].mxu0
        %v2176 = vadd.f32 0.0, %v2175
        %2177 = vdwg.mxu0
        %v2178 = vadd.f32 %v1904, %v2174
        %v2179 = vadd.f32 %v1905, %v2176
        %2180 = vrot.lane.b32.xlu0 %v2174, 17
        %v2181 = vpop.permute.xlu0 %2180
        %2182 = vrot.lane.b32.xlu0 %v2176, 17
        %v2183 = vpop.permute.xlu0 %2182
        %v2184 = vsel %vm251, %v2181, %v2183
        %v2185 = vsel %vm251, %v2183, %v2181
        %v2186 = vld [vmem:[#allocation8] ss:$8 sm:$0x3]
        %v2188 = vlaneseq
        %v2189 = vshrl.u32 %v2188, 7
        %v2190 = vsub.s32 0, %v2189
        %v2191 = vrot.slane %v2186, %v2190
        %v2192 = vlaneseq
        %v2193 = vshrl.u32 %v2192, 7
        %v2194 = vsub.s32 1, %v2193
        %v2195 = vrot.slane %v2186, %v2194
        %v2198 = vmul.f32 %v2185, %v2191
        %v2199 = vmul.f32 %v2184, %v2195
        %2200 = vst [vmem:[#allocation2] sm:$0xff] %v2198
        %2201 = vst [vmem:[#allocation2 + $0x8] sm:$0xff] %v2199
        %2202 = vrot.lane.b32.xlu0 %v2174, 16
        %v2203 = vpop.permute.xlu0 %2202
        %2204 = vrot.lane.b32.xlu0 %v2176, 16
        %v2205 = vpop.permute.xlu0 %2204
        %v2206 = vsel %vm274, %v2203, %v2205
        %v2207 = vsel %vm274, %v2205, %v2203
        %v2208 = vld [vmem:[%s277] ss:$8 sm:$0x3]
        %v2210 = vlaneseq
        %v2211 = vshrl.u32 %v2210, 7
        %v2212 = vsub.s32 0, %v2211
        %v2213 = vrot.slane %v2208, %v2212
        %v2214 = vlaneseq
        %v2215 = vshrl.u32 %v2214, 7
        %v2216 = vsub.s32 1, %v2215
        %v2217 = vrot.slane %v2208, %v2216
        %v2220 = vmul.f32 %v2207, %v2213
        %v2221 = vmul.f32 %v2206, %v2217
        %2222 = vst [vmem:[#allocation2 + $0x10] sm:$0xff] %v2220
        %2223 = vst [vmem:[#allocation2 + $0x18] sm:$0xff] %v2221
        %2224 = vrot.lane.b32.xlu0 %v2174, 15
        %v2225 = vpop.permute.xlu0 %2224
        %2226 = vrot.lane.b32.xlu0 %v2176, 15
        %v2227 = vpop.permute.xlu0 %2226
        %v2228 = vsel %vm298, %v2225, %v2227
        %v2229 = vsel %vm298, %v2227, %v2225
        %v2230 = vld [vmem:[%s301] ss:$8 sm:$0x3]
        %v2232 = vlaneseq
        %v2233 = vshrl.u32 %v2232, 7
        %v2234 = vsub.s32 0, %v2233
        %v2235 = vrot.slane %v2230, %v2234
        %v2236 = vlaneseq
        %v2237 = vshrl.u32 %v2236, 7
        %v2238 = vsub.s32 1, %v2237
        %v2239 = vrot.slane %v2230, %v2238
        %v2242 = vmul.f32 %v2229, %v2235
        %v2243 = vmul.f32 %v2228, %v2239
        %2244 = vst [vmem:[#allocation2 + $0x20] sm:$0xff] %v2242
        %2245 = vst [vmem:[#allocation2 + $0x28] sm:$0xff] %v2243
        %2246 = vrot.lane.b32.xlu0 %v2174, 1
        %v2247 = vpop.permute.xlu0 %2246
        %2248 = vrot.lane.b32.xlu0 %v2176, 1
        %v2249 = vpop.permute.xlu0 %2248
        %v2250 = vsel %vm322, %v2247, %v2249
        %v2251 = vsel %vm322, %v2249, %v2247
        %v2252 = vld [vmem:[%s325] ss:$8 sm:$0x3]
        %v2254 = vlaneseq
        %v2255 = vshrl.u32 %v2254, 7
        %v2256 = vsub.s32 0, %v2255
        %v2257 = vrot.slane %v2252, %v2256
        %v2258 = vlaneseq
        %v2259 = vshrl.u32 %v2258, 7
        %v2260 = vsub.s32 1, %v2259
        %v2261 = vrot.slane %v2252, %v2260
        %v2264 = vmul.f32 %v2251, %v2257
        %v2265 = vmul.f32 %v2250, %v2261
        %2266 = vst [vmem:[#allocation2 + $0x30] sm:$0xff] %v2264
        %2267 = vst [vmem:[#allocation2 + $0x38] sm:$0xff] %v2265
        %2268 = vst [vmem:[#allocation2 + $0x40] sm:$0xff] %v2174
        %2269 = vst [vmem:[#allocation2 + $0x48] sm:$0xff] %v2176
        %2270 = vrot.lane.b32.xlu0 %v2174, 127
        %v2271 = vpop.permute.xlu0 %2270
        %2272 = vrot.lane.b32.xlu0 %v2176, 127
        %v2273 = vpop.permute.xlu0 %2272
        %v2274 = vsel %vm348, %v2271, %v2273
        %v2275 = vsel %vm348, %v2273, %v2271
        %v2276 = vld [vmem:[%s351] ss:$8 sm:$0x3]
        %v2278 = vlaneseq
        %v2279 = vshrl.u32 %v2278, 7
        %v2280 = vsub.s32 0, %v2279
        %v2281 = vrot.slane %v2276, %v2280
        %v2282 = vlaneseq
        %v2283 = vshrl.u32 %v2282, 7
        %v2284 = vsub.s32 1, %v2283
        %v2285 = vrot.slane %v2276, %v2284
        %v2288 = vmul.f32 %v2274, %v2281
        %v2289 = vmul.f32 %v2275, %v2285
        %2290 = vst [vmem:[#allocation2 + $0x50] sm:$0xff] %v2288
        %2291 = vst [vmem:[#allocation2 + $0x58] sm:$0xff] %v2289
        %2292 = vrot.lane.b32.xlu0 %v2174, 113
        %v2293 = vpop.permute.xlu0 %2292
        %2294 = vrot.lane.b32.xlu0 %v2176, 113
        %v2295 = vpop.permute.xlu0 %2294
        %v2296 = vsel %vm372, %v2293, %v2295
        %v2297 = vsel %vm372, %v2295, %v2293
        %v2298 = vld [vmem:[%s375] ss:$8 sm:$0x3]
        %v2300 = vlaneseq
        %v2301 = vshrl.u32 %v2300, 7
        %v2302 = vsub.s32 0, %v2301
        %v2303 = vrot.slane %v2298, %v2302
        %v2304 = vlaneseq
        %v2305 = vshrl.u32 %v2304, 7
        %v2306 = vsub.s32 1, %v2305
        %v2307 = vrot.slane %v2298, %v2306
        %v2310 = vmul.f32 %v2296, %v2303
        %v2311 = vmul.f32 %v2297, %v2307
        %2312 = vst [vmem:[#allocation2 + $0x60] sm:$0xff] %v2310
        %2313 = vst [vmem:[#allocation2 + $0x68] sm:$0xff] %v2311
        %2314 = vrot.lane.b32.xlu0 %v2174, 112
        %v2315 = vpop.permute.xlu0 %2314
        %2316 = vrot.lane.b32.xlu0 %v2176, 112
        %v2317 = vpop.permute.xlu0 %2316
        %v2318 = vsel %vm396, %v2315, %v2317
        %v2319 = vsel %vm396, %v2317, %v2315
        %v2320 = vld [vmem:[%s399] ss:$8 sm:$0x3]
        %v2322 = vlaneseq
        %v2323 = vshrl.u32 %v2322, 7
        %v2324 = vsub.s32 0, %v2323
        %v2325 = vrot.slane %v2320, %v2324
        %v2326 = vlaneseq
        %v2327 = vshrl.u32 %v2326, 7
        %v2328 = vsub.s32 1, %v2327
        %v2329 = vrot.slane %v2320, %v2328
        %v2332 = vmul.f32 %v2318, %v2325
        %v2333 = vmul.f32 %v2319, %v2329
        %2334 = vst [vmem:[#allocation2 + $0x70] sm:$0xff] %v2332
        %2335 = vst [vmem:[#allocation2 + $0x78] sm:$0xff] %v2333
        %2336 = vrot.lane.b32.xlu0 %v2174, 111
        %v2337 = vpop.permute.xlu0 %2336
        %2338 = vrot.lane.b32.xlu0 %v2176, 111
        %v2339 = vpop.permute.xlu0 %2338
        %v2340 = vsel %vm420, %v2337, %v2339
        %v2341 = vsel %vm420, %v2339, %v2337
        %v2342 = vld [vmem:[%s423] ss:$8 sm:$0x3]
        %v2344 = vlaneseq
        %v2345 = vshrl.u32 %v2344, 7
        %v2346 = vsub.s32 0, %v2345
        %v2347 = vrot.slane %v2342, %v2346
        %v2348 = vlaneseq
        %v2349 = vshrl.u32 %v2348, 7
        %v2350 = vsub.s32 1, %v2349
        %v2351 = vrot.slane %v2342, %v2350
        %v2354 = vmul.f32 %v2340, %v2347
        %v2355 = vmul.f32 %v2341, %v2351
        %2356 = vst [vmem:[#allocation2 + $0x80] sm:$0xff] %v2354
        %2357 = vst [vmem:[#allocation2 + $0x88] sm:$0xff] %v2355
        %s2358 = scalar_lea.vmem [#allocation6], 56
        %v2359 = vld [vmem:[%s2358] sm:$0xff]
        %v2360 = vld [vmem:[#allocation2] sm:$0xff]
        %v2361 = vld [vmem:[#allocation2 + $0x8] sm:$0xff]
        %v2362 = vld [vmem:[#allocation2 + $0x10] sm:$0xff]
        %v2363 = vld [vmem:[#allocation2 + $0x18] sm:$0xff]
        %v2364 = vld [vmem:[#allocation2 + $0x20] sm:$0xff]
        %v2365 = vld [vmem:[#allocation2 + $0x28] sm:$0xff]
        %v2366 = vld [vmem:[#allocation2 + $0x30] sm:$0xff]
        %v2367 = vld [vmem:[#allocation2 + $0x38] sm:$0xff]
        %v2368 = vld [vmem:[#allocation2 + $0x40] sm:$0xff]
        %v2369 = vld [vmem:[#allocation2 + $0x48] sm:$0xff]
        %v2370 = vld [vmem:[#allocation2 + $0x50] sm:$0xff]
        %v2371 = vld [vmem:[#allocation2 + $0x58] sm:$0xff]
        %v2372 = vld [vmem:[#allocation2 + $0x60] sm:$0xff]
        %v2373 = vld [vmem:[#allocation2 + $0x68] sm:$0xff]
        %v2374 = vld [vmem:[#allocation2 + $0x70] sm:$0xff]
        %v2375 = vld [vmem:[#allocation2 + $0x78] sm:$0xff]
        %v2376 = vld [vmem:[#allocation2 + $0x80] sm:$0xff]
        %v2377 = vld [vmem:[#allocation2 + $0x88] sm:$0xff]
        %v2379 = vsel %vm459, %v2359, 0
        %2381 = vmatprep.subr.mxu0 %v2361
        %2382 = vmatpush1.msra.mxu0 %v2360
        %2383 = vmatprep.subr.mxu0 %v2363
        %2384 = vmatpush1.msra.mxu0 %v2362
        %2385 = vmatprep.subr.mxu0 %v2365
        %2386 = vmatpush1.msra.mxu0 %v2364
        %2387 = vmatprep.subr.mxu0 %v2367
        %2388 = vmatpush1.msra.mxu0 %v2366
        %2389 = vmatprep.subr.mxu0 %v2369
        %2390 = vmatpush1.msra.mxu0 %v2368
        %2391 = vmatprep.subr.mxu0 %v2371
        %2392 = vmatpush1.msra.mxu0 %v2370
        %2393 = vmatprep.subr.mxu0 %v2373
        %2394 = vmatpush1.msra.mxu0 %v2372
        %2395 = vmatprep.subr.mxu0 %v2375
        %2396 = vmatpush1.msra.mxu0 %v2374
        %2397 = vmatprep.subr.mxu0 %v2377
        %2398 = vmatpush1.msra.mxu0 %v2376
        %2399 = vmatprep.subr.mxu0 0.0
        %2400 = vmatpush1.msra.mxu0 0.0
        %2401 = vmatprep.subr.mxu0 0.0
        %2402 = vmatpush1.msra.mxu0 0.0
        %2403 = vmatprep.subr.mxu0 0.0
        %2404 = vmatpush1.msra.mxu0 0.0
        %2405 = vmatprep.subr.mxu0 0.0
        %2406 = vmatpush1.msra.mxu0 0.0
        %2407 = vmatprep.subr.mxu0 0.0
        %2408 = vmatpush1.msra.mxu0 0.0
        %2409 = vmatprep.subr.mxu0 0.0
        %2410 = vmatpush1.msra.mxu0 0.0
        %2411 = vmatprep.subr.mxu0 0.0
        %2412 = vmatpush1.msra.mxu0 0.0
        %2413 = vmatprep.subr.mxu0 0.0
        %2414 = vmatpush1.msra.mxu0 0.0
        %2415 = vmatprep.subr.mxu0 0.0
        %2416 = vmatpush1.msra.mxu0 0.0
        %2417 = vmatprep.subr.mxu0 0.0
        %2418 = vmatpush1.msra.mxu0 0.0
        %2419 = vmatprep.subr.mxu0 0.0
        %2420 = vmatpush1.msra.mxu0 0.0
        %2421 = vmatprep.subr.mxu0 0.0
        %2422 = vmatpush1.msra.mxu0 0.0
        %2423 = vmatprep.subr.mxu0 0.0
        %2424 = vmatpush1.msra.mxu0 0.0
        %2425 = vmatprep.subr.mxu0 0.0
        %2426 = vmatpush1.msra.mxu0 0.0
        %2427 = vmatprep.subr.mxu0 0.0
        %2428 = vmatpush1.msra.mxu0 0.0
        %2429 = vmatprep.subr.mxu0 0.0
        %2430 = vmatpush1.msra.mxu0 0.0
        %2431 = vmatprep.subr.mxu0 0.0
        %2432 = vmatpush1.msra.mxu0 0.0
        %2433 = vmatprep.subr.mxu0 0.0
        %2434 = vmatpush1.msra.mxu0 0.0
        %2435 = vmatprep.subr.mxu0 0.0
        %2436 = vmatpush1.msra.mxu0 0.0
        %2437 = vmatprep.subr.mxu0 0.0
        %2438 = vmatpush1.msra.mxu0 0.0
        %2439 = vmatprep.subr.mxu0 0.0
        %2440 = vmatpush1.msra.mxu0 0.0
        %2441 = vmatprep.subr.mxu0 0.0
        %2442 = vmatpush1.msra.mxu0 0.0
        %2443 = vmatprep.subr.mxu0 0.0
        %2444 = vmatpush1.msra.mxu0 0.0
        %2445 = vmatprep.mubr.f32.mxu0 0.0
        %2446 = vmatmul.mubr.f32.gmra.mrb[0].mxu0 %v2379
        %v2447 = vpop.f32.mrb[0].mxu0
        %v2448 = vadd.f32 0.0, %v2447
        %v2449 = vpop.f32.mrb[0].mxu0
        %v2450 = vadd.f32 0.0, %v2449
        %2451 = vdwg.mxu0
        %v2452 = vadd.f32 %v2178, %v2448
        %v2453 = vadd.f32 %v2179, %v2450
        %2454 = vrot.lane.b32.xlu0 %v2448, 17
        %v2455 = vpop.permute.xlu0 %2454
        %2456 = vrot.lane.b32.xlu0 %v2450, 17
        %v2457 = vpop.permute.xlu0 %2456
        %v2458 = vsel %vm251, %v2455, %v2457
        %v2459 = vsel %vm251, %v2457, %v2455
        %v2460 = vld [vmem:[#allocation8] ss:$8 sm:$0x3]
        %v2462 = vlaneseq
        %v2463 = vshrl.u32 %v2462, 7
        %v2464 = vsub.s32 0, %v2463
        %v2465 = vrot.slane %v2460, %v2464
        %v2466 = vlaneseq
        %v2467 = vshrl.u32 %v2466, 7
        %v2468 = vsub.s32 1, %v2467
        %v2469 = vrot.slane %v2460, %v2468
        %v2472 = vmul.f32 %v2459, %v2465
        %v2473 = vmul.f32 %v2458, %v2469
        %2474 = vst [vmem:[#allocation2] sm:$0xff] %v2472
        %2475 = vst [vmem:[#allocation2 + $0x8] sm:$0xff] %v2473
        %2476 = vrot.lane.b32.xlu0 %v2448, 16
        %v2477 = vpop.permute.xlu0 %2476
        %2478 = vrot.lane.b32.xlu0 %v2450, 16
        %v2479 = vpop.permute.xlu0 %2478
        %v2480 = vsel %vm274, %v2477, %v2479
        %v2481 = vsel %vm274, %v2479, %v2477
        %v2482 = vld [vmem:[%s277] ss:$8 sm:$0x3]
        %v2484 = vlaneseq
        %v2485 = vshrl.u32 %v2484, 7
        %v2486 = vsub.s32 0, %v2485
        %v2487 = vrot.slane %v2482, %v2486
        %v2488 = vlaneseq
        %v2489 = vshrl.u32 %v2488, 7
        %v2490 = vsub.s32 1, %v2489
        %v2491 = vrot.slane %v2482, %v2490
        %v2494 = vmul.f32 %v2481, %v2487
        %v2495 = vmul.f32 %v2480, %v2491
        %2496 = vst [vmem:[#allocation2 + $0x10] sm:$0xff] %v2494
        %2497 = vst [vmem:[#allocation2 + $0x18] sm:$0xff] %v2495
        %2498 = vrot.lane.b32.xlu0 %v2448, 15
        %v2499 = vpop.permute.xlu0 %2498
        %2500 = vrot.lane.b32.xlu0 %v2450, 15
        %v2501 = vpop.permute.xlu0 %2500
        %v2502 = vsel %vm298, %v2499, %v2501
        %v2503 = vsel %vm298, %v2501, %v2499
        %v2504 = vld [vmem:[%s301] ss:$8 sm:$0x3]
        %v2506 = vlaneseq
        %v2507 = vshrl.u32 %v2506, 7
        %v2508 = vsub.s32 0, %v2507
        %v2509 = vrot.slane %v2504, %v2508
        %v2510 = vlaneseq
        %v2511 = vshrl.u32 %v2510, 7
        %v2512 = vsub.s32 1, %v2511
        %v2513 = vrot.slane %v2504, %v2512
        %v2516 = vmul.f32 %v2503, %v2509
        %v2517 = vmul.f32 %v2502, %v2513
        %2518 = vst [vmem:[#allocation2 + $0x20] sm:$0xff] %v2516
        %2519 = vst [vmem:[#allocation2 + $0x28] sm:$0xff] %v2517
        %2520 = vrot.lane.b32.xlu0 %v2448, 1
        %v2521 = vpop.permute.xlu0 %2520
        %2522 = vrot.lane.b32.xlu0 %v2450, 1
        %v2523 = vpop.permute.xlu0 %2522
        %v2524 = vsel %vm322, %v2521, %v2523
        %v2525 = vsel %vm322, %v2523, %v2521
        %v2526 = vld [vmem:[%s325] ss:$8 sm:$0x3]
        %v2528 = vlaneseq
        %v2529 = vshrl.u32 %v2528, 7
        %v2530 = vsub.s32 0, %v2529
        %v2531 = vrot.slane %v2526, %v2530
        %v2532 = vlaneseq
        %v2533 = vshrl.u32 %v2532, 7
        %v2534 = vsub.s32 1, %v2533
        %v2535 = vrot.slane %v2526, %v2534
        %v2538 = vmul.f32 %v2525, %v2531
        %v2539 = vmul.f32 %v2524, %v2535
        %2540 = vst [vmem:[#allocation2 + $0x30] sm:$0xff] %v2538
        %2541 = vst [vmem:[#allocation2 + $0x38] sm:$0xff] %v2539
        %2542 = vst [vmem:[#allocation2 + $0x40] sm:$0xff] %v2448
        %2543 = vst [vmem:[#allocation2 + $0x48] sm:$0xff] %v2450
        %2544 = vrot.lane.b32.xlu0 %v2448, 127
        %v2545 = vpop.permute.xlu0 %2544
        %2546 = vrot.lane.b32.xlu0 %v2450, 127
        %v2547 = vpop.permute.xlu0 %2546
        %v2548 = vsel %vm348, %v2545, %v2547
        %v2549 = vsel %vm348, %v2547, %v2545
        %v2550 = vld [vmem:[%s351] ss:$8 sm:$0x3]
        %v2552 = vlaneseq
        %v2553 = vshrl.u32 %v2552, 7
        %v2554 = vsub.s32 0, %v2553
        %v2555 = vrot.slane %v2550, %v2554
        %v2556 = vlaneseq
        %v2557 = vshrl.u32 %v2556, 7
        %v2558 = vsub.s32 1, %v2557
        %v2559 = vrot.slane %v2550, %v2558
        %v2562 = vmul.f32 %v2548, %v2555
        %v2563 = vmul.f32 %v2549, %v2559
        %2564 = vst [vmem:[#allocation2 + $0x50] sm:$0xff] %v2562
        %2565 = vst [vmem:[#allocation2 + $0x58] sm:$0xff] %v2563
        %2566 = vrot.lane.b32.xlu0 %v2448, 113
        %v2567 = vpop.permute.xlu0 %2566
        %2568 = vrot.lane.b32.xlu0 %v2450, 113
        %v2569 = vpop.permute.xlu0 %2568
        %v2570 = vsel %vm372, %v2567, %v2569
        %v2571 = vsel %vm372, %v2569, %v2567
        %v2572 = vld [vmem:[%s375] ss:$8 sm:$0x3]
        %v2574 = vlaneseq
        %v2575 = vshrl.u32 %v2574, 7
        %v2576 = vsub.s32 0, %v2575
        %v2577 = vrot.slane %v2572, %v2576
        %v2578 = vlaneseq
        %v2579 = vshrl.u32 %v2578, 7
        %v2580 = vsub.s32 1, %v2579
        %v2581 = vrot.slane %v2572, %v2580
        %v2584 = vmul.f32 %v2570, %v2577
        %v2585 = vmul.f32 %v2571, %v2581
        %2586 = vst [vmem:[#allocation2 + $0x60] sm:$0xff] %v2584
        %2587 = vst [vmem:[#allocation2 + $0x68] sm:$0xff] %v2585
        %2588 = vrot.lane.b32.xlu0 %v2448, 112
        %v2589 = vpop.permute.xlu0 %2588
        %2590 = vrot.lane.b32.xlu0 %v2450, 112
        %v2591 = vpop.permute.xlu0 %2590
        %v2592 = vsel %vm396, %v2589, %v2591
        %v2593 = vsel %vm396, %v2591, %v2589
        %v2594 = vld [vmem:[%s399] ss:$8 sm:$0x3]
        %v2596 = vlaneseq
        %v2597 = vshrl.u32 %v2596, 7
        %v2598 = vsub.s32 0, %v2597
        %v2599 = vrot.slane %v2594, %v2598
        %v2600 = vlaneseq
        %v2601 = vshrl.u32 %v2600, 7
        %v2602 = vsub.s32 1, %v2601
        %v2603 = vrot.slane %v2594, %v2602
        %v2606 = vmul.f32 %v2592, %v2599
        %v2607 = vmul.f32 %v2593, %v2603
        %2608 = vst [vmem:[#allocation2 + $0x70] sm:$0xff] %v2606
        %2609 = vst [vmem:[#allocation2 + $0x78] sm:$0xff] %v2607
        %2610 = vrot.lane.b32.xlu0 %v2448, 111
        %v2611 = vpop.permute.xlu0 %2610
        %2612 = vrot.lane.b32.xlu0 %v2450, 111
        %v2613 = vpop.permute.xlu0 %2612
        %v2614 = vsel %vm420, %v2611, %v2613
        %v2615 = vsel %vm420, %v2613, %v2611
        %v2616 = vld [vmem:[%s423] ss:$8 sm:$0x3]
        %v2618 = vlaneseq
        %v2619 = vshrl.u32 %v2618, 7
        %v2620 = vsub.s32 0, %v2619
        %v2621 = vrot.slane %v2616, %v2620
        %v2622 = vlaneseq
        %v2623 = vshrl.u32 %v2622, 7
        %v2624 = vsub.s32 1, %v2623
        %v2625 = vrot.slane %v2616, %v2624
        %v2628 = vmul.f32 %v2614, %v2621
        %v2629 = vmul.f32 %v2615, %v2625
        %2630 = vst [vmem:[#allocation2 + $0x80] sm:$0xff] %v2628
        %2631 = vst [vmem:[#allocation2 + $0x88] sm:$0xff] %v2629
        %s2632 = scalar_lea.vmem [#allocation6], 64
        %v2633 = vld [vmem:[%s2632] sm:$0xff]
        %v2634 = vld [vmem:[#allocation2] sm:$0xff]
        %v2635 = vld [vmem:[#allocation2 + $0x8] sm:$0xff]
        %v2636 = vld [vmem:[#allocation2 + $0x10] sm:$0xff]
        %v2637 = vld [vmem:[#allocation2 + $0x18] sm:$0xff]
        %v2638 = vld [vmem:[#allocation2 + $0x20] sm:$0xff]
        %v2639 = vld [vmem:[#allocation2 + $0x28] sm:$0xff]
        %v2640 = vld [vmem:[#allocation2 + $0x30] sm:$0xff]
        %v2641 = vld [vmem:[#allocation2 + $0x38] sm:$0xff]
        %v2642 = vld [vmem:[#allocation2 + $0x40] sm:$0xff]
        %v2643 = vld [vmem:[#allocation2 + $0x48] sm:$0xff]
        %v2644 = vld [vmem:[#allocation2 + $0x50] sm:$0xff]
        %v2645 = vld [vmem:[#allocation2 + $0x58] sm:$0xff]
        %v2646 = vld [vmem:[#allocation2 + $0x60] sm:$0xff]
        %v2647 = vld [vmem:[#allocation2 + $0x68] sm:$0xff]
        %v2648 = vld [vmem:[#allocation2 + $0x70] sm:$0xff]
        %v2649 = vld [vmem:[#allocation2 + $0x78] sm:$0xff]
        %v2650 = vld [vmem:[#allocation2 + $0x80] sm:$0xff]
        %v2651 = vld [vmem:[#allocation2 + $0x88] sm:$0xff]
        %v2653 = vsel %vm459, %v2633, 0
        %2655 = vmatprep.subr.mxu0 %v2635
        %2656 = vmatpush1.msra.mxu0 %v2634
        %2657 = vmatprep.subr.mxu0 %v2637
        %2658 = vmatpush1.msra.mxu0 %v2636
        %2659 = vmatprep.subr.mxu0 %v2639
        %2660 = vmatpush1.msra.mxu0 %v2638
        %2661 = vmatprep.subr.mxu0 %v2641
        %2662 = vmatpush1.msra.mxu0 %v2640
        %2663 = vmatprep.subr.mxu0 %v2643
        %2664 = vmatpush1.msra.mxu0 %v2642
        %2665 = vmatprep.subr.mxu0 %v2645
        %2666 = vmatpush1.msra.mxu0 %v2644
        %2667 = vmatprep.subr.mxu0 %v2647
        %2668 = vmatpush1.msra.mxu0 %v2646
        %2669 = vmatprep.subr.mxu0 %v2649
        %2670 = vmatpush1.msra.mxu0 %v2648
        %2671 = vmatprep.subr.mxu0 %v2651
        %2672 = vmatpush1.msra.mxu0 %v2650
        %2673 = vmatprep.subr.mxu0 0.0
        %2674 = vmatpush1.msra.mxu0 0.0
        %2675 = vmatprep.subr.mxu0 0.0
        %2676 = vmatpush1.msra.mxu0 0.0
        %2677 = vmatprep.subr.mxu0 0.0
        %2678 = vmatpush1.msra.mxu0 0.0
        %2679 = vmatprep.subr.mxu0 0.0
        %2680 = vmatpush1.msra.mxu0 0.0
        %2681 = vmatprep.subr.mxu0 0.0
        %2682 = vmatpush1.msra.mxu0 0.0
        %2683 = vmatprep.subr.mxu0 0.0
        %2684 = vmatpush1.msra.mxu0 0.0
        %2685 = vmatprep.subr.mxu0 0.0
        %2686 = vmatpush1.msra.mxu0 0.0
        %2687 = vmatprep.subr.mxu0 0.0
        %2688 = vmatpush1.msra.mxu0 0.0
        %2689 = vmatprep.subr.mxu0 0.0
        %2690 = vmatpush1.msra.mxu0 0.0
        %2691 = vmatprep.subr.mxu0 0.0
        %2692 = vmatpush1.msra.mxu0 0.0
        %2693 = vmatprep.subr.mxu0 0.0
        %2694 = vmatpush1.msra.mxu0 0.0
        %2695 = vmatprep.subr.mxu0 0.0
        %2696 = vmatpush1.msra.mxu0 0.0
        %2697 = vmatprep.subr.mxu0 0.0
        %2698 = vmatpush1.msra.mxu0 0.0
        %2699 = vmatprep.subr.mxu0 0.0
        %2700 = vmatpush1.msra.mxu0 0.0
        %2701 = vmatprep.subr.mxu0 0.0
        %2702 = vmatpush1.msra.mxu0 0.0
        %2703 = vmatprep.subr.mxu0 0.0
        %2704 = vmatpush1.msra.mxu0 0.0
        %2705 = vmatprep.subr.mxu0 0.0
        %2706 = vmatpush1.msra.mxu0 0.0
        %2707 = vmatprep.subr.mxu0 0.0
        %2708 = vmatpush1.msra.mxu0 0.0
        %2709 = vmatprep.subr.mxu0 0.0
        %2710 = vmatpush1.msra.mxu0 0.0
        %2711 = vmatprep.subr.mxu0 0.0
        %2712 = vmatpush1.msra.mxu0 0.0
        %2713 = vmatprep.subr.mxu0 0.0
        %2714 = vmatpush1.msra.mxu0 0.0
        %2715 = vmatprep.subr.mxu0 0.0
        %2716 = vmatpush1.msra.mxu0 0.0
        %2717 = vmatprep.subr.mxu0 0.0
        %2718 = vmatpush1.msra.mxu0 0.0
        %2719 = vmatprep.mubr.f32.mxu0 0.0
        %2720 = vmatmul.mubr.f32.gmra.mrb[0].mxu0 %v2653
        %v2721 = vpop.f32.mrb[0].mxu0
        %v2722 = vadd.f32 0.0, %v2721
        %v2723 = vpop.f32.mrb[0].mxu0
        %v2724 = vadd.f32 0.0, %v2723
        %2725 = vdwg.mxu0
        %v2726 = vadd.f32 %v2452, %v2722
        %v2727 = vadd.f32 %v2453, %v2724
        %2728 = vrot.lane.b32.xlu0 %v2722, 17
        %v2729 = vpop.permute.xlu0 %2728
        %2730 = vrot.lane.b32.xlu0 %v2724, 17
        %v2731 = vpop.permute.xlu0 %2730
        %v2732 = vsel %vm251, %v2729, %v2731
        %v2733 = vsel %vm251, %v2731, %v2729
        %v2734 = vld [vmem:[#allocation8] ss:$8 sm:$0x3]
        %v2736 = vlaneseq
        %v2737 = vshrl.u32 %v2736, 7
        %v2738 = vsub.s32 0, %v2737
        %v2739 = vrot.slane %v2734, %v2738
        %v2740 = vlaneseq
        %v2741 = vshrl.u32 %v2740, 7
        %v2742 = vsub.s32 1, %v2741
        %v2743 = vrot.slane %v2734, %v2742
        %v2746 = vmul.f32 %v2733, %v2739
        %v2747 = vmul.f32 %v2732, %v2743
        %2748 = vst [vmem:[#allocation2] sm:$0xff] %v2746
        %2749 = vst [vmem:[#allocation2 + $0x8] sm:$0xff] %v2747
        %2750 = vrot.lane.b32.xlu0 %v2722, 16
        %v2751 = vpop.permute.xlu0 %2750
        %2752 = vrot.lane.b32.xlu0 %v2724, 16
        %v2753 = vpop.permute.xlu0 %2752
        %v2754 = vsel %vm274, %v2751, %v2753
        %v2755 = vsel %vm274, %v2753, %v2751
        %v2756 = vld [vmem:[%s277] ss:$8 sm:$0x3]
        %v2758 = vlaneseq
        %v2759 = vshrl.u32 %v2758, 7
        %v2760 = vsub.s32 0, %v2759
        %v2761 = vrot.slane %v2756, %v2760
        %v2762 = vlaneseq
        %v2763 = vshrl.u32 %v2762, 7
        %v2764 = vsub.s32 1, %v2763
        %v2765 = vrot.slane %v2756, %v2764
        %v2768 = vmul.f32 %v2755, %v2761
        %v2769 = vmul.f32 %v2754, %v2765
        %2770 = vst [vmem:[#allocation2 + $0x10] sm:$0xff] %v2768
        %2771 = vst [vmem:[#allocation2 + $0x18] sm:$0xff] %v2769
        %2772 = vrot.lane.b32.xlu0 %v2722, 15
        %v2773 = vpop.permute.xlu0 %2772
        %2774 = vrot.lane.b32.xlu0 %v2724, 15
        %v2775 = vpop.permute.xlu0 %2774
        %v2776 = vsel %vm298, %v2773, %v2775
        %v2777 = vsel %vm298, %v2775, %v2773
        %v2778 = vld [vmem:[%s301] ss:$8 sm:$0x3]
        %v2780 = vlaneseq
        %v2781 = vshrl.u32 %v2780, 7
        %v2782 = vsub.s32 0, %v2781
        %v2783 = vrot.slane %v2778, %v2782
        %v2784 = vlaneseq
        %v2785 = vshrl.u32 %v2784, 7
        %v2786 = vsub.s32 1, %v2785
        %v2787 = vrot.slane %v2778, %v2786
        %v2790 = vmul.f32 %v2777, %v2783
        %v2791 = vmul.f32 %v2776, %v2787
        %2792 = vst [vmem:[#allocation2 + $0x20] sm:$0xff] %v2790
        %2793 = vst [vmem:[#allocation2 + $0x28] sm:$0xff] %v2791
        %2794 = vrot.lane.b32.xlu0 %v2722, 1
        %v2795 = vpop.permute.xlu0 %2794
        %2796 = vrot.lane.b32.xlu0 %v2724, 1
        %v2797 = vpop.permute.xlu0 %2796
        %v2798 = vsel %vm322, %v2795, %v2797
        %v2799 = vsel %vm322, %v2797, %v2795
        %v2800 = vld [vmem:[%s325] ss:$8 sm:$0x3]
        %v2802 = vlaneseq
        %v2803 = vshrl.u32 %v2802, 7
        %v2804 = vsub.s32 0, %v2803
        %v2805 = vrot.slane %v2800, %v2804
        %v2806 = vlaneseq
        %v2807 = vshrl.u32 %v2806, 7
        %v2808 = vsub.s32 1, %v2807
        %v2809 = vrot.slane %v2800, %v2808
        %v2812 = vmul.f32 %v2799, %v2805
        %v2813 = vmul.f32 %v2798, %v2809
        %2814 = vst [vmem:[#allocation2 + $0x30] sm:$0xff] %v2812
        %2815 = vst [vmem:[#allocation2 + $0x38] sm:$0xff] %v2813
        %2816 = vst [vmem:[#allocation2 + $0x40] sm:$0xff] %v2722
        %2817 = vst [vmem:[#allocation2 + $0x48] sm:$0xff] %v2724
        %2818 = vrot.lane.b32.xlu0 %v2722, 127
        %v2819 = vpop.permute.xlu0 %2818
        %2820 = vrot.lane.b32.xlu0 %v2724, 127
        %v2821 = vpop.permute.xlu0 %2820
        %v2822 = vsel %vm348, %v2819, %v2821
        %v2823 = vsel %vm348, %v2821, %v2819
        %v2824 = vld [vmem:[%s351] ss:$8 sm:$0x3]
        %v2826 = vlaneseq
        %v2827 = vshrl.u32 %v2826, 7
        %v2828 = vsub.s32 0, %v2827
        %v2829 = vrot.slane %v2824, %v2828
        %v2830 = vlaneseq
        %v2831 = vshrl.u32 %v2830, 7
        %v2832 = vsub.s32 1, %v2831
        %v2833 = vrot.slane %v2824, %v2832
        %v2836 = vmul.f32 %v2822, %v2829
        %v2837 = vmul.f32 %v2823, %v2833
        %2838 = vst [vmem:[#allocation2 + $0x50] sm:$0xff] %v2836
        %2839 = vst [vmem:[#allocation2 + $0x58] sm:$0xff] %v2837
        %2840 = vrot.lane.b32.xlu0 %v2722, 113
        %v2841 = vpop.permute.xlu0 %2840
        %2842 = vrot.lane.b32.xlu0 %v2724, 113
        %v2843 = vpop.permute.xlu0 %2842
        %v2844 = vsel %vm372, %v2841, %v2843
        %v2845 = vsel %vm372, %v2843, %v2841
        %v2846 = vld [vmem:[%s375] ss:$8 sm:$0x3]
        %v2848 = vlaneseq
        %v2849 = vshrl.u32 %v2848, 7
        %v2850 = vsub.s32 0, %v2849
        %v2851 = vrot.slane %v2846, %v2850
        %v2852 = vlaneseq
        %v2853 = vshrl.u32 %v2852, 7
        %v2854 = vsub.s32 1, %v2853
        %v2855 = vrot.slane %v2846, %v2854
        %v2858 = vmul.f32 %v2844, %v2851
        %v2859 = vmul.f32 %v2845, %v2855
        %2860 = vst [vmem:[#allocation2 + $0x60] sm:$0xff] %v2858
        %2861 = vst [vmem:[#allocation2 + $0x68] sm:$0xff] %v2859
        %2862 = vrot.lane.b32.xlu0 %v2722, 112
        %v2863 = vpop.permute.xlu0 %2862
        %2864 = vrot.lane.b32.xlu0 %v2724, 112
        %v2865 = vpop.permute.xlu0 %2864
        %v2866 = vsel %vm396, %v2863, %v2865
        %v2867 = vsel %vm396, %v2865, %v2863
        %v2868 = vld [vmem:[%s399] ss:$8 sm:$0x3]
        %v2870 = vlaneseq
        %v2871 = vshrl.u32 %v2870, 7
        %v2872 = vsub.s32 0, %v2871
        %v2873 = vrot.slane %v2868, %v2872
        %v2874 = vlaneseq
        %v2875 = vshrl.u32 %v2874, 7
        %v2876 = vsub.s32 1, %v2875
        %v2877 = vrot.slane %v2868, %v2876
        %v2880 = vmul.f32 %v2866, %v2873
        %v2881 = vmul.f32 %v2867, %v2877
        %2882 = vst [vmem:[#allocation2 + $0x70] sm:$0xff] %v2880
        %2883 = vst [vmem:[#allocation2 + $0x78] sm:$0xff] %v2881
        %2884 = vrot.lane.b32.xlu0 %v2722, 111
        %v2885 = vpop.permute.xlu0 %2884
        %2886 = vrot.lane.b32.xlu0 %v2724, 111
        %v2887 = vpop.permute.xlu0 %2886
        %v2888 = vsel %vm420, %v2885, %v2887
        %v2889 = vsel %vm420, %v2887, %v2885
        %v2890 = vld [vmem:[%s423] ss:$8 sm:$0x3]
        %v2892 = vlaneseq
        %v2893 = vshrl.u32 %v2892, 7
        %v2894 = vsub.s32 0, %v2893
        %v2895 = vrot.slane %v2890, %v2894
        %v2896 = vlaneseq
        %v2897 = vshrl.u32 %v2896, 7
        %v2898 = vsub.s32 1, %v2897
        %v2899 = vrot.slane %v2890, %v2898
        %v2902 = vmul.f32 %v2888, %v2895
        %v2903 = vmul.f32 %v2889, %v2899
        %2904 = vst [vmem:[#allocation2 + $0x80] sm:$0xff] %v2902
        %2905 = vst [vmem:[#allocation2 + $0x88] sm:$0xff] %v2903
        %s2906 = scalar_lea.vmem [#allocation6], 72
        %v2907 = vld [vmem:[%s2906] sm:$0xff]
        %v2908 = vld [vmem:[#allocation2] sm:$0xff]
        %v2909 = vld [vmem:[#allocation2 + $0x8] sm:$0xff]
        %v2910 = vld [vmem:[#allocation2 + $0x10] sm:$0xff]
        %v2911 = vld [vmem:[#allocation2 + $0x18] sm:$0xff]
        %v2912 = vld [vmem:[#allocation2 + $0x20] sm:$0xff]
        %v2913 = vld [vmem:[#allocation2 + $0x28] sm:$0xff]
        %v2914 = vld [vmem:[#allocation2 + $0x30] sm:$0xff]
        %v2915 = vld [vmem:[#allocation2 + $0x38] sm:$0xff]
        %v2916 = vld [vmem:[#allocation2 + $0x40] sm:$0xff]
        %v2917 = vld [vmem:[#allocation2 + $0x48] sm:$0xff]
        %v2918 = vld [vmem:[#allocation2 + $0x50] sm:$0xff]
        %v2919 = vld [vmem:[#allocation2 + $0x58] sm:$0xff]
        %v2920 = vld [vmem:[#allocation2 + $0x60] sm:$0xff]
        %v2921 = vld [vmem:[#allocation2 + $0x68] sm:$0xff]
        %v2922 = vld [vmem:[#allocation2 + $0x70] sm:$0xff]
        %v2923 = vld [vmem:[#allocation2 + $0x78] sm:$0xff]
        %v2924 = vld [vmem:[#allocation2 + $0x80] sm:$0xff]
        %v2925 = vld [vmem:[#allocation2 + $0x88] sm:$0xff]
        %v2927 = vsel %vm459, %v2907, 0
        %2929 = vmatprep.subr.mxu0 %v2909
        %2930 = vmatpush1.msra.mxu0 %v2908
        %2931 = vmatprep.subr.mxu0 %v2911
        %2932 = vmatpush1.msra.mxu0 %v2910
        %2933 = vmatprep.subr.mxu0 %v2913
        %2934 = vmatpush1.msra.mxu0 %v2912
        %2935 = vmatprep.subr.mxu0 %v2915
        %2936 = vmatpush1.msra.mxu0 %v2914
        %2937 = vmatprep.subr.mxu0 %v2917
        %2938 = vmatpush1.msra.mxu0 %v2916
        %2939 = vmatprep.subr.mxu0 %v2919
        %2940 = vmatpush1.msra.mxu0 %v2918
        %2941 = vmatprep.subr.mxu0 %v2921
        %2942 = vmatpush1.msra.mxu0 %v2920
        %2943 = vmatprep.subr.mxu0 %v2923
        %2944 = vmatpush1.msra.mxu0 %v2922
        %2945 = vmatprep.subr.mxu0 %v2925
        %2946 = vmatpush1.msra.mxu0 %v2924
        %2947 = vmatprep.subr.mxu0 0.0
        %2948 = vmatpush1.msra.mxu0 0.0
        %2949 = vmatprep.subr.mxu0 0.0
        %2950 = vmatpush1.msra.mxu0 0.0
        %2951 = vmatprep.subr.mxu0 0.0
        %2952 = vmatpush1.msra.mxu0 0.0
        %2953 = vmatprep.subr.mxu0 0.0
        %2954 = vmatpush1.msra.mxu0 0.0
        %2955 = vmatprep.subr.mxu0 0.0
        %2956 = vmatpush1.msra.mxu0 0.0
        %2957 = vmatprep.subr.mxu0 0.0
        %2958 = vmatpush1.msra.mxu0 0.0
        %2959 = vmatprep.subr.mxu0 0.0
        %2960 = vmatpush1.msra.mxu0 0.0
        %2961 = vmatprep.subr.mxu0 0.0
        %2962 = vmatpush1.msra.mxu0 0.0
        %2963 = vmatprep.subr.mxu0 0.0
        %2964 = vmatpush1.msra.mxu0 0.0
        %2965 = vmatprep.subr.mxu0 0.0
        %2966 = vmatpush1.msra.mxu0 0.0
        %2967 = vmatprep.subr.mxu0 0.0
        %2968 = vmatpush1.msra.mxu0 0.0
        %2969 = vmatprep.subr.mxu0 0.0
        %2970 = vmatpush1.msra.mxu0 0.0
        %2971 = vmatprep.subr.mxu0 0.0
        %2972 = vmatpush1.msra.mxu0 0.0
        %2973 = vmatprep.subr.mxu0 0.0
        %2974 = vmatpush1.msra.mxu0 0.0
        %2975 = vmatprep.subr.mxu0 0.0
        %2976 = vmatpush1.msra.mxu0 0.0
        %2977 = vmatprep.subr.mxu0 0.0
        %2978 = vmatpush1.msra.mxu0 0.0
        %2979 = vmatprep.subr.mxu0 0.0
        %2980 = vmatpush1.msra.mxu0 0.0
        %2981 = vmatprep.subr.mxu0 0.0
        %2982 = vmatpush1.msra.mxu0 0.0
        %2983 = vmatprep.subr.mxu0 0.0
        %2984 = vmatpush1.msra.mxu0 0.0
        %2985 = vmatprep.subr.mxu0 0.0
        %2986 = vmatpush1.msra.mxu0 0.0
        %2987 = vmatprep.subr.mxu0 0.0
        %2988 = vmatpush1.msra.mxu0 0.0
        %2989 = vmatprep.subr.mxu0 0.0
        %2990 = vmatpush1.msra.mxu0 0.0
        %2991 = vmatprep.subr.mxu0 0.0
        %2992 = vmatpush1.msra.mxu0 0.0
        %2993 = vmatprep.mubr.f32.mxu0 0.0
        %2994 = vmatmul.mubr.f32.gmra.mrb[0].mxu0 %v2927
        %v2995 = vpop.f32.mrb[0].mxu0
        %v2996 = vadd.f32 0.0, %v2995
        %v2997 = vpop.f32.mrb[0].mxu0
        %v2998 = vadd.f32 0.0, %v2997
        %2999 = vdwg.mxu0
        %v3000 = vadd.f32 %v2726, %v2996
        %v3001 = vadd.f32 %v2727, %v2998
        %v3002 = vld [vmem:[%s3] sm:$0xff]
        %3004 = vset.pattern.permute.xlu0 0
        %3005 = vperm.xlu0 %3004, %v3002
        %v3006 = vpop.permute.xlu0 %3005
        %v3008 = vadd.f32 %v3000, %v3006
        %v3009 = vadd.f32 %v3001, %v3006
        %3010 = vst [vmem:[%s242] sm:$0xff] %v3008
        %3011 = vst [vmem:[%s242 + $0x8] sm:$0xff] %v3009
        %s3012 = sand.u32 %s119, 1
        %s3013 = scalar_lea.sflag [#allocation5], %s3012
        %s3014 = sand.u32 %s119, 1
        %s3015 = smul.addr %s3014, 16
        %s3016 = scalar_lea.vmem [#allocation9], %s3015
        // Predicated region
        $region49: #{tpu_custom_call.1} parent=35 // pred_check
          %p3017 = pneg %p129
        $region50: #{tpu_custom_call.1} parent=35 // pred_check_branch
          %3019 = sbr.rel (%p3017) target = $region52
        $region51: #{tpu_custom_call.1} parent=35 // pred_region
          %s3021 = ssub.s32 256, 256
          %3022 = vsyncadd %s3013, %s3021
          %s3023 = smul.addr %s22, 2
          %s3024 = smul.addr %s3023, 128
          %s3025 = scalar_lea.hbm %s4, %s3024
          %s3027 = sshll.u32 %s3016, 4
          %s3028 = int_to_ptr.vmem [resolvable:$true] %s3027
          %3030 = dma.vmem_to_hbm [thread:$0]  %s3028, 256, %s3025, %s3013
        $region52: #{tpu_custom_call.1} parent=35 // pred_fallthru
          _
      $region36: #{tpu_custom_call.1} parent=5 // pred_fallthru
        _
      %p3031 = scmp.le.s32.totalorder 2, %s17
      // Predicated region
      $region53: #{tpu_custom_call.1} parent=5 // pred_check
        %p3032 = pneg %p3031
      $region54: #{tpu_custom_call.1} parent=5 // pred_check_branch
        %3034 = sbr.rel (%p3032) target = $region56
      $region55: #{tpu_custom_call.1} parent=5 // pred_region
        %s3035 = ssub.s32 %s17, 2
        // Predicated region
        $region57: #{tpu_custom_call.1} parent=55 // pred_check
          %p3036 = pneg %p135
        $region58: #{tpu_custom_call.1} parent=55 // pred_check_branch
          %3038 = sbr.rel (%p3036) target = $region60
        $region59: #{tpu_custom_call.1} parent=55 // pred_region
          %s3039 = sand.u32 %s120, 1
          %s3040 = scalar_lea.sflag [#allocation5], %s3039
          %s3041 = sand.u32 %s120, 1
          %s3042 = smul.addr %s3041, 16
          %s3043 = scalar_lea.vmem [#allocation9], %s3042
          %3044 = dma.done %s3040, 256
        $region60: #{tpu_custom_call.1} parent=55 // pred_fallthru
          _
      $region56: #{tpu_custom_call.1} parent=5 // pred_fallthru
        _
    $region6: #{tpu_custom_call.1} parent=1 // loop_footer
      %s21 = sadd.s32 1, %s17
    $region7: #{tpu_custom_call.1} parent=1 // loop_footer_branch
      %16 = sbr.rel target = $region3
    $region8: #{tpu_custom_call.1} parent=1 // loop_exit
      _
    %3045 = vsyncpa [#allocation4], 1
    %s3046 = scalar_lea.sflag [#allocation4], 1
    %3047 = vsyncpa %s3046, 1
    %3048 = vsyncpa [#allocation7], 1
    %3049 = vsyncpa [#allocation5], 1
    %s3050 = scalar_lea.sflag [#allocation5], 1
    %3051 = vsyncpa %s3050, 1

</llo_original>
